<compile_context>
chip_gen: v6e
topology: v6e:2x2x1
jax: 0.10.0
libtpu: 0.0.40
codegen_flags: <defaults>
</compile_context>

<pallas_src>
import functools

import jax
import jax.numpy as jnp
from jax import lax
from jax.experimental import pallas as pl
from jax.experimental.pallas import tpu as pltpu

# Problem sizes (lane-aligned).
B, D, H = 256, 128, 128        # batch, state dim, hidden dim
NSTEPS = 16                    # fixed dopri5 steps over [0, 1]
RTOL, ATOL = 1e-3, 1e-3        # kept for parity with the module signature

# --- Dormand–Prince (dopri5) tableau with dt folded in as Python constants
#     (constant-folds at trace time; no per-stage dt multiplies at runtime). ---
DT = 1.0 / NSTEPS
A21 = DT * (1.0 / 5.0)
A31, A32 = DT * (3.0 / 40.0), DT * (9.0 / 40.0)
A41, A42, A43 = DT * (44.0 / 45.0), DT * (-56.0 / 15.0), DT * (32.0 / 9.0)
A51, A52, A53, A54 = (DT * (19372.0 / 6561.0), DT * (-25360.0 / 2187.0),
                      DT * (64448.0 / 6561.0), DT * (-212.0 / 729.0))
A61, A62, A63, A64, A65 = (DT * (9017.0 / 3168.0), DT * (-355.0 / 33.0),
                           DT * (46732.0 / 5247.0), DT * (49.0 / 176.0),
                           DT * (-5103.0 / 18656.0))
B1c, B3c, B4c, B5c, B6c = (DT * (35.0 / 384.0), DT * (500.0 / 1113.0),
                           DT * (125.0 / 192.0), DT * (-2187.0 / 6784.0),
                           DT * (11.0 / 84.0))
C2, C3, C4, C5, C6 = (DT * (1.0 / 5.0), DT * (3.0 / 10.0), DT * (4.0 / 5.0),
                      DT * (8.0 / 9.0), DT)


def _odefunc(t, x, w1, b1, wt, w2, b2, *, bf16_tanh):
    """f(t,x) = tanh(x@W1 + b1 + t*wt) @ W2 + b2.

    w1/w2 are bf16; LHS is cast to bf16; MXU accumulation is f32.  The time
    conditioning is folded into a single (1, H) bias row per stage.  With
    bf16_tanh (v6e/v7x) the first accumulator is cast to bf16 before tanh so
    h is already a bf16 MXU operand (half the EUP pushes, no extra cast).
    """
    bias1 = b1 + t * wt                                     # (1, H), cheap
    acc1 = jnp.dot(x.astype(jnp.bfloat16), w1,
                   preferred_element_type=jnp.float32) + bias1
    if bf16_tanh:
        h = jnp.tanh(acc1.astype(jnp.bfloat16))             # bf16 EUP
    else:
        h = jnp.tanh(acc1).astype(jnp.bfloat16)              # f32 EUP (v5e)
    return jnp.dot(h, w2, preferred_element_type=jnp.float32) + b2


def _dopri5_step(f, t0, x, k_dtype):
    """One fixed-size dopri5 step; dt already folded into the coefficients.

    Stage values k1..k5 are stored in `k_dtype` (bf16 in the kernel to halve
    vreg/spill bytes); all combinations are accumulated in f32.
    """
    c = lambda v: v.astype(k_dtype)       # stage-value storage dtype
    r = lambda v: v.astype(jnp.float32)   # combos accumulate in f32
    k1 = c(f(t0, x))
    k2 = c(f(t0 + C2, x + A21 * r(k1)))
    k3 = c(f(t0 + C3, x + (A31 * r(k1) + A32 * r(k2))))
    k4 = c(f(t0 + C4, x + (A41 * r(k1) + A42 * r(k2) + A43 * r(k3))))
    k5 = c(f(t0 + C5, x + (A51 * r(k1) + A52 * r(k2) + A53 * r(k3)
                           + A54 * r(k4))))
    k6 = f(t0 + C6, x + (A61 * r(k1) + A62 * r(k2) + A63 * r(k3)
                         + A64 * r(k4) + A65 * r(k5)))
    return x + (B1c * r(k1) + B3c * r(k3) + B4c * r(k4) + B5c * r(k5)
                + B6c * k6)


def _make_kernel(bf16_tanh):
    def odenet_kernel(x_ref, w1_ref, b1_ref, wt_ref, w2_ref, b2_ref, o_ref):
        # Small (1, H)/(1, D) f32 rows: load once, negligible register cost.
        b1 = b1_ref[...]
        wt = wt_ref[...]
        b2 = b2_ref[...]

        def f(t, x):
            # Weights are re-read from VMEM inside each stage (bf16, 8 vregs
            # each) so regalloc doesn't keep them live across the whole loop —
            # the stage-value tiles already own the register budget.
            return _odefunc(t, x, w1_ref[...], b1, wt, w2_ref[...], b2,
                            bf16_tanh=bf16_tanh)

        def step(i, x):
            t0 = i.astype(jnp.float32) * DT
            return _dopri5_step(f, t0, x, jnp.bfloat16)

        x0 = x_ref[...].astype(jnp.float32)
        # Consecutive steps are fully serially dependent: unrolling exposes no
        # new parallelism and only lengthens live ranges, so keep the loop.
        x1 = lax.fori_loop(0, NSTEPS, step, x0)
        o_ref[...] = x1.astype(o_ref.dtype)

    return odenet_kernel


def _device_kind():
    try:
        return jax.devices()[0].device_kind.lower()
    except Exception:
        return ""


def _plan(batch):
    """Generation-aware batch tile + tanh precision (per perf review)."""
    kind = _device_kind()
    multi_tc = ("v7" in kind) or ("7x" in kind)   # v7x: 2 TensorCores / chip
    bf16_tanh = ("v6" in kind) or ("v7" in kind) or ("7x" in kind)
    if multi_tc and batch % 2 == 0 and (batch // 2) % 8 == 0:
        tb = batch // 2      # one batch tile per TensorCore ("parallel" axis)
    else:
        tb = batch           # single TC: pay the serial chain exactly once
    return tb, bf16_tanh


@functools.partial(jax.jit, static_argnames=("tb", "bf16_tanh"))
def _odenet_forward_impl(x, w1, b1, wt, w2, b2, *, tb, bf16_tanh):
    B_, D_ = x.shape
    H_ = w1.shape[1]
    assert B_ % tb == 0

    # bf16 matmul operands (MXU-native on v5e/v6e/v7x), f32 accumulation.
    w1b = w1.astype(jnp.bfloat16)
    w2b = w2.astype(jnp.bfloat16)

    cost = pl.CostEstimate(
        flops=NSTEPS * 6 * 2 * 2 * B_ * H_ * D_,
        transcendentals=NSTEPS * 6 * B_ * H_,
        bytes_accessed=(2 * B_ * D_ * 4            # x in + out (f32)
                        + (D_ * H_ + H_ * D_) * 2  # bf16 weights
                        + (H_ + H_ + D_) * 4),     # biases + time row
    )

    return pl.pallas_call(
        _make_kernel(bf16_tanh),
        out_shape=jax.ShapeDtypeStruct(x.shape, x.dtype),
        grid=(B_ // tb,),
        in_specs=[
            pl.BlockSpec((tb, D_), lambda i: (i, 0)),   # x: batch-tiled
            pl.BlockSpec((D_, H_), lambda i: (0, 0)),   # W1: resident
            pl.BlockSpec((1, H_), lambda i: (0, 0)),    # b1
            pl.BlockSpec((1, H_), lambda i: (0, 0)),    # wt (time row)
            pl.BlockSpec((H_, D_), lambda i: (0, 0)),   # W2: resident
            pl.BlockSpec((1, D_), lambda i: (0, 0)),    # b2
        ],
        out_specs=pl.BlockSpec((tb, D_), lambda i: (i, 0)),
        compiler_params=pltpu.CompilerParams(
            dimension_semantics=("parallel",)),
        cost_estimate=cost,
    )(x, w1b, b1, wt, w2b, b2)


def odenet_forward(x, w1, b1, wt, w2, b2):
    """ODENet.forward: returns x(t=1) (== out[1] of odeint over [0, 1])."""
    tb, bf16_tanh = _plan(x.shape[0])
    return _odenet_forward_impl(x, w1, b1, wt, w2, b2,
                                tb=tb, bf16_tanh=bf16_tanh)


@functools.partial(jax.jit, static_argnames=("bf16_tanh",))
def _reference(x, w1, b1, wt, w2, b2, *, bf16_tanh):
    """Pure-JAX mirror of the kernel math (bf16 weights/tanh/k storage)."""
    w1b = w1.astype(jnp.bfloat16)
    w2b = w2.astype(jnp.bfloat16)
    f = lambda t, xx: _odefunc(t, xx, w1b, b1, wt, w2b, b2,
                               bf16_tanh=bf16_tanh)
    xf = x.astype(jnp.float32)
    for i in range(NSTEPS):
        xf = _dopri5_step(f, jnp.float32(i * DT), xf, jnp.bfloat16)
    return xf.astype(x.dtype)


@jax.jit
def _reference_f32(x, w1, b1, wt, w2, b2):
    """Full-f32 fixed-step dopri5 reference to bound the absolute bf16 error."""
    def f(t, xx):
        return jnp.tanh(xx @ w1 + b1 + t * wt) @ w2 + b2
    xf = x.astype(jnp.float32)
    for i in range(NSTEPS):
        xf = _dopri5_step(f, jnp.float32(i * DT), xf, jnp.float32)
    return xf.astype(x.dtype)


if __name__ == "__main__":
    key = jax.random.PRNGKey(0)
    kx, k1, k2, k3, k4 = jax.random.split(key, 5)

    x = jax.random.normal(kx, (B, D), dtype=jnp.float32)

    # Deterministic parameter init for the synthetic odefunc.
    w1 = jax.random.normal(k1, (D, H), dtype=jnp.float32) / jnp.sqrt(D)
    b1 = jnp.zeros((1, H), dtype=jnp.float32)
    wt = 0.1 * jax.random.normal(k2, (1, H), dtype=jnp.float32)
    w2 = jax.random.normal(k3, (H, D), dtype=jnp.float32) / jnp.sqrt(H)
    b2 = 0.01 * jax.random.normal(k4, (1, D), dtype=jnp.float32)

    out = odenet_forward(x, w1, b1, wt, w2, b2)
    out = jax.block_until_ready(out)
    assert out.shape == x.shape and out.dtype == x.dtype

    # Matched-math reference (same bf16 quantization points as the kernel).
    _, _bf16_tanh = _plan(B)
    ref = jax.block_until_ready(
        _reference(x, w1, b1, wt, w2, b2, bf16_tanh=_bf16_tanh))
    err = float(jnp.max(jnp.abs(out - ref)))
    assert err < 2e-2, f"kernel/reference mismatch: max abs err {err}"

    # Full-f32 reference: coarse bound on accumulated bf16 error over 96 stages.
    ref32 = jax.block_until_ready(_reference_f32(x, w1, b1, wt, w2, b2))
    abs_err = float(jnp.max(jnp.abs(out - ref32)))
    assert abs_err < 0.25, f"bf16 drift vs f32 reference too large: {abs_err}"

    print("KERNEL_OK")
</pallas_src>

<mosaic_0001>
module attributes {stable_mosaic.version = 11 : i64} {
  func.func @odenet_kernel(%arg0: i32, %arg1: memref<256x128xf32, #tpu.memory_space<vmem>>, %arg2: memref<128x128xbf16, #tpu.memory_space<vmem>>, %arg3: memref<1x128xf32, #tpu.memory_space<vmem>>, %arg4: memref<1x128xf32, #tpu.memory_space<vmem>>, %arg5: memref<128x128xbf16, #tpu.memory_space<vmem>>, %arg6: memref<1x128xf32, #tpu.memory_space<vmem>>, %arg7: memref<256x128xf32, #tpu.memory_space<vmem>>) attributes {dimension_semantics = [#tpu.dimension_semantics<parallel>], iteration_bounds = array<i64: 1>, scalar_prefetch = 0 : i64, scratch_operands = 0 : i64, tpu.core_type = #tpu.core_type<tc>, window_params = [{transform_indices = @transform_0, window_bounds = array<i64: 256, 128>}, {pipeline_mode = #tpu.pipeline_mode<synchronous>, transform_indices = @transform_1, window_bounds = array<i64: 128, 128>}, {pipeline_mode = #tpu.pipeline_mode<synchronous>, transform_indices = @transform_2, window_bounds = array<i64: 1, 128>}, {pipeline_mode = #tpu.pipeline_mode<synchronous>, transform_indices = @transform_3, window_bounds = array<i64: 1, 128>}, {pipeline_mode = #tpu.pipeline_mode<synchronous>, transform_indices = @transform_4, window_bounds = array<i64: 128, 128>}, {pipeline_mode = #tpu.pipeline_mode<synchronous>, transform_indices = @transform_5, window_bounds = array<i64: 1, 128>}, {transform_indices = @transform_6, window_bounds = array<i64: 256, 128>}]} {
    %c0 = arith.constant 0 : index
    %c0_0 = arith.constant 0 : index
    %0 = vector.load %arg3[%c0, %c0_0] : memref<1x128xf32, #tpu.memory_space<vmem>>, vector<1x128xf32>
    %c0_1 = arith.constant 0 : index
    %c0_2 = arith.constant 0 : index
    %1 = vector.load %arg4[%c0_1, %c0_2] : memref<1x128xf32, #tpu.memory_space<vmem>>, vector<1x128xf32>
    %c0_3 = arith.constant 0 : index
    %c0_4 = arith.constant 0 : index
    %2 = vector.load %arg6[%c0_3, %c0_4] : memref<1x128xf32, #tpu.memory_space<vmem>>, vector<1x128xf32>
    %c0_5 = arith.constant 0 : index
    %c0_6 = arith.constant 0 : index
    %3 = vector.load %arg1[%c0_5, %c0_6] : memref<256x128xf32, #tpu.memory_space<vmem>>, vector<256x128xf32>
    %c0_i32 = arith.constant 0 : i32
    %c16_i32 = arith.constant 16 : i32
    %4 = arith.addi %c0_i32, %c16_i32 : i32
    %c1_i32 = arith.constant 1 : i32
    %5 = scf.for %arg8 = %c0_i32 to %4 step %c1_i32 iter_args(%arg9 = %3) -> (vector<256x128xf32>)  : i32 {
      %7 = arith.sitofp %arg8 : i32 to f32
      %cst = arith.constant 6.250000e-02 : f32
      %8 = arith.mulf %7, %cst : f32
      %c0_10 = arith.constant 0 : index
      %c0_11 = arith.constant 0 : index
      %9 = vector.load %arg2[%c0_10, %c0_11] : memref<128x128xbf16, #tpu.memory_space<vmem>>, vector<128x128xbf16>
      %c0_12 = arith.constant 0 : index
      %c0_13 = arith.constant 0 : index
      %10 = vector.load %arg5[%c0_12, %c0_13] : memref<128x128xbf16, #tpu.memory_space<vmem>>, vector<128x128xbf16>
      %11 = vector.broadcast %8 : f32 to vector<1x128xf32>
      %12 = arith.mulf %11, %1 : vector<1x128xf32>
      %13 = arith.addf %0, %12 : vector<1x128xf32>
      %14 = arith.truncf %arg9 : vector<256x128xf32> to vector<256x128xbf16>
      %cst_14 = arith.constant dense<0.000000e+00> : vector<256x128xf32>
      %15 = tpu.matmul %14, %9, %cst_14 {dimension_numbers = #tpu.dot_dimension_numbers<[1], [0], [0], [1], [0, 0, 1, 1], [], []>} : vector<256x128xbf16>, vector<128x128xbf16>, vector<256x128xf32> -> vector<256x128xf32>
      %16 = vector.broadcast %13 : vector<1x128xf32> to vector<256x128xf32>
      %17 = arith.addf %15, %16 : vector<256x128xf32>
      %18 = math.tanh %17 : vector<256x128xf32>
      %19 = arith.truncf %18 : vector<256x128xf32> to vector<256x128xbf16>
      %cst_15 = arith.constant dense<0.000000e+00> : vector<256x128xf32>
      %20 = tpu.matmul %19, %10, %cst_15 {dimension_numbers = #tpu.dot_dimension_numbers<[1], [0], [0], [1], [0, 0, 1, 1], [], []>} : vector<256x128xbf16>, vector<128x128xbf16>, vector<256x128xf32> -> vector<256x128xf32>
      %21 = vector.broadcast %2 : vector<1x128xf32> to vector<256x128xf32>
      %22 = arith.addf %20, %21 : vector<256x128xf32>
      %23 = arith.truncf %22 : vector<256x128xf32> to vector<256x128xbf16>
      %cst_16 = arith.constant 1.250000e-02 : f32
      %24 = arith.addf %8, %cst_16 : f32
      %25 = arith.extf %23 : vector<256x128xbf16> to vector<256x128xf32>
      %cst_17 = arith.constant 1.250000e-02 : f32
      %26 = vector.broadcast %cst_17 : f32 to vector<256x128xf32>
      %27 = arith.mulf %26, %25 : vector<256x128xf32>
      %28 = arith.addf %arg9, %27 : vector<256x128xf32>
      %c0_18 = arith.constant 0 : index
      %c0_19 = arith.constant 0 : index
      %29 = vector.load %arg2[%c0_18, %c0_19] : memref<128x128xbf16, #tpu.memory_space<vmem>>, vector<128x128xbf16>
      %c0_20 = arith.constant 0 : index
      %c0_21 = arith.constant 0 : index
      %30 = vector.load %arg5[%c0_20, %c0_21] : memref<128x128xbf16, #tpu.memory_space<vmem>>, vector<128x128xbf16>
      %31 = vector.broadcast %24 : f32 to vector<1x128xf32>
      %32 = arith.mulf %31, %1 : vector<1x128xf32>
      %33 = arith.addf %0, %32 : vector<1x128xf32>
      %34 = arith.truncf %28 : vector<256x128xf32> to vector<256x128xbf16>
      %cst_22 = arith.constant dense<0.000000e+00> : vector<256x128xf32>
      %35 = tpu.matmul %34, %29, %cst_22 {dimension_numbers = #tpu.dot_dimension_numbers<[1], [0], [0], [1], [0, 0, 1, 1], [], []>} : vector<256x128xbf16>, vector<128x128xbf16>, vector<256x128xf32> -> vector<256x128xf32>
      %36 = vector.broadcast %33 : vector<1x128xf32> to vector<256x128xf32>
      %37 = arith.addf %35, %36 : vector<256x128xf32>
      %38 = math.tanh %37 : vector<256x128xf32>
      %39 = arith.truncf %38 : vector<256x128xf32> to vector<256x128xbf16>
      %cst_23 = arith.constant dense<0.000000e+00> : vector<256x128xf32>
      %40 = tpu.matmul %39, %30, %cst_23 {dimension_numbers = #tpu.dot_dimension_numbers<[1], [0], [0], [1], [0, 0, 1, 1], [], []>} : vector<256x128xbf16>, vector<128x128xbf16>, vector<256x128xf32> -> vector<256x128xf32>
      %41 = vector.broadcast %2 : vector<1x128xf32> to vector<256x128xf32>
      %42 = arith.addf %40, %41 : vector<256x128xf32>
      %43 = arith.truncf %42 : vector<256x128xf32> to vector<256x128xbf16>
      %cst_24 = arith.constant 1.875000e-02 : f32
      %44 = arith.addf %8, %cst_24 : f32
      %45 = arith.extf %23 : vector<256x128xbf16> to vector<256x128xf32>
      %cst_25 = arith.constant 4.687500e-03 : f32
      %46 = vector.broadcast %cst_25 : f32 to vector<256x128xf32>
      %47 = arith.mulf %46, %45 : vector<256x128xf32>
      %48 = arith.extf %43 : vector<256x128xbf16> to vector<256x128xf32>
      %cst_26 = arith.constant 1.406250e-02 : f32
      %49 = vector.broadcast %cst_26 : f32 to vector<256x128xf32>
      %50 = arith.mulf %49, %48 : vector<256x128xf32>
      %51 = arith.addf %47, %50 : vector<256x128xf32>
      %52 = arith.addf %arg9, %51 : vector<256x128xf32>
      %c0_27 = arith.constant 0 : index
      %c0_28 = arith.constant 0 : index
      %53 = vector.load %arg2[%c0_27, %c0_28] : memref<128x128xbf16, #tpu.memory_space<vmem>>, vector<128x128xbf16>
      %c0_29 = arith.constant 0 : index
      %c0_30 = arith.constant 0 : index
      %54 = vector.load %arg5[%c0_29, %c0_30] : memref<128x128xbf16, #tpu.memory_space<vmem>>, vector<128x128xbf16>
      %55 = vector.broadcast %44 : f32 to vector<1x128xf32>
      %56 = arith.mulf %55, %1 : vector<1x128xf32>
      %57 = arith.addf %0, %56 : vector<1x128xf32>
      %58 = arith.truncf %52 : vector<256x128xf32> to vector<256x128xbf16>
      %cst_31 = arith.constant dense<0.000000e+00> : vector<256x128xf32>
      %59 = tpu.matmul %58, %53, %cst_31 {dimension_numbers = #tpu.dot_dimension_numbers<[1], [0], [0], [1], [0, 0, 1, 1], [], []>} : vector<256x128xbf16>, vector<128x128xbf16>, vector<256x128xf32> -> vector<256x128xf32>
      %60 = vector.broadcast %57 : vector<1x128xf32> to vector<256x128xf32>
      %61 = arith.addf %59, %60 : vector<256x128xf32>
      %62 = math.tanh %61 : vector<256x128xf32>
      %63 = arith.truncf %62 : vector<256x128xf32> to vector<256x128xbf16>
      %cst_32 = arith.constant dense<0.000000e+00> : vector<256x128xf32>
      %64 = tpu.matmul %63, %54, %cst_32 {dimension_numbers = #tpu.dot_dimension_numbers<[1], [0], [0], [1], [0, 0, 1, 1], [], []>} : vector<256x128xbf16>, vector<128x128xbf16>, vector<256x128xf32> -> vector<256x128xf32>
      %65 = vector.broadcast %2 : vector<1x128xf32> to vector<256x128xf32>
      %66 = arith.addf %64, %65 : vector<256x128xf32>
      %67 = arith.truncf %66 : vector<256x128xf32> to vector<256x128xbf16>
      %cst_33 = arith.constant 5.000000e-02 : f32
      %68 = arith.addf %8, %cst_33 : f32
      %69 = arith.extf %23 : vector<256x128xbf16> to vector<256x128xf32>
      %cst_34 = arith.constant 0.0611111112 : f32
      %70 = vector.broadcast %cst_34 : f32 to vector<256x128xf32>
      %71 = arith.mulf %70, %69 : vector<256x128xf32>
      %72 = arith.extf %43 : vector<256x128xbf16> to vector<256x128xf32>
      %cst_35 = arith.constant -0.233333334 : f32
      %73 = vector.broadcast %cst_35 : f32 to vector<256x128xf32>
      %74 = arith.mulf %73, %72 : vector<256x128xf32>
      %75 = arith.addf %71, %74 : vector<256x128xf32>
      %76 = arith.extf %67 : vector<256x128xbf16> to vector<256x128xf32>
      %cst_36 = arith.constant 0.222222224 : f32
      %77 = vector.broadcast %cst_36 : f32 to vector<256x128xf32>
      %78 = arith.mulf %77, %76 : vector<256x128xf32>
      %79 = arith.addf %75, %78 : vector<256x128xf32>
      %80 = arith.addf %arg9, %79 : vector<256x128xf32>
      %c0_37 = arith.constant 0 : index
      %c0_38 = arith.constant 0 : index
      %81 = vector.load %arg2[%c0_37, %c0_38] : memref<128x128xbf16, #tpu.memory_space<vmem>>, vector<128x128xbf16>
      %c0_39 = arith.constant 0 : index
      %c0_40 = arith.constant 0 : index
      %82 = vector.load %arg5[%c0_39, %c0_40] : memref<128x128xbf16, #tpu.memory_space<vmem>>, vector<128x128xbf16>
      %83 = vector.broadcast %68 : f32 to vector<1x128xf32>
      %84 = arith.mulf %83, %1 : vector<1x128xf32>
      %85 = arith.addf %0, %84 : vector<1x128xf32>
      %86 = arith.truncf %80 : vector<256x128xf32> to vector<256x128xbf16>
      %cst_41 = arith.constant dense<0.000000e+00> : vector<256x128xf32>
      %87 = tpu.matmul %86, %81, %cst_41 {dimension_numbers = #tpu.dot_dimension_numbers<[1], [0], [0], [1], [0, 0, 1, 1], [], []>} : vector<256x128xbf16>, vector<128x128xbf16>, vector<256x128xf32> -> vector<256x128xf32>
      %88 = vector.broadcast %85 : vector<1x128xf32> to vector<256x128xf32>
      %89 = arith.addf %87, %88 : vector<256x128xf32>
      %90 = math.tanh %89 : vector<256x128xf32>
      %91 = arith.truncf %90 : vector<256x128xf32> to vector<256x128xbf16>
      %cst_42 = arith.constant dense<0.000000e+00> : vector<256x128xf32>
      %92 = tpu.matmul %91, %82, %cst_42 {dimension_numbers = #tpu.dot_dimension_numbers<[1], [0], [0], [1], [0, 0, 1, 1], [], []>} : vector<256x128xbf16>, vector<128x128xbf16>, vector<256x128xf32> -> vector<256x128xf32>
      %93 = vector.broadcast %2 : vector<1x128xf32> to vector<256x128xf32>
      %94 = arith.addf %92, %93 : vector<256x128xf32>
      %95 = arith.truncf %94 : vector<256x128xf32> to vector<256x128xbf16>
      %cst_43 = arith.constant 0.055555556 : f32
      %96 = arith.addf %8, %cst_43 : f32
      %97 = arith.extf %23 : vector<256x128xbf16> to vector<256x128xf32>
      %cst_44 = arith.constant 0.184537411 : f32
      %98 = vector.broadcast %cst_44 : f32 to vector<256x128xf32>
      %99 = arith.mulf %98, %97 : vector<256x128xf32>
      %100 = arith.extf %43 : vector<256x128xbf16> to vector<256x128xf32>
      %cst_45 = arith.constant -0.724737107 : f32
      %101 = vector.broadcast %cst_45 : f32 to vector<256x128xf32>
      %102 = arith.mulf %101, %100 : vector<256x128xf32>
      %103 = arith.addf %99, %102 : vector<256x128xf32>
      %104 = arith.extf %67 : vector<256x128xbf16> to vector<256x128xf32>
      %cst_46 = arith.constant 0.613930821 : f32
      %105 = vector.broadcast %cst_46 : f32 to vector<256x128xf32>
      %106 = arith.mulf %105, %104 : vector<256x128xf32>
      %107 = arith.addf %103, %106 : vector<256x128xf32>
      %108 = arith.extf %95 : vector<256x128xbf16> to vector<256x128xf32>
      %cst_47 = arith.constant -0.0181755833 : f32
      %109 = vector.broadcast %cst_47 : f32 to vector<256x128xf32>
      %110 = arith.mulf %109, %108 : vector<256x128xf32>
      %111 = arith.addf %107, %110 : vector<256x128xf32>
      %112 = arith.addf %arg9, %111 : vector<256x128xf32>
      %c0_48 = arith.constant 0 : index
      %c0_49 = arith.constant 0 : index
      %113 = vector.load %arg2[%c0_48, %c0_49] : memref<128x128xbf16, #tpu.memory_space<vmem>>, vector<128x128xbf16>
      %c0_50 = arith.constant 0 : index
      %c0_51 = arith.constant 0 : index
      %114 = vector.load %arg5[%c0_50, %c0_51] : memref<128x128xbf16, #tpu.memory_space<vmem>>, vector<128x128xbf16>
      %115 = vector.broadcast %96 : f32 to vector<1x128xf32>
      %116 = arith.mulf %115, %1 : vector<1x128xf32>
      %117 = arith.addf %0, %116 : vector<1x128xf32>
      %118 = arith.truncf %112 : vector<256x128xf32> to vector<256x128xbf16>
      %cst_52 = arith.constant dense<0.000000e+00> : vector<256x128xf32>
      %119 = tpu.matmul %118, %113, %cst_52 {dimension_numbers = #tpu.dot_dimension_numbers<[1], [0], [0], [1], [0, 0, 1, 1], [], []>} : vector<256x128xbf16>, vector<128x128xbf16>, vector<256x128xf32> -> vector<256x128xf32>
      %120 = vector.broadcast %117 : vector<1x128xf32> to vector<256x128xf32>
      %121 = arith.addf %119, %120 : vector<256x128xf32>
      %122 = math.tanh %121 : vector<256x128xf32>
      %123 = arith.truncf %122 : vector<256x128xf32> to vector<256x128xbf16>
      %cst_53 = arith.constant dense<0.000000e+00> : vector<256x128xf32>
      %124 = tpu.matmul %123, %114, %cst_53 {dimension_numbers = #tpu.dot_dimension_numbers<[1], [0], [0], [1], [0, 0, 1, 1], [], []>} : vector<256x128xbf16>, vector<128x128xbf16>, vector<256x128xf32> -> vector<256x128xf32>
      %125 = vector.broadcast %2 : vector<1x128xf32> to vector<256x128xf32>
      %126 = arith.addf %124, %125 : vector<256x128xf32>
      %127 = arith.truncf %126 : vector<256x128xf32> to vector<256x128xbf16>
      %cst_54 = arith.constant 6.250000e-02 : f32
      %128 = arith.addf %8, %cst_54 : f32
      %129 = arith.extf %23 : vector<256x128xbf16> to vector<256x128xf32>
      %cst_55 = arith.constant 0.177892208 : f32
      %130 = vector.broadcast %cst_55 : f32 to vector<256x128xf32>
      %131 = arith.mulf %130, %129 : vector<256x128xf32>
      %132 = arith.extf %43 : vector<256x128xbf16> to vector<256x128xf32>
      %cst_56 = arith.constant -0.672348499 : f32
      %133 = vector.broadcast %cst_56 : f32 to vector<256x128xf32>
      %134 = arith.mulf %133, %132 : vector<256x128xf32>
      %135 = arith.addf %131, %134 : vector<256x128xf32>
      %136 = arith.extf %67 : vector<256x128xbf16> to vector<256x128xf32>
      %cst_57 = arith.constant 0.556651413 : f32
      %137 = vector.broadcast %cst_57 : f32 to vector<256x128xf32>
      %138 = arith.mulf %137, %136 : vector<256x128xf32>
      %139 = arith.addf %135, %138 : vector<256x128xf32>
      %140 = arith.extf %95 : vector<256x128xbf16> to vector<256x128xf32>
      %cst_58 = arith.constant 0.0174005684 : f32
      %141 = vector.broadcast %cst_58 : f32 to vector<256x128xf32>
      %142 = arith.mulf %141, %140 : vector<256x128xf32>
      %143 = arith.addf %139, %142 : vector<256x128xf32>
      %144 = arith.extf %127 : vector<256x128xbf16> to vector<256x128xf32>
      %cst_59 = arith.constant -0.0170957074 : f32
      %145 = vector.broadcast %cst_59 : f32 to vector<256x128xf32>
      %146 = arith.mulf %145, %144 : vector<256x128xf32>
      %147 = arith.addf %143, %146 : vector<256x128xf32>
      %148 = arith.addf %arg9, %147 : vector<256x128xf32>
      %c0_60 = arith.constant 0 : index
      %c0_61 = arith.constant 0 : index
      %149 = vector.load %arg2[%c0_60, %c0_61] : memref<128x128xbf16, #tpu.memory_space<vmem>>, vector<128x128xbf16>
      %c0_62 = arith.constant 0 : index
      %c0_63 = arith.constant 0 : index
      %150 = vector.load %arg5[%c0_62, %c0_63] : memref<128x128xbf16, #tpu.memory_space<vmem>>, vector<128x128xbf16>
      %151 = vector.broadcast %128 : f32 to vector<1x128xf32>
      %152 = arith.mulf %151, %1 : vector<1x128xf32>
      %153 = arith.addf %0, %152 : vector<1x128xf32>
      %154 = arith.truncf %148 : vector<256x128xf32> to vector<256x128xbf16>
      %cst_64 = arith.constant dense<0.000000e+00> : vector<256x128xf32>
      %155 = tpu.matmul %154, %149, %cst_64 {dimension_numbers = #tpu.dot_dimension_numbers<[1], [0], [0], [1], [0, 0, 1, 1], [], []>} : vector<256x128xbf16>, vector<128x128xbf16>, vector<256x128xf32> -> vector<256x128xf32>
      %156 = vector.broadcast %153 : vector<1x128xf32> to vector<256x128xf32>
      %157 = arith.addf %155, %156 : vector<256x128xf32>
      %158 = math.tanh %157 : vector<256x128xf32>
      %159 = arith.truncf %158 : vector<256x128xf32> to vector<256x128xbf16>
      %cst_65 = arith.constant dense<0.000000e+00> : vector<256x128xf32>
      %160 = tpu.matmul %159, %150, %cst_65 {dimension_numbers = #tpu.dot_dimension_numbers<[1], [0], [0], [1], [0, 0, 1, 1], [], []>} : vector<256x128xbf16>, vector<128x128xbf16>, vector<256x128xf32> -> vector<256x128xf32>
      %161 = vector.broadcast %2 : vector<1x128xf32> to vector<256x128xf32>
      %162 = arith.addf %160, %161 : vector<256x128xf32>
      %163 = arith.extf %23 : vector<256x128xbf16> to vector<256x128xf32>
      %cst_66 = arith.constant 0.00569661474 : f32
      %164 = vector.broadcast %cst_66 : f32 to vector<256x128xf32>
      %165 = arith.mulf %164, %163 : vector<256x128xf32>
      %166 = arith.extf %67 : vector<256x128xbf16> to vector<256x128xf32>
      %cst_67 = arith.constant 0.028077269 : f32
      %167 = vector.broadcast %cst_67 : f32 to vector<256x128xf32>
      %168 = arith.mulf %167, %166 : vector<256x128xf32>
      %169 = arith.addf %165, %168 : vector<256x128xf32>
      %170 = arith.extf %95 : vector<256x128xbf16> to vector<256x128xf32>
      %cst_68 = arith.constant 0.0406901054 : f32
      %171 = vector.broadcast %cst_68 : f32 to vector<256x128xf32>
      %172 = arith.mulf %171, %170 : vector<256x128xf32>
      %173 = arith.addf %169, %172 : vector<256x128xf32>
      %174 = arith.extf %127 : vector<256x128xbf16> to vector<256x128xf32>
      %cst_69 = arith.constant -0.020148512 : f32
      %175 = vector.broadcast %cst_69 : f32 to vector<256x128xf32>
      %176 = arith.mulf %175, %174 : vector<256x128xf32>
      %177 = arith.addf %173, %176 : vector<256x128xf32>
      %cst_70 = arith.constant 0.00818452425 : f32
      %178 = vector.broadcast %cst_70 : f32 to vector<256x128xf32>
      %179 = arith.mulf %178, %162 : vector<256x128xf32>
      %180 = arith.addf %177, %179 : vector<256x128xf32>
      %181 = arith.addf %arg9, %180 : vector<256x128xf32>
      scf.yield %181 : vector<256x128xf32>
    }
    %c16_i32_7 = arith.constant 16 : i32
    %c0_8 = arith.constant 0 : index
    %c0_9 = arith.constant 0 : index
    %6 = vector.load %arg7[%c0_8, %c0_9] : memref<256x128xf32, #tpu.memory_space<vmem>>, vector<256x128xf32>
    tpu.vector_store %arg7[%c0_8, %c0_9], %5 {strides = array<i32>} : memref<256x128xf32, #tpu.memory_space<vmem>>, vector<256x128xf32>,
    return
  }
  func.func @transform_0(%arg0: i32) -> (i32, i32) {
    %c0_i32 = arith.constant 0 : i32
    %c0_i32_0 = arith.constant 0 : i32
    return %arg0, %c0_i32 : i32, i32
  }
  func.func @transform_1(%arg0: i32) -> (i32, i32) {
    %c0_i32 = arith.constant 0 : i32
    %c0_i32_0 = arith.constant 0 : i32
    %c0_i32_1 = arith.constant 0 : i32
    return %c0_i32, %c0_i32_0 : i32, i32
  }
  func.func @transform_2(%arg0: i32) -> (i32, i32) {
    %c0_i32 = arith.constant 0 : i32
    %c0_i32_0 = arith.constant 0 : i32
    %c0_i32_1 = arith.constant 0 : i32
    return %c0_i32, %c0_i32_0 : i32, i32
  }
  func.func @transform_3(%arg0: i32) -> (i32, i32) {
    %c0_i32 = arith.constant 0 : i32
    %c0_i32_0 = arith.constant 0 : i32
    %c0_i32_1 = arith.constant 0 : i32
    return %c0_i32, %c0_i32_0 : i32, i32
  }
  func.func @transform_4(%arg0: i32) -> (i32, i32) {
    %c0_i32 = arith.constant 0 : i32
    %c0_i32_0 = arith.constant 0 : i32
    %c0_i32_1 = arith.constant 0 : i32
    return %c0_i32, %c0_i32_0 : i32, i32
  }
  func.func @transform_5(%arg0: i32) -> (i32, i32) {
    %c0_i32 = arith.constant 0 : i32
    %c0_i32_0 = arith.constant 0 : i32
    %c0_i32_1 = arith.constant 0 : i32
    return %c0_i32, %c0_i32_0 : i32, i32
  }
  func.func @transform_6(%arg0: i32) -> (i32, i32) {
    %c0_i32 = arith.constant 0 : i32
    %c0_i32_0 = arith.constant 0 : i32
    return %arg0, %c0_i32 : i32, i32
  }
}

</mosaic_0001>

<llo_original>
// kernel: _odenet_forward_impl.1
$region0: #{_odenet_forward_impl.1}
  #allocation0 [shape = 'u32[]', space=smem, size = 0x4, offset = 0x4, fixed_abs, tag = 'smem constant byte address 0x4 - core index']
  #allocation1 [shape = 'u32[144,128]{1,0:T(1,128)}', space=vmem, size = 0x12000, scoped, tag = 'internal scratch']
  %s0 = inlined_call_operand.vmem [shape: f32[256,128], index: 0, kind: input, shape index: {}]
  %s1 = inlined_call_operand.vmem [shape: bf16[128,128], index: 1, kind: input, shape index: {}]
  %s2 = inlined_call_operand.vmem [shape: f32[1,128], index: 2, kind: input, shape index: {}]
  %s3 = inlined_call_operand.vmem [shape: f32[1,128], index: 3, kind: input, shape index: {}]
  %s4 = inlined_call_operand.vmem [shape: bf16[128,128], index: 4, kind: input, shape index: {}]
  %s5 = inlined_call_operand.vmem [shape: f32[1,128], index: 5, kind: input, shape index: {}]
  %s6 = inlined_call_operand.hbm [shape: f32[256,128], index: 6, kind: output, shape index: {}]
  %s7 = sld [smem:[#allocation0]]
  $region41: #{_odenet_forward_impl.1} parent=0
    _
  %s9 = ssub.s32 1, %s7
  %s10 = scalar_select 0, %s9, %s7
  $region1: #{_odenet_forward_impl.1} parent=0
    #allocation2 [shape = 'u8[131072]{0}', space=vmem, size = 0x20000, scoped, tag = 'output window, operand 0, single buffered']
    #allocation3 [shape = 's32[1]{0}', space=sflag, size = 0x4, scoped, tag = 'scoped memory for _odenet_forward_impl.1']
    %11 = vsyncpa [#allocation3], 0
    // Predicated region
    $region2: #{_odenet_forward_impl.1} parent=1 // pred_check
      _
    $region3: #{_odenet_forward_impl.1} parent=1 // pred_check_branch
      %13 = sbr.rel (0) target = $region5
    $region4: #{_odenet_forward_impl.1} parent=1 // pred_region
      _
    $region5: #{_odenet_forward_impl.1} parent=1 // pred_fallthru
      _
    // Predicated region
    $region6: #{_odenet_forward_impl.1} parent=1 // pred_check
      _
    $region7: #{_odenet_forward_impl.1} parent=1 // pred_check_branch
      %15 = sbr.rel (0) target = $region9
    $region8: #{_odenet_forward_impl.1} parent=1 // pred_region
      _
    $region9: #{_odenet_forward_impl.1} parent=1 // pred_fallthru
      _
    // Predicated region
    $region10: #{_odenet_forward_impl.1} parent=1 // pred_check
      _
    $region11: #{_odenet_forward_impl.1} parent=1 // pred_check_branch
      %17 = sbr.rel (0) target = $region13
    $region12: #{_odenet_forward_impl.1} parent=1 // pred_region
      _
    $region13: #{_odenet_forward_impl.1} parent=1 // pred_fallthru
      _
    // Predicated region
    $region14: #{_odenet_forward_impl.1} parent=1 // pred_check
      _
    $region15: #{_odenet_forward_impl.1} parent=1 // pred_check_branch
      %19 = sbr.rel (0) target = $region17
    $region16: #{_odenet_forward_impl.1} parent=1 // pred_region
      _
    $region17: #{_odenet_forward_impl.1} parent=1 // pred_fallthru
      _
    // Predicated region
    $region18: #{_odenet_forward_impl.1} parent=1 // pred_check
      _
    $region19: #{_odenet_forward_impl.1} parent=1 // pred_check_branch
      %21 = sbr.rel (0) target = $region21
    $region20: #{_odenet_forward_impl.1} parent=1 // pred_region
      _
    $region21: #{_odenet_forward_impl.1} parent=1 // pred_fallthru
      _
    // Predicated region
    $region22: #{_odenet_forward_impl.1} parent=1 // pred_check
      _
    $region23: #{_odenet_forward_impl.1} parent=1 // pred_check_branch
      %23 = sbr.rel (0) target = $region25
    $region24: #{_odenet_forward_impl.1} parent=1 // pred_region
      _
    $region25: #{_odenet_forward_impl.1} parent=1 // pred_fallthru
      _
    %v25 = vld [vmem:[%s2] sm:$0x1]
    %v26 = vld [vmem:[%s3] sm:$0x1]
    %v27 = vld [vmem:[%s5] sm:$0x1]
    %v28 = vld [vmem:[%s0] sm:$0xff]
    %v29 = vld [vmem:[%s0 + $0x8] sm:$0xff]
    %v30 = vld [vmem:[%s0 + $0x10] sm:$0xff]
    %v31 = vld [vmem:[%s0 + $0x18] sm:$0xff]
    %v32 = vld [vmem:[%s0 + $0x20] sm:$0xff]
    %v33 = vld [vmem:[%s0 + $0x28] sm:$0xff]
    %v34 = vld [vmem:[%s0 + $0x30] sm:$0xff]
    %v35 = vld [vmem:[%s0 + $0x38] sm:$0xff]
    %v36 = vld [vmem:[%s0 + $0x40] sm:$0xff]
    %v37 = vld [vmem:[%s0 + $0x48] sm:$0xff]
    %v38 = vld [vmem:[%s0 + $0x50] sm:$0xff]
    %v39 = vld [vmem:[%s0 + $0x58] sm:$0xff]
    %v40 = vld [vmem:[%s0 + $0x60] sm:$0xff]
    %v41 = vld [vmem:[%s0 + $0x68] sm:$0xff]
    %v42 = vld [vmem:[%s0 + $0x70] sm:$0xff]
    %v43 = vld [vmem:[%s0 + $0x78] sm:$0xff]
    %v44 = vld [vmem:[%s0 + $0x80] sm:$0xff]
    %v45 = vld [vmem:[%s0 + $0x88] sm:$0xff]
    %v46 = vld [vmem:[%s0 + $0x90] sm:$0xff]
    %v47 = vld [vmem:[%s0 + $0x98] sm:$0xff]
    %v48 = vld [vmem:[%s0 + $0xa0] sm:$0xff]
    %v49 = vld [vmem:[%s0 + $0xa8] sm:$0xff]
    %v50 = vld [vmem:[%s0 + $0xb0] sm:$0xff]
    %v51 = vld [vmem:[%s0 + $0xb8] sm:$0xff]
    %v52 = vld [vmem:[%s0 + $0xc0] sm:$0xff]
    %v53 = vld [vmem:[%s0 + $0xc8] sm:$0xff]
    %v54 = vld [vmem:[%s0 + $0xd0] sm:$0xff]
    %v55 = vld [vmem:[%s0 + $0xd8] sm:$0xff]
    %v56 = vld [vmem:[%s0 + $0xe0] sm:$0xff]
    %v57 = vld [vmem:[%s0 + $0xe8] sm:$0xff]
    %v58 = vld [vmem:[%s0 + $0xf0] sm:$0xff]
    %v59 = vld [vmem:[%s0 + $0xf8] sm:$0xff]
    loop: start=0, step=1, limit=16
    $region26: #{_odenet_forward_impl.1} parent=1 // loop_pre_header
      _
    $region27: #{_odenet_forward_impl.1} parent=1 // loop_header
      %s61 = sphi 0, %s65
      %p62 = scmp.ge.s32.totalorder %s61, 16
      %v66 = vphi %v28, %v4097
      %v67 = vphi %v29, %v4098
      %v68 = vphi %v30, %v4099
      %v69 = vphi %v31, %v4100
      %v70 = vphi %v32, %v4101
      %v71 = vphi %v33, %v4102
      %v72 = vphi %v34, %v4103
      %v73 = vphi %v35, %v4104
      %v74 = vphi %v36, %v4105
      %v75 = vphi %v37, %v4106
      %v76 = vphi %v38, %v4107
      %v77 = vphi %v39, %v4108
      %v78 = vphi %v40, %v4109
      %v79 = vphi %v41, %v4110
      %v80 = vphi %v42, %v4111
      %v81 = vphi %v43, %v4112
      %v82 = vphi %v44, %v4113
      %v83 = vphi %v45, %v4114
      %v84 = vphi %v46, %v4115
      %v85 = vphi %v47, %v4116
      %v86 = vphi %v48, %v4117
      %v87 = vphi %v49, %v4118
      %v88 = vphi %v50, %v4119
      %v89 = vphi %v51, %v4120
      %v90 = vphi %v52, %v4121
      %v91 = vphi %v53, %v4122
      %v92 = vphi %v54, %v4123
      %v93 = vphi %v55, %v4124
      %v94 = vphi %v56, %v4125
      %v95 = vphi %v57, %v4126
      %v96 = vphi %v58, %v4127
      %v97 = vphi %v59, %v4128
    $region28: #{_odenet_forward_impl.1} parent=1 // loop_header_branch
      %64 = sbr.rel (%p62) target = $region32
    $region29: #{_odenet_forward_impl.1} parent=1 // loop_body
      %s98 = scvt.s32.f32 %s61
      %s99 = smul.f32 %s98, 0.0625
      %v100 = vld [vmem:[%s1] sm:$0xf]
      %v101 = vld [vmem:[%s1 + $0x4] sm:$0xf]
      %v102 = vld [vmem:[%s1 + $0x8] sm:$0xf]
      %v103 = vld [vmem:[%s1 + $0xc] sm:$0xf]
      %v104 = vld [vmem:[%s1 + $0x10] sm:$0xf]
      %v105 = vld [vmem:[%s1 + $0x14] sm:$0xf]
      %v106 = vld [vmem:[%s1 + $0x18] sm:$0xf]
      %v107 = vld [vmem:[%s1 + $0x1c] sm:$0xf]
      %v108 = vld [vmem:[%s1 + $0x20] sm:$0xf]
      %v109 = vld [vmem:[%s1 + $0x24] sm:$0xf]
      %v110 = vld [vmem:[%s1 + $0x28] sm:$0xf]
      %v111 = vld [vmem:[%s1 + $0x2c] sm:$0xf]
      %v112 = vld [vmem:[%s1 + $0x30] sm:$0xf]
      %v113 = vld [vmem:[%s1 + $0x34] sm:$0xf]
      %v114 = vld [vmem:[%s1 + $0x38] sm:$0xf]
      %v115 = vld [vmem:[%s1 + $0x3c] sm:$0xf]
      %v116 = vld [vmem:[%s4] sm:$0xf]
      %v117 = vld [vmem:[%s4 + $0x4] sm:$0xf]
      %v118 = vld [vmem:[%s4 + $0x8] sm:$0xf]
      %v119 = vld [vmem:[%s4 + $0xc] sm:$0xf]
      %v120 = vld [vmem:[%s4 + $0x10] sm:$0xf]
      %v121 = vld [vmem:[%s4 + $0x14] sm:$0xf]
      %v122 = vld [vmem:[%s4 + $0x18] sm:$0xf]
      %v123 = vld [vmem:[%s4 + $0x1c] sm:$0xf]
      %v124 = vld [vmem:[%s4 + $0x20] sm:$0xf]
      %v125 = vld [vmem:[%s4 + $0x24] sm:$0xf]
      %v126 = vld [vmem:[%s4 + $0x28] sm:$0xf]
      %v127 = vld [vmem:[%s4 + $0x2c] sm:$0xf]
      %v128 = vld [vmem:[%s4 + $0x30] sm:$0xf]
      %v129 = vld [vmem:[%s4 + $0x34] sm:$0xf]
      %v130 = vld [vmem:[%s4 + $0x38] sm:$0xf]
      %v131 = vld [vmem:[%s4 + $0x3c] sm:$0xf]
      %v132 = vstv %s99
      %v133 = vmul.f32 %v132, %v26
      %v134 = vadd.f32 %v25, %v133
      %v135 = vpack.c.bf16 %v67, %v66
      %v136 = vpack.c.bf16 %v69, %v68
      %v137 = vpack.c.bf16 %v71, %v70
      %v138 = vpack.c.bf16 %v73, %v72
      %v139 = vpack.c.bf16 %v75, %v74
      %v140 = vpack.c.bf16 %v77, %v76
      %v141 = vpack.c.bf16 %v79, %v78
      %v142 = vpack.c.bf16 %v81, %v80
      %v143 = vpack.c.bf16 %v83, %v82
      %v144 = vpack.c.bf16 %v85, %v84
      %v145 = vpack.c.bf16 %v87, %v86
      %v146 = vpack.c.bf16 %v89, %v88
      %v147 = vpack.c.bf16 %v91, %v90
      %v148 = vpack.c.bf16 %v93, %v92
      %v149 = vpack.c.bf16 %v95, %v94
      %v150 = vpack.c.bf16 %v97, %v96
      %v152 = vlaneseq
      %v153 = vshrl.u32 %v152, 7
      %v154 = vsub.s32 0, %v153
      %v155 = vrot.slane %v134, %v154
      %v173 = vunpack.c.l.b16 %v100
      %v174 = vunpack.c.l.b16 %v101
      %v175 = vunpack.c.l.b16 %v102
      %v176 = vunpack.c.l.b16 %v103
      %v177 = vunpack.c.l.b16 %v104
      %v178 = vunpack.c.l.b16 %v105
      %v179 = vunpack.c.l.b16 %v106
      %v180 = vunpack.c.l.b16 %v107
      %v181 = vunpack.c.l.b16 %v108
      %v182 = vunpack.c.l.b16 %v109
      %v183 = vunpack.c.l.b16 %v110
      %v184 = vunpack.c.l.b16 %v111
      %v185 = vunpack.c.l.b16 %v112
      %v186 = vunpack.c.l.b16 %v113
      %v187 = vunpack.c.l.b16 %v114
      %v188 = vunpack.c.l.b16 %v115
      %v189 = vpack.c.b16 %v174, %v173
      %v190 = vpack.c.b16 %v176, %v175
      %v191 = vpack.c.b16 %v178, %v177
      %v192 = vpack.c.b16 %v180, %v179
      %v193 = vpack.c.b16 %v182, %v181
      %v194 = vpack.c.b16 %v184, %v183
      %v195 = vpack.c.b16 %v186, %v185
      %v196 = vpack.c.b16 %v188, %v187
      %205 = vmatprep.subr.bf16.mxu0 0
      %206 = vmatpush1.bf16.msra.mxu0 %v196
      %207 = vmatprep.subr.bf16.mxu0 0
      %208 = vmatpush1.bf16.msra.mxu0 %v195
      %209 = vmatprep.subr.bf16.mxu0 0
      %210 = vmatpush1.bf16.msra.mxu0 %v194
      %211 = vmatprep.subr.bf16.mxu0 0
      %212 = vmatpush1.bf16.msra.mxu0 %v193
      %213 = vmatprep.subr.bf16.mxu0 0
      %214 = vmatpush1.bf16.msra.mxu0 %v192
      %215 = vmatprep.subr.bf16.mxu0 0
      %216 = vmatpush1.bf16.msra.mxu0 %v191
      %217 = vmatprep.subr.bf16.mxu0 0
      %218 = vmatpush1.bf16.msra.mxu0 %v190
      %219 = vmatprep.subr.bf16.mxu0 0
      %220 = vmatpush1.bf16.msra.mxu0 %v189
      %221 = vmatprep.subr.bf16.mxu0 0
      %222 = vmatpush2.bf16.msra.mxu0 0
      %223 = vmatprep.subr.bf16.mxu0 0
      %224 = vmatpush2.bf16.msra.mxu0 0
      %225 = vmatprep.subr.bf16.mxu0 0
      %226 = vmatpush2.bf16.msra.mxu0 0
      %227 = vmatprep.subr.bf16.mxu0 0
      %228 = vmatpush2.bf16.msra.mxu0 0
      %229 = vmatprep.subr.bf16.mxu0 0
      %230 = vmatpush2.bf16.msra.mxu0 0
      %231 = vmatprep.subr.bf16.mxu0 0
      %232 = vmatpush2.bf16.msra.mxu0 0
      %233 = vmatprep.subr.bf16.mxu0 0
      %234 = vmatpush2.bf16.msra.mxu0 0
      %235 = vmatprep.subr.bf16.mxu0 0
      %236 = vmatpush2.bf16.msra.mxu0 0
      %237 = vmatprep.mubr.bf16.mxu0 0
      %238 = vmatmul.mubr.bf16.gmra.mxu0 %v135
      %v239 = vpop.f32.mrf.mxu0
      %v240 = vadd.f32 %v155, %v239
      %v241 = vpop.f32.mrf.mxu0
      %v242 = vpop.f32.mrf.mxu0
      %v243 = vadd.f32 %v155, %v242
      %v244 = vpop.f32.mrf.mxu0
      %245 = vmatprep.mubr.bf16.mxu0 0
      %246 = vmatmul.mubr.bf16.gmra.mxu0 %v136
      %v247 = vpop.f32.mrf.mxu0
      %v248 = vadd.f32 %v155, %v247
      %v249 = vpop.f32.mrf.mxu0
      %v250 = vpop.f32.mrf.mxu0
      %v251 = vadd.f32 %v155, %v250
      %v252 = vpop.f32.mrf.mxu0
      %253 = vmatprep.mubr.bf16.mxu0 0
      %254 = vmatmul.mubr.bf16.gmra.mxu0 %v137
      %v255 = vpop.f32.mrf.mxu0
      %v256 = vadd.f32 %v155, %v255
      %v257 = vpop.f32.mrf.mxu0
      %v258 = vpop.f32.mrf.mxu0
      %v259 = vadd.f32 %v155, %v258
      %v260 = vpop.f32.mrf.mxu0
      %261 = vmatprep.mubr.bf16.mxu0 0
      %262 = vmatmul.mubr.bf16.gmra.mxu0 %v138
      %v263 = vpop.f32.mrf.mxu0
      %v264 = vadd.f32 %v155, %v263
      %v265 = vpop.f32.mrf.mxu0
      %v266 = vpop.f32.mrf.mxu0
      %v267 = vadd.f32 %v155, %v266
      %v268 = vpop.f32.mrf.mxu0
      %269 = vmatprep.mubr.bf16.mxu0 0
      %270 = vmatmul.mubr.bf16.gmra.mxu0 %v139
      %v271 = vpop.f32.mrf.mxu0
      %v272 = vadd.f32 %v155, %v271
      %v273 = vpop.f32.mrf.mxu0
      %v274 = vpop.f32.mrf.mxu0
      %v275 = vadd.f32 %v155, %v274
      %v276 = vpop.f32.mrf.mxu0
      %277 = vmatprep.mubr.bf16.mxu0 0
      %278 = vmatmul.mubr.bf16.gmra.mxu0 %v140
      %v279 = vpop.f32.mrf.mxu0
      %v280 = vadd.f32 %v155, %v279
      %v281 = vpop.f32.mrf.mxu0
      %v282 = vpop.f32.mrf.mxu0
      %v283 = vadd.f32 %v155, %v282
      %v284 = vpop.f32.mrf.mxu0
      %285 = vmatprep.mubr.bf16.mxu0 0
      %286 = vmatmul.mubr.bf16.gmra.mxu0 %v141
      %v287 = vpop.f32.mrf.mxu0
      %v288 = vadd.f32 %v155, %v287
      %v289 = vpop.f32.mrf.mxu0
      %v290 = vpop.f32.mrf.mxu0
      %v291 = vadd.f32 %v155, %v290
      %v292 = vpop.f32.mrf.mxu0
      %293 = vmatprep.mubr.bf16.mxu0 0
      %294 = vmatmul.mubr.bf16.gmra.mxu0 %v142
      %v295 = vpop.f32.mrf.mxu0
      %v296 = vadd.f32 %v155, %v295
      %v297 = vpop.f32.mrf.mxu0
      %v298 = vpop.f32.mrf.mxu0
      %v299 = vadd.f32 %v155, %v298
      %v300 = vpop.f32.mrf.mxu0
      %301 = vmatprep.mubr.bf16.mxu0 0
      %302 = vmatmul.mubr.bf16.gmra.mxu0 %v143
      %v303 = vpop.f32.mrf.mxu0
      %v304 = vadd.f32 %v155, %v303
      %v305 = vpop.f32.mrf.mxu0
      %v306 = vpop.f32.mrf.mxu0
      %v307 = vadd.f32 %v155, %v306
      %v308 = vpop.f32.mrf.mxu0
      %309 = vmatprep.mubr.bf16.mxu0 0
      %310 = vmatmul.mubr.bf16.gmra.mxu0 %v144
      %v311 = vpop.f32.mrf.mxu0
      %v312 = vadd.f32 %v155, %v311
      %v313 = vpop.f32.mrf.mxu0
      %v314 = vpop.f32.mrf.mxu0
      %v315 = vadd.f32 %v155, %v314
      %v316 = vpop.f32.mrf.mxu0
      %317 = vmatprep.mubr.bf16.mxu0 0
      %318 = vmatmul.mubr.bf16.gmra.mxu0 %v145
      %v319 = vpop.f32.mrf.mxu0
      %v320 = vadd.f32 %v155, %v319
      %v321 = vpop.f32.mrf.mxu0
      %v322 = vpop.f32.mrf.mxu0
      %v323 = vadd.f32 %v155, %v322
      %v324 = vpop.f32.mrf.mxu0
      %325 = vmatprep.mubr.bf16.mxu0 0
      %326 = vmatmul.mubr.bf16.gmra.mxu0 %v146
      %v327 = vpop.f32.mrf.mxu0
      %v328 = vadd.f32 %v155, %v327
      %v329 = vpop.f32.mrf.mxu0
      %v330 = vpop.f32.mrf.mxu0
      %v331 = vadd.f32 %v155, %v330
      %v332 = vpop.f32.mrf.mxu0
      %333 = vmatprep.mubr.bf16.mxu0 0
      %334 = vmatmul.mubr.bf16.gmra.mxu0 %v147
      %v335 = vpop.f32.mrf.mxu0
      %v336 = vadd.f32 %v155, %v335
      %v337 = vpop.f32.mrf.mxu0
      %v338 = vpop.f32.mrf.mxu0
      %v339 = vadd.f32 %v155, %v338
      %v340 = vpop.f32.mrf.mxu0
      %341 = vmatprep.mubr.bf16.mxu0 0
      %342 = vmatmul.mubr.bf16.gmra.mxu0 %v148
      %v343 = vpop.f32.mrf.mxu0
      %v344 = vadd.f32 %v155, %v343
      %v345 = vpop.f32.mrf.mxu0
      %v346 = vpop.f32.mrf.mxu0
      %v347 = vadd.f32 %v155, %v346
      %v348 = vpop.f32.mrf.mxu0
      %349 = vmatprep.mubr.bf16.mxu0 0
      %350 = vmatmul.mubr.bf16.gmra.mxu0 %v149
      %v351 = vpop.f32.mrf.mxu0
      %v352 = vadd.f32 %v155, %v351
      %v353 = vpop.f32.mrf.mxu0
      %v354 = vpop.f32.mrf.mxu0
      %v355 = vadd.f32 %v155, %v354
      %v356 = vpop.f32.mrf.mxu0
      %357 = vmatprep.mubr.bf16.mxu0 0
      %358 = vmatmul.mubr.bf16.gmra.mxu0 %v150
      %v359 = vpop.f32.mrf.mxu0
      %v360 = vadd.f32 %v155, %v359
      %v361 = vpop.f32.mrf.mxu0
      %v362 = vpop.f32.mrf.mxu0
      %v363 = vadd.f32 %v155, %v362
      %v364 = vpop.f32.mrf.mxu0
      %365 = vdwg.mxu0
      %v366 = vtanh.pop %v240
      %v367 = vtanh.pop %v243
      %v368 = vtanh.pop %v248
      %v369 = vtanh.pop %v251
      %v370 = vtanh.pop %v256
      %v371 = vtanh.pop %v259
      %v372 = vtanh.pop %v264
      %v373 = vtanh.pop %v267
      %v374 = vtanh.pop %v272
      %v375 = vtanh.pop %v275
      %v376 = vtanh.pop %v280
      %v377 = vtanh.pop %v283
      %v378 = vtanh.pop %v288
      %v379 = vtanh.pop %v291
      %v380 = vtanh.pop %v296
      %v381 = vtanh.pop %v299
      %v382 = vtanh.pop %v304
      %v383 = vtanh.pop %v307
      %v384 = vtanh.pop %v312
      %v385 = vtanh.pop %v315
      %v386 = vtanh.pop %v320
      %v387 = vtanh.pop %v323
      %v388 = vtanh.pop %v328
      %v389 = vtanh.pop %v331
      %v390 = vtanh.pop %v336
      %v391 = vtanh.pop %v339
      %v392 = vtanh.pop %v344
      %v393 = vtanh.pop %v347
      %v394 = vtanh.pop %v352
      %v395 = vtanh.pop %v355
      %v396 = vtanh.pop %v360
      %v397 = vtanh.pop %v363
      %v398 = vpack.c.bf16 %v367, %v366
      %v399 = vpack.c.bf16 %v369, %v368
      %v400 = vpack.c.bf16 %v371, %v370
      %v401 = vpack.c.bf16 %v373, %v372
      %v402 = vpack.c.bf16 %v375, %v374
      %v403 = vpack.c.bf16 %v377, %v376
      %v404 = vpack.c.bf16 %v379, %v378
      %v405 = vpack.c.bf16 %v381, %v380
      %v406 = vpack.c.bf16 %v383, %v382
      %v407 = vpack.c.bf16 %v385, %v384
      %v408 = vpack.c.bf16 %v387, %v386
      %v409 = vpack.c.bf16 %v389, %v388
      %v410 = vpack.c.bf16 %v391, %v390
      %v411 = vpack.c.bf16 %v393, %v392
      %v412 = vpack.c.bf16 %v395, %v394
      %v413 = vpack.c.bf16 %v397, %v396
      %v415 = vlaneseq
      %v416 = vshrl.u32 %v415, 7
      %v417 = vsub.s32 0, %v416
      %v418 = vrot.slane %v27, %v417
      %v436 = vunpack.c.l.b16 %v116
      %v437 = vunpack.c.l.b16 %v117
      %v438 = vunpack.c.l.b16 %v118
      %v439 = vunpack.c.l.b16 %v119
      %v440 = vunpack.c.l.b16 %v120
      %v441 = vunpack.c.l.b16 %v121
      %v442 = vunpack.c.l.b16 %v122
      %v443 = vunpack.c.l.b16 %v123
      %v444 = vunpack.c.l.b16 %v124
      %v445 = vunpack.c.l.b16 %v125
      %v446 = vunpack.c.l.b16 %v126
      %v447 = vunpack.c.l.b16 %v127
      %v448 = vunpack.c.l.b16 %v128
      %v449 = vunpack.c.l.b16 %v129
      %v450 = vunpack.c.l.b16 %v130
      %v451 = vunpack.c.l.b16 %v131
      %v452 = vpack.c.b16 %v437, %v436
      %v453 = vpack.c.b16 %v439, %v438
      %v454 = vpack.c.b16 %v441, %v440
      %v455 = vpack.c.b16 %v443, %v442
      %v456 = vpack.c.b16 %v445, %v444
      %v457 = vpack.c.b16 %v447, %v446
      %v458 = vpack.c.b16 %v449, %v448
      %v459 = vpack.c.b16 %v451, %v450
      %468 = vmatprep.subr.bf16.mxu0 0
      %469 = vmatpush1.bf16.msra.mxu0 %v459
      %470 = vmatprep.subr.bf16.mxu0 0
      %471 = vmatpush1.bf16.msra.mxu0 %v458
      %472 = vmatprep.subr.bf16.mxu0 0
      %473 = vmatpush1.bf16.msra.mxu0 %v457
      %474 = vmatprep.subr.bf16.mxu0 0
      %475 = vmatpush1.bf16.msra.mxu0 %v456
      %476 = vmatprep.subr.bf16.mxu0 0
      %477 = vmatpush1.bf16.msra.mxu0 %v455
      %478 = vmatprep.subr.bf16.mxu0 0
      %479 = vmatpush1.bf16.msra.mxu0 %v454
      %480 = vmatprep.subr.bf16.mxu0 0
      %481 = vmatpush1.bf16.msra.mxu0 %v453
      %482 = vmatprep.subr.bf16.mxu0 0
      %483 = vmatpush1.bf16.msra.mxu0 %v452
      %484 = vmatprep.subr.bf16.mxu0 0
      %485 = vmatpush2.bf16.msra.mxu0 0
      %486 = vmatprep.subr.bf16.mxu0 0
      %487 = vmatpush2.bf16.msra.mxu0 0
      %488 = vmatprep.subr.bf16.mxu0 0
      %489 = vmatpush2.bf16.msra.mxu0 0
      %490 = vmatprep.subr.bf16.mxu0 0
      %491 = vmatpush2.bf16.msra.mxu0 0
      %492 = vmatprep.subr.bf16.mxu0 0
      %493 = vmatpush2.bf16.msra.mxu0 0
      %494 = vmatprep.subr.bf16.mxu0 0
      %495 = vmatpush2.bf16.msra.mxu0 0
      %496 = vmatprep.subr.bf16.mxu0 0
      %497 = vmatpush2.bf16.msra.mxu0 0
      %498 = vmatprep.subr.bf16.mxu0 0
      %499 = vmatpush2.bf16.msra.mxu0 0
      %500 = vmatprep.mubr.bf16.mxu0 0
      %501 = vmatmul.mubr.bf16.gmra.mxu0 %v398
      %v502 = vpop.f32.mrf.mxu0
      %v503 = vadd.f32 %v418, %v502
      %v504 = vpop.f32.mrf.mxu0
      %v505 = vpop.f32.mrf.mxu0
      %v506 = vadd.f32 %v418, %v505
      %v507 = vpop.f32.mrf.mxu0
      %508 = vmatprep.mubr.bf16.mxu0 0
      %509 = vmatmul.mubr.bf16.gmra.mxu0 %v399
      %v510 = vpop.f32.mrf.mxu0
      %v511 = vadd.f32 %v418, %v510
      %v512 = vpop.f32.mrf.mxu0
      %v513 = vpop.f32.mrf.mxu0
      %v514 = vadd.f32 %v418, %v513
      %v515 = vpop.f32.mrf.mxu0
      %516 = vmatprep.mubr.bf16.mxu0 0
      %517 = vmatmul.mubr.bf16.gmra.mxu0 %v400
      %v518 = vpop.f32.mrf.mxu0
      %v519 = vadd.f32 %v418, %v518
      %v520 = vpop.f32.mrf.mxu0
      %v521 = vpop.f32.mrf.mxu0
      %v522 = vadd.f32 %v418, %v521
      %v523 = vpop.f32.mrf.mxu0
      %524 = vmatprep.mubr.bf16.mxu0 0
      %525 = vmatmul.mubr.bf16.gmra.mxu0 %v401
      %v526 = vpop.f32.mrf.mxu0
      %v527 = vadd.f32 %v418, %v526
      %v528 = vpop.f32.mrf.mxu0
      %v529 = vpop.f32.mrf.mxu0
      %v530 = vadd.f32 %v418, %v529
      %v531 = vpop.f32.mrf.mxu0
      %532 = vmatprep.mubr.bf16.mxu0 0
      %533 = vmatmul.mubr.bf16.gmra.mxu0 %v402
      %v534 = vpop.f32.mrf.mxu0
      %v535 = vadd.f32 %v418, %v534
      %v536 = vpop.f32.mrf.mxu0
      %v537 = vpop.f32.mrf.mxu0
      %v538 = vadd.f32 %v418, %v537
      %v539 = vpop.f32.mrf.mxu0
      %540 = vmatprep.mubr.bf16.mxu0 0
      %541 = vmatmul.mubr.bf16.gmra.mxu0 %v403
      %v542 = vpop.f32.mrf.mxu0
      %v543 = vadd.f32 %v418, %v542
      %v544 = vpop.f32.mrf.mxu0
      %v545 = vpop.f32.mrf.mxu0
      %v546 = vadd.f32 %v418, %v545
      %v547 = vpop.f32.mrf.mxu0
      %548 = vmatprep.mubr.bf16.mxu0 0
      %549 = vmatmul.mubr.bf16.gmra.mxu0 %v404
      %v550 = vpop.f32.mrf.mxu0
      %v551 = vadd.f32 %v418, %v550
      %v552 = vpop.f32.mrf.mxu0
      %v553 = vpop.f32.mrf.mxu0
      %v554 = vadd.f32 %v418, %v553
      %v555 = vpop.f32.mrf.mxu0
      %556 = vmatprep.mubr.bf16.mxu0 0
      %557 = vmatmul.mubr.bf16.gmra.mxu0 %v405
      %v558 = vpop.f32.mrf.mxu0
      %v559 = vadd.f32 %v418, %v558
      %v560 = vpop.f32.mrf.mxu0
      %v561 = vpop.f32.mrf.mxu0
      %v562 = vadd.f32 %v418, %v561
      %v563 = vpop.f32.mrf.mxu0
      %564 = vmatprep.mubr.bf16.mxu0 0
      %565 = vmatmul.mubr.bf16.gmra.mxu0 %v406
      %v566 = vpop.f32.mrf.mxu0
      %v567 = vadd.f32 %v418, %v566
      %v568 = vpop.f32.mrf.mxu0
      %v569 = vpop.f32.mrf.mxu0
      %v570 = vadd.f32 %v418, %v569
      %v571 = vpop.f32.mrf.mxu0
      %572 = vmatprep.mubr.bf16.mxu0 0
      %573 = vmatmul.mubr.bf16.gmra.mxu0 %v407
      %v574 = vpop.f32.mrf.mxu0
      %v575 = vadd.f32 %v418, %v574
      %v576 = vpop.f32.mrf.mxu0
      %v577 = vpop.f32.mrf.mxu0
      %v578 = vadd.f32 %v418, %v577
      %v579 = vpop.f32.mrf.mxu0
      %580 = vmatprep.mubr.bf16.mxu0 0
      %581 = vmatmul.mubr.bf16.gmra.mxu0 %v408
      %v582 = vpop.f32.mrf.mxu0
      %v583 = vadd.f32 %v418, %v582
      %v584 = vpop.f32.mrf.mxu0
      %v585 = vpop.f32.mrf.mxu0
      %v586 = vadd.f32 %v418, %v585
      %v587 = vpop.f32.mrf.mxu0
      %588 = vmatprep.mubr.bf16.mxu0 0
      %589 = vmatmul.mubr.bf16.gmra.mxu0 %v409
      %v590 = vpop.f32.mrf.mxu0
      %v591 = vadd.f32 %v418, %v590
      %v592 = vpop.f32.mrf.mxu0
      %v593 = vpop.f32.mrf.mxu0
      %v594 = vadd.f32 %v418, %v593
      %v595 = vpop.f32.mrf.mxu0
      %596 = vmatprep.mubr.bf16.mxu0 0
      %597 = vmatmul.mubr.bf16.gmra.mxu0 %v410
      %v598 = vpop.f32.mrf.mxu0
      %v599 = vadd.f32 %v418, %v598
      %v600 = vpop.f32.mrf.mxu0
      %v601 = vpop.f32.mrf.mxu0
      %v602 = vadd.f32 %v418, %v601
      %v603 = vpop.f32.mrf.mxu0
      %604 = vmatprep.mubr.bf16.mxu0 0
      %605 = vmatmul.mubr.bf16.gmra.mxu0 %v411
      %v606 = vpop.f32.mrf.mxu0
      %v607 = vadd.f32 %v418, %v606
      %v608 = vpop.f32.mrf.mxu0
      %v609 = vpop.f32.mrf.mxu0
      %v610 = vadd.f32 %v418, %v609
      %v611 = vpop.f32.mrf.mxu0
      %612 = vmatprep.mubr.bf16.mxu0 0
      %613 = vmatmul.mubr.bf16.gmra.mxu0 %v412
      %v614 = vpop.f32.mrf.mxu0
      %v615 = vadd.f32 %v418, %v614
      %v616 = vpop.f32.mrf.mxu0
      %v617 = vpop.f32.mrf.mxu0
      %v618 = vadd.f32 %v418, %v617
      %v619 = vpop.f32.mrf.mxu0
      %620 = vmatprep.mubr.bf16.mxu0 0
      %621 = vmatmul.mubr.bf16.gmra.mxu0 %v413
      %v622 = vpop.f32.mrf.mxu0
      %v623 = vadd.f32 %v418, %v622
      %v624 = vpop.f32.mrf.mxu0
      %v625 = vpop.f32.mrf.mxu0
      %v626 = vadd.f32 %v418, %v625
      %v627 = vpop.f32.mrf.mxu0
      %628 = vdwg.mxu0
      %v629 = vpack.c.bf16 %v506, %v503
      %v630 = vpack.c.bf16 %v514, %v511
      %v631 = vpack.c.bf16 %v522, %v519
      %v632 = vpack.c.bf16 %v530, %v527
      %v633 = vpack.c.bf16 %v538, %v535
      %v634 = vpack.c.bf16 %v546, %v543
      %v635 = vpack.c.bf16 %v554, %v551
      %v636 = vpack.c.bf16 %v562, %v559
      %v637 = vpack.c.bf16 %v570, %v567
      %v638 = vpack.c.bf16 %v578, %v575
      %v639 = vpack.c.bf16 %v586, %v583
      %v640 = vpack.c.bf16 %v594, %v591
      %v641 = vpack.c.bf16 %v602, %v599
      %v642 = vpack.c.bf16 %v610, %v607
      %v643 = vpack.c.bf16 %v618, %v615
      %v644 = vpack.c.bf16 %v626, %v623
      %s645 = sadd.f32 %s99, 0.0125
      %v646 = vunpack.c.l.bf16 %v629
      %v647 = vunpack.c.h.bf16 %v629
      %v648 = vunpack.c.l.bf16 %v630
      %v649 = vunpack.c.h.bf16 %v630
      %v650 = vunpack.c.l.bf16 %v631
      %v651 = vunpack.c.h.bf16 %v631
      %v652 = vunpack.c.l.bf16 %v632
      %v653 = vunpack.c.h.bf16 %v632
      %v654 = vunpack.c.l.bf16 %v633
      %v655 = vunpack.c.h.bf16 %v633
      %v656 = vunpack.c.l.bf16 %v634
      %v657 = vunpack.c.h.bf16 %v634
      %v658 = vunpack.c.l.bf16 %v635
      %v659 = vunpack.c.h.bf16 %v635
      %v660 = vunpack.c.l.bf16 %v636
      %v661 = vunpack.c.h.bf16 %v636
      %v662 = vunpack.c.l.bf16 %v637
      %v663 = vunpack.c.h.bf16 %v637
      %v664 = vunpack.c.l.bf16 %v638
      %v665 = vunpack.c.h.bf16 %v638
      %v666 = vunpack.c.l.bf16 %v639
      %v667 = vunpack.c.h.bf16 %v639
      %v668 = vunpack.c.l.bf16 %v640
      %v669 = vunpack.c.h.bf16 %v640
      %v670 = vunpack.c.l.bf16 %v641
      %v671 = vunpack.c.h.bf16 %v641
      %v672 = vunpack.c.l.bf16 %v642
      %v673 = vunpack.c.h.bf16 %v642
      %v674 = vunpack.c.l.bf16 %v643
      %v675 = vunpack.c.h.bf16 %v643
      %v676 = vunpack.c.l.bf16 %v644
      %v677 = vunpack.c.h.bf16 %v644
      %v678 = vmul.f32 %v646, 0.0125
      %v679 = vmul.f32 %v647, 0.0125
      %v680 = vmul.f32 %v648, 0.0125
      %v681 = vmul.f32 %v649, 0.0125
      %v682 = vmul.f32 %v650, 0.0125
      %v683 = vmul.f32 %v651, 0.0125
      %v684 = vmul.f32 %v652, 0.0125
      %v685 = vmul.f32 %v653, 0.0125
      %v686 = vmul.f32 %v654, 0.0125
      %v687 = vmul.f32 %v655, 0.0125
      %v688 = vmul.f32 %v656, 0.0125
      %v689 = vmul.f32 %v657, 0.0125
      %v690 = vmul.f32 %v658, 0.0125
      %v691 = vmul.f32 %v659, 0.0125
      %v692 = vmul.f32 %v660, 0.0125
      %v693 = vmul.f32 %v661, 0.0125
      %v694 = vmul.f32 %v662, 0.0125
      %v695 = vmul.f32 %v663, 0.0125
      %v696 = vmul.f32 %v664, 0.0125
      %v697 = vmul.f32 %v665, 0.0125
      %v698 = vmul.f32 %v666, 0.0125
      %v699 = vmul.f32 %v667, 0.0125
      %v700 = vmul.f32 %v668, 0.0125
      %v701 = vmul.f32 %v669, 0.0125
      %v702 = vmul.f32 %v670, 0.0125
      %v703 = vmul.f32 %v671, 0.0125
      %v704 = vmul.f32 %v672, 0.0125
      %v705 = vmul.f32 %v673, 0.0125
      %v706 = vmul.f32 %v674, 0.0125
      %v707 = vmul.f32 %v675, 0.0125
      %v708 = vmul.f32 %v676, 0.0125
      %v709 = vmul.f32 %v677, 0.0125
      %v710 = vadd.f32 %v66, %v678
      %v711 = vadd.f32 %v67, %v679
      %v712 = vadd.f32 %v68, %v680
      %v713 = vadd.f32 %v69, %v681
      %v714 = vadd.f32 %v70, %v682
      %v715 = vadd.f32 %v71, %v683
      %v716 = vadd.f32 %v72, %v684
      %v717 = vadd.f32 %v73, %v685
      %v718 = vadd.f32 %v74, %v686
      %v719 = vadd.f32 %v75, %v687
      %v720 = vadd.f32 %v76, %v688
      %v721 = vadd.f32 %v77, %v689
      %v722 = vadd.f32 %v78, %v690
      %v723 = vadd.f32 %v79, %v691
      %v724 = vadd.f32 %v80, %v692
      %v725 = vadd.f32 %v81, %v693
      %v726 = vadd.f32 %v82, %v694
      %v727 = vadd.f32 %v83, %v695
      %v728 = vadd.f32 %v84, %v696
      %v729 = vadd.f32 %v85, %v697
      %v730 = vadd.f32 %v86, %v698
      %v731 = vadd.f32 %v87, %v699
      %v732 = vadd.f32 %v88, %v700
      %v733 = vadd.f32 %v89, %v701
      %v734 = vadd.f32 %v90, %v702
      %v735 = vadd.f32 %v91, %v703
      %v736 = vadd.f32 %v92, %v704
      %v737 = vadd.f32 %v93, %v705
      %v738 = vadd.f32 %v94, %v706
      %v739 = vadd.f32 %v95, %v707
      %v740 = vadd.f32 %v96, %v708
      %v741 = vadd.f32 %v97, %v709
      %v742 = vstv %s645
      %v743 = vmul.f32 %v742, %v26
      %v744 = vadd.f32 %v25, %v743
      %v745 = vpack.c.bf16 %v711, %v710
      %v746 = vpack.c.bf16 %v713, %v712
      %v747 = vpack.c.bf16 %v715, %v714
      %v748 = vpack.c.bf16 %v717, %v716
      %v749 = vpack.c.bf16 %v719, %v718
      %v750 = vpack.c.bf16 %v721, %v720
      %v751 = vpack.c.bf16 %v723, %v722
      %v752 = vpack.c.bf16 %v725, %v724
      %v753 = vpack.c.bf16 %v727, %v726
      %v754 = vpack.c.bf16 %v729, %v728
      %v755 = vpack.c.bf16 %v731, %v730
      %v756 = vpack.c.bf16 %v733, %v732
      %v757 = vpack.c.bf16 %v735, %v734
      %v758 = vpack.c.bf16 %v737, %v736
      %v759 = vpack.c.bf16 %v739, %v738
      %v760 = vpack.c.bf16 %v741, %v740
      %v762 = vlaneseq
      %v763 = vshrl.u32 %v762, 7
      %v764 = vsub.s32 0, %v763
      %v765 = vrot.slane %v744, %v764
      %767 = vmatprep.subr.bf16.mxu0 0
      %768 = vmatpush1.bf16.msra.mxu0 %v196
      %769 = vmatprep.subr.bf16.mxu0 0
      %770 = vmatpush1.bf16.msra.mxu0 %v195
      %771 = vmatprep.subr.bf16.mxu0 0
      %772 = vmatpush1.bf16.msra.mxu0 %v194
      %773 = vmatprep.subr.bf16.mxu0 0
      %774 = vmatpush1.bf16.msra.mxu0 %v193
      %775 = vmatprep.subr.bf16.mxu0 0
      %776 = vmatpush1.bf16.msra.mxu0 %v192
      %777 = vmatprep.subr.bf16.mxu0 0
      %778 = vmatpush1.bf16.msra.mxu0 %v191
      %779 = vmatprep.subr.bf16.mxu0 0
      %780 = vmatpush1.bf16.msra.mxu0 %v190
      %781 = vmatprep.subr.bf16.mxu0 0
      %782 = vmatpush1.bf16.msra.mxu0 %v189
      %783 = vmatprep.subr.bf16.mxu0 0
      %784 = vmatpush2.bf16.msra.mxu0 0
      %785 = vmatprep.subr.bf16.mxu0 0
      %786 = vmatpush2.bf16.msra.mxu0 0
      %787 = vmatprep.subr.bf16.mxu0 0
      %788 = vmatpush2.bf16.msra.mxu0 0
      %789 = vmatprep.subr.bf16.mxu0 0
      %790 = vmatpush2.bf16.msra.mxu0 0
      %791 = vmatprep.subr.bf16.mxu0 0
      %792 = vmatpush2.bf16.msra.mxu0 0
      %793 = vmatprep.subr.bf16.mxu0 0
      %794 = vmatpush2.bf16.msra.mxu0 0
      %795 = vmatprep.subr.bf16.mxu0 0
      %796 = vmatpush2.bf16.msra.mxu0 0
      %797 = vmatprep.subr.bf16.mxu0 0
      %798 = vmatpush2.bf16.msra.mxu0 0
      %799 = vmatprep.mubr.bf16.mxu0 0
      %800 = vmatmul.mubr.bf16.gmra.mxu0 %v745
      %v801 = vpop.f32.mrf.mxu0
      %v802 = vadd.f32 %v765, %v801
      %v803 = vpop.f32.mrf.mxu0
      %v804 = vpop.f32.mrf.mxu0
      %v805 = vadd.f32 %v765, %v804
      %v806 = vpop.f32.mrf.mxu0
      %807 = vmatprep.mubr.bf16.mxu0 0
      %808 = vmatmul.mubr.bf16.gmra.mxu0 %v746
      %v809 = vpop.f32.mrf.mxu0
      %v810 = vadd.f32 %v765, %v809
      %v811 = vpop.f32.mrf.mxu0
      %v812 = vpop.f32.mrf.mxu0
      %v813 = vadd.f32 %v765, %v812
      %v814 = vpop.f32.mrf.mxu0
      %815 = vmatprep.mubr.bf16.mxu0 0
      %816 = vmatmul.mubr.bf16.gmra.mxu0 %v747
      %v817 = vpop.f32.mrf.mxu0
      %v818 = vadd.f32 %v765, %v817
      %v819 = vpop.f32.mrf.mxu0
      %v820 = vpop.f32.mrf.mxu0
      %v821 = vadd.f32 %v765, %v820
      %v822 = vpop.f32.mrf.mxu0
      %823 = vmatprep.mubr.bf16.mxu0 0
      %824 = vmatmul.mubr.bf16.gmra.mxu0 %v748
      %v825 = vpop.f32.mrf.mxu0
      %v826 = vadd.f32 %v765, %v825
      %v827 = vpop.f32.mrf.mxu0
      %v828 = vpop.f32.mrf.mxu0
      %v829 = vadd.f32 %v765, %v828
      %v830 = vpop.f32.mrf.mxu0
      %831 = vmatprep.mubr.bf16.mxu0 0
      %832 = vmatmul.mubr.bf16.gmra.mxu0 %v749
      %v833 = vpop.f32.mrf.mxu0
      %v834 = vadd.f32 %v765, %v833
      %v835 = vpop.f32.mrf.mxu0
      %v836 = vpop.f32.mrf.mxu0
      %v837 = vadd.f32 %v765, %v836
      %v838 = vpop.f32.mrf.mxu0
      %839 = vmatprep.mubr.bf16.mxu0 0
      %840 = vmatmul.mubr.bf16.gmra.mxu0 %v750
      %v841 = vpop.f32.mrf.mxu0
      %v842 = vadd.f32 %v765, %v841
      %v843 = vpop.f32.mrf.mxu0
      %v844 = vpop.f32.mrf.mxu0
      %v845 = vadd.f32 %v765, %v844
      %v846 = vpop.f32.mrf.mxu0
      %847 = vmatprep.mubr.bf16.mxu0 0
      %848 = vmatmul.mubr.bf16.gmra.mxu0 %v751
      %v849 = vpop.f32.mrf.mxu0
      %v850 = vadd.f32 %v765, %v849
      %v851 = vpop.f32.mrf.mxu0
      %v852 = vpop.f32.mrf.mxu0
      %v853 = vadd.f32 %v765, %v852
      %v854 = vpop.f32.mrf.mxu0
      %855 = vmatprep.mubr.bf16.mxu0 0
      %856 = vmatmul.mubr.bf16.gmra.mxu0 %v752
      %v857 = vpop.f32.mrf.mxu0
      %v858 = vadd.f32 %v765, %v857
      %v859 = vpop.f32.mrf.mxu0
      %v860 = vpop.f32.mrf.mxu0
      %v861 = vadd.f32 %v765, %v860
      %v862 = vpop.f32.mrf.mxu0
      %863 = vmatprep.mubr.bf16.mxu0 0
      %864 = vmatmul.mubr.bf16.gmra.mxu0 %v753
      %v865 = vpop.f32.mrf.mxu0
      %v866 = vadd.f32 %v765, %v865
      %v867 = vpop.f32.mrf.mxu0
      %v868 = vpop.f32.mrf.mxu0
      %v869 = vadd.f32 %v765, %v868
      %v870 = vpop.f32.mrf.mxu0
      %871 = vmatprep.mubr.bf16.mxu0 0
      %872 = vmatmul.mubr.bf16.gmra.mxu0 %v754
      %v873 = vpop.f32.mrf.mxu0
      %v874 = vadd.f32 %v765, %v873
      %v875 = vpop.f32.mrf.mxu0
      %v876 = vpop.f32.mrf.mxu0
      %v877 = vadd.f32 %v765, %v876
      %v878 = vpop.f32.mrf.mxu0
      %879 = vmatprep.mubr.bf16.mxu0 0
      %880 = vmatmul.mubr.bf16.gmra.mxu0 %v755
      %v881 = vpop.f32.mrf.mxu0
      %v882 = vadd.f32 %v765, %v881
      %v883 = vpop.f32.mrf.mxu0
      %v884 = vpop.f32.mrf.mxu0
      %v885 = vadd.f32 %v765, %v884
      %v886 = vpop.f32.mrf.mxu0
      %887 = vmatprep.mubr.bf16.mxu0 0
      %888 = vmatmul.mubr.bf16.gmra.mxu0 %v756
      %v889 = vpop.f32.mrf.mxu0
      %v890 = vadd.f32 %v765, %v889
      %v891 = vpop.f32.mrf.mxu0
      %v892 = vpop.f32.mrf.mxu0
      %v893 = vadd.f32 %v765, %v892
      %v894 = vpop.f32.mrf.mxu0
      %895 = vmatprep.mubr.bf16.mxu0 0
      %896 = vmatmul.mubr.bf16.gmra.mxu0 %v757
      %v897 = vpop.f32.mrf.mxu0
      %v898 = vadd.f32 %v765, %v897
      %v899 = vpop.f32.mrf.mxu0
      %v900 = vpop.f32.mrf.mxu0
      %v901 = vadd.f32 %v765, %v900
      %v902 = vpop.f32.mrf.mxu0
      %903 = vmatprep.mubr.bf16.mxu0 0
      %904 = vmatmul.mubr.bf16.gmra.mxu0 %v758
      %v905 = vpop.f32.mrf.mxu0
      %v906 = vadd.f32 %v765, %v905
      %v907 = vpop.f32.mrf.mxu0
      %v908 = vpop.f32.mrf.mxu0
      %v909 = vadd.f32 %v765, %v908
      %v910 = vpop.f32.mrf.mxu0
      %911 = vmatprep.mubr.bf16.mxu0 0
      %912 = vmatmul.mubr.bf16.gmra.mxu0 %v759
      %v913 = vpop.f32.mrf.mxu0
      %v914 = vadd.f32 %v765, %v913
      %v915 = vpop.f32.mrf.mxu0
      %v916 = vpop.f32.mrf.mxu0
      %v917 = vadd.f32 %v765, %v916
      %v918 = vpop.f32.mrf.mxu0
      %919 = vmatprep.mubr.bf16.mxu0 0
      %920 = vmatmul.mubr.bf16.gmra.mxu0 %v760
      %v921 = vpop.f32.mrf.mxu0
      %v922 = vadd.f32 %v765, %v921
      %v923 = vpop.f32.mrf.mxu0
      %v924 = vpop.f32.mrf.mxu0
      %v925 = vadd.f32 %v765, %v924
      %v926 = vpop.f32.mrf.mxu0
      %927 = vdwg.mxu0
      %v928 = vtanh.pop %v802
      %v929 = vtanh.pop %v805
      %v930 = vtanh.pop %v810
      %v931 = vtanh.pop %v813
      %v932 = vtanh.pop %v818
      %v933 = vtanh.pop %v821
      %v934 = vtanh.pop %v826
      %v935 = vtanh.pop %v829
      %v936 = vtanh.pop %v834
      %v937 = vtanh.pop %v837
      %v938 = vtanh.pop %v842
      %v939 = vtanh.pop %v845
      %v940 = vtanh.pop %v850
      %v941 = vtanh.pop %v853
      %v942 = vtanh.pop %v858
      %v943 = vtanh.pop %v861
      %v944 = vtanh.pop %v866
      %v945 = vtanh.pop %v869
      %v946 = vtanh.pop %v874
      %v947 = vtanh.pop %v877
      %v948 = vtanh.pop %v882
      %v949 = vtanh.pop %v885
      %v950 = vtanh.pop %v890
      %v951 = vtanh.pop %v893
      %v952 = vtanh.pop %v898
      %v953 = vtanh.pop %v901
      %v954 = vtanh.pop %v906
      %v955 = vtanh.pop %v909
      %v956 = vtanh.pop %v914
      %v957 = vtanh.pop %v917
      %v958 = vtanh.pop %v922
      %v959 = vtanh.pop %v925
      %v960 = vpack.c.bf16 %v929, %v928
      %v961 = vpack.c.bf16 %v931, %v930
      %v962 = vpack.c.bf16 %v933, %v932
      %v963 = vpack.c.bf16 %v935, %v934
      %v964 = vpack.c.bf16 %v937, %v936
      %v965 = vpack.c.bf16 %v939, %v938
      %v966 = vpack.c.bf16 %v941, %v940
      %v967 = vpack.c.bf16 %v943, %v942
      %v968 = vpack.c.bf16 %v945, %v944
      %v969 = vpack.c.bf16 %v947, %v946
      %v970 = vpack.c.bf16 %v949, %v948
      %v971 = vpack.c.bf16 %v951, %v950
      %v972 = vpack.c.bf16 %v953, %v952
      %v973 = vpack.c.bf16 %v955, %v954
      %v974 = vpack.c.bf16 %v957, %v956
      %v975 = vpack.c.bf16 %v959, %v958
      %976 = vmatprep.subr.bf16.mxu0 0
      %977 = vmatpush1.bf16.msra.mxu0 %v459
      %978 = vmatprep.subr.bf16.mxu0 0
      %979 = vmatpush1.bf16.msra.mxu0 %v458
      %980 = vmatprep.subr.bf16.mxu0 0
      %981 = vmatpush1.bf16.msra.mxu0 %v457
      %982 = vmatprep.subr.bf16.mxu0 0
      %983 = vmatpush1.bf16.msra.mxu0 %v456
      %984 = vmatprep.subr.bf16.mxu0 0
      %985 = vmatpush1.bf16.msra.mxu0 %v455
      %986 = vmatprep.subr.bf16.mxu0 0
      %987 = vmatpush1.bf16.msra.mxu0 %v454
      %988 = vmatprep.subr.bf16.mxu0 0
      %989 = vmatpush1.bf16.msra.mxu0 %v453
      %990 = vmatprep.subr.bf16.mxu0 0
      %991 = vmatpush1.bf16.msra.mxu0 %v452
      %992 = vmatprep.subr.bf16.mxu0 0
      %993 = vmatpush2.bf16.msra.mxu0 0
      %994 = vmatprep.subr.bf16.mxu0 0
      %995 = vmatpush2.bf16.msra.mxu0 0
      %996 = vmatprep.subr.bf16.mxu0 0
      %997 = vmatpush2.bf16.msra.mxu0 0
      %998 = vmatprep.subr.bf16.mxu0 0
      %999 = vmatpush2.bf16.msra.mxu0 0
      %1000 = vmatprep.subr.bf16.mxu0 0
      %1001 = vmatpush2.bf16.msra.mxu0 0
      %1002 = vmatprep.subr.bf16.mxu0 0
      %1003 = vmatpush2.bf16.msra.mxu0 0
      %1004 = vmatprep.subr.bf16.mxu0 0
      %1005 = vmatpush2.bf16.msra.mxu0 0
      %1006 = vmatprep.subr.bf16.mxu0 0
      %1007 = vmatpush2.bf16.msra.mxu0 0
      %1008 = vmatprep.mubr.bf16.mxu0 0
      %1009 = vmatmul.mubr.bf16.gmra.mxu0 %v960
      %v1010 = vpop.f32.mrf.mxu0
      %v1011 = vadd.f32 %v418, %v1010
      %v1012 = vpop.f32.mrf.mxu0
      %v1013 = vpop.f32.mrf.mxu0
      %v1014 = vadd.f32 %v418, %v1013
      %v1015 = vpop.f32.mrf.mxu0
      %1016 = vmatprep.mubr.bf16.mxu0 0
      %1017 = vmatmul.mubr.bf16.gmra.mxu0 %v961
      %v1018 = vpop.f32.mrf.mxu0
      %v1019 = vadd.f32 %v418, %v1018
      %v1020 = vpop.f32.mrf.mxu0
      %v1021 = vpop.f32.mrf.mxu0
      %v1022 = vadd.f32 %v418, %v1021
      %v1023 = vpop.f32.mrf.mxu0
      %1024 = vmatprep.mubr.bf16.mxu0 0
      %1025 = vmatmul.mubr.bf16.gmra.mxu0 %v962
      %v1026 = vpop.f32.mrf.mxu0
      %v1027 = vadd.f32 %v418, %v1026
      %v1028 = vpop.f32.mrf.mxu0
      %v1029 = vpop.f32.mrf.mxu0
      %v1030 = vadd.f32 %v418, %v1029
      %v1031 = vpop.f32.mrf.mxu0
      %1032 = vmatprep.mubr.bf16.mxu0 0
      %1033 = vmatmul.mubr.bf16.gmra.mxu0 %v963
      %v1034 = vpop.f32.mrf.mxu0
      %v1035 = vadd.f32 %v418, %v1034
      %v1036 = vpop.f32.mrf.mxu0
      %v1037 = vpop.f32.mrf.mxu0
      %v1038 = vadd.f32 %v418, %v1037
      %v1039 = vpop.f32.mrf.mxu0
      %1040 = vmatprep.mubr.bf16.mxu0 0
      %1041 = vmatmul.mubr.bf16.gmra.mxu0 %v964
      %v1042 = vpop.f32.mrf.mxu0
      %v1043 = vadd.f32 %v418, %v1042
      %v1044 = vpop.f32.mrf.mxu0
      %v1045 = vpop.f32.mrf.mxu0
      %v1046 = vadd.f32 %v418, %v1045
      %v1047 = vpop.f32.mrf.mxu0
      %1048 = vmatprep.mubr.bf16.mxu0 0
      %1049 = vmatmul.mubr.bf16.gmra.mxu0 %v965
      %v1050 = vpop.f32.mrf.mxu0
      %v1051 = vadd.f32 %v418, %v1050
      %v1052 = vpop.f32.mrf.mxu0
      %v1053 = vpop.f32.mrf.mxu0
      %v1054 = vadd.f32 %v418, %v1053
      %v1055 = vpop.f32.mrf.mxu0
      %1056 = vmatprep.mubr.bf16.mxu0 0
      %1057 = vmatmul.mubr.bf16.gmra.mxu0 %v966
      %v1058 = vpop.f32.mrf.mxu0
      %v1059 = vadd.f32 %v418, %v1058
      %v1060 = vpop.f32.mrf.mxu0
      %v1061 = vpop.f32.mrf.mxu0
      %v1062 = vadd.f32 %v418, %v1061
      %v1063 = vpop.f32.mrf.mxu0
      %1064 = vmatprep.mubr.bf16.mxu0 0
      %1065 = vmatmul.mubr.bf16.gmra.mxu0 %v967
      %v1066 = vpop.f32.mrf.mxu0
      %v1067 = vadd.f32 %v418, %v1066
      %v1068 = vpop.f32.mrf.mxu0
      %v1069 = vpop.f32.mrf.mxu0
      %v1070 = vadd.f32 %v418, %v1069
      %v1071 = vpop.f32.mrf.mxu0
      %1072 = vmatprep.mubr.bf16.mxu0 0
      %1073 = vmatmul.mubr.bf16.gmra.mxu0 %v968
      %v1074 = vpop.f32.mrf.mxu0
      %v1075 = vadd.f32 %v418, %v1074
      %v1076 = vpop.f32.mrf.mxu0
      %v1077 = vpop.f32.mrf.mxu0
      %v1078 = vadd.f32 %v418, %v1077
      %v1079 = vpop.f32.mrf.mxu0
      %1080 = vmatprep.mubr.bf16.mxu0 0
      %1081 = vmatmul.mubr.bf16.gmra.mxu0 %v969
      %v1082 = vpop.f32.mrf.mxu0
      %v1083 = vadd.f32 %v418, %v1082
      %v1084 = vpop.f32.mrf.mxu0
      %v1085 = vpop.f32.mrf.mxu0
      %v1086 = vadd.f32 %v418, %v1085
      %v1087 = vpop.f32.mrf.mxu0
      %1088 = vmatprep.mubr.bf16.mxu0 0
      %1089 = vmatmul.mubr.bf16.gmra.mxu0 %v970
      %v1090 = vpop.f32.mrf.mxu0
      %v1091 = vadd.f32 %v418, %v1090
      %v1092 = vpop.f32.mrf.mxu0
      %v1093 = vpop.f32.mrf.mxu0
      %v1094 = vadd.f32 %v418, %v1093
      %v1095 = vpop.f32.mrf.mxu0
      %1096 = vmatprep.mubr.bf16.mxu0 0
      %1097 = vmatmul.mubr.bf16.gmra.mxu0 %v971
      %v1098 = vpop.f32.mrf.mxu0
      %v1099 = vadd.f32 %v418, %v1098
      %v1100 = vpop.f32.mrf.mxu0
      %v1101 = vpop.f32.mrf.mxu0
      %v1102 = vadd.f32 %v418, %v1101
      %v1103 = vpop.f32.mrf.mxu0
      %1104 = vmatprep.mubr.bf16.mxu0 0
      %1105 = vmatmul.mubr.bf16.gmra.mxu0 %v972
      %v1106 = vpop.f32.mrf.mxu0
      %v1107 = vadd.f32 %v418, %v1106
      %v1108 = vpop.f32.mrf.mxu0
      %v1109 = vpop.f32.mrf.mxu0
      %v1110 = vadd.f32 %v418, %v1109
      %v1111 = vpop.f32.mrf.mxu0
      %1112 = vmatprep.mubr.bf16.mxu0 0
      %1113 = vmatmul.mubr.bf16.gmra.mxu0 %v973
      %v1114 = vpop.f32.mrf.mxu0
      %v1115 = vadd.f32 %v418, %v1114
      %v1116 = vpop.f32.mrf.mxu0
      %v1117 = vpop.f32.mrf.mxu0
      %v1118 = vadd.f32 %v418, %v1117
      %v1119 = vpop.f32.mrf.mxu0
      %1120 = vmatprep.mubr.bf16.mxu0 0
      %1121 = vmatmul.mubr.bf16.gmra.mxu0 %v974
      %v1122 = vpop.f32.mrf.mxu0
      %v1123 = vadd.f32 %v418, %v1122
      %v1124 = vpop.f32.mrf.mxu0
      %v1125 = vpop.f32.mrf.mxu0
      %v1126 = vadd.f32 %v418, %v1125
      %v1127 = vpop.f32.mrf.mxu0
      %1128 = vmatprep.mubr.bf16.mxu0 0
      %1129 = vmatmul.mubr.bf16.gmra.mxu0 %v975
      %v1130 = vpop.f32.mrf.mxu0
      %v1131 = vadd.f32 %v418, %v1130
      %v1132 = vpop.f32.mrf.mxu0
      %v1133 = vpop.f32.mrf.mxu0
      %v1134 = vadd.f32 %v418, %v1133
      %v1135 = vpop.f32.mrf.mxu0
      %1136 = vdwg.mxu0
      %v1137 = vpack.c.bf16 %v1014, %v1011
      %v1138 = vpack.c.bf16 %v1022, %v1019
      %v1139 = vpack.c.bf16 %v1030, %v1027
      %v1140 = vpack.c.bf16 %v1038, %v1035
      %v1141 = vpack.c.bf16 %v1046, %v1043
      %v1142 = vpack.c.bf16 %v1054, %v1051
      %v1143 = vpack.c.bf16 %v1062, %v1059
      %v1144 = vpack.c.bf16 %v1070, %v1067
      %v1145 = vpack.c.bf16 %v1078, %v1075
      %v1146 = vpack.c.bf16 %v1086, %v1083
      %v1147 = vpack.c.bf16 %v1094, %v1091
      %v1148 = vpack.c.bf16 %v1102, %v1099
      %v1149 = vpack.c.bf16 %v1110, %v1107
      %v1150 = vpack.c.bf16 %v1118, %v1115
      %v1151 = vpack.c.bf16 %v1126, %v1123
      %v1152 = vpack.c.bf16 %v1134, %v1131
      %s1153 = sadd.f32 %s99, 0.01875
      %v1154 = vmul.f32 %v646, 0.0046875
      %v1155 = vmul.f32 %v647, 0.0046875
      %v1156 = vmul.f32 %v648, 0.0046875
      %v1157 = vmul.f32 %v649, 0.0046875
      %v1158 = vmul.f32 %v650, 0.0046875
      %v1159 = vmul.f32 %v651, 0.0046875
      %v1160 = vmul.f32 %v652, 0.0046875
      %v1161 = vmul.f32 %v653, 0.0046875
      %v1162 = vmul.f32 %v654, 0.0046875
      %v1163 = vmul.f32 %v655, 0.0046875
      %v1164 = vmul.f32 %v656, 0.0046875
      %v1165 = vmul.f32 %v657, 0.0046875
      %v1166 = vmul.f32 %v658, 0.0046875
      %v1167 = vmul.f32 %v659, 0.0046875
      %v1168 = vmul.f32 %v660, 0.0046875
      %v1169 = vmul.f32 %v661, 0.0046875
      %v1170 = vmul.f32 %v662, 0.0046875
      %v1171 = vmul.f32 %v663, 0.0046875
      %v1172 = vmul.f32 %v664, 0.0046875
      %v1173 = vmul.f32 %v665, 0.0046875
      %v1174 = vmul.f32 %v666, 0.0046875
      %v1175 = vmul.f32 %v667, 0.0046875
      %v1176 = vmul.f32 %v668, 0.0046875
      %v1177 = vmul.f32 %v669, 0.0046875
      %v1178 = vmul.f32 %v670, 0.0046875
      %v1179 = vmul.f32 %v671, 0.0046875
      %v1180 = vmul.f32 %v672, 0.0046875
      %v1181 = vmul.f32 %v673, 0.0046875
      %v1182 = vmul.f32 %v674, 0.0046875
      %v1183 = vmul.f32 %v675, 0.0046875
      %v1184 = vmul.f32 %v676, 0.0046875
      %v1185 = vmul.f32 %v677, 0.0046875
      %v1186 = vunpack.c.l.bf16 %v1137
      %v1187 = vunpack.c.h.bf16 %v1137
      %v1188 = vunpack.c.l.bf16 %v1138
      %v1189 = vunpack.c.h.bf16 %v1138
      %v1190 = vunpack.c.l.bf16 %v1139
      %v1191 = vunpack.c.h.bf16 %v1139
      %v1192 = vunpack.c.l.bf16 %v1140
      %v1193 = vunpack.c.h.bf16 %v1140
      %v1194 = vunpack.c.l.bf16 %v1141
      %v1195 = vunpack.c.h.bf16 %v1141
      %v1196 = vunpack.c.l.bf16 %v1142
      %v1197 = vunpack.c.h.bf16 %v1142
      %v1198 = vunpack.c.l.bf16 %v1143
      %v1199 = vunpack.c.h.bf16 %v1143
      %v1200 = vunpack.c.l.bf16 %v1144
      %v1201 = vunpack.c.h.bf16 %v1144
      %v1202 = vunpack.c.l.bf16 %v1145
      %v1203 = vunpack.c.h.bf16 %v1145
      %v1204 = vunpack.c.l.bf16 %v1146
      %v1205 = vunpack.c.h.bf16 %v1146
      %v1206 = vunpack.c.l.bf16 %v1147
      %v1207 = vunpack.c.h.bf16 %v1147
      %v1208 = vunpack.c.l.bf16 %v1148
      %v1209 = vunpack.c.h.bf16 %v1148
      %v1210 = vunpack.c.l.bf16 %v1149
      %v1211 = vunpack.c.h.bf16 %v1149
      %v1212 = vunpack.c.l.bf16 %v1150
      %v1213 = vunpack.c.h.bf16 %v1150
      %v1214 = vunpack.c.l.bf16 %v1151
      %v1215 = vunpack.c.h.bf16 %v1151
      %v1216 = vunpack.c.l.bf16 %v1152
      %v1217 = vunpack.c.h.bf16 %v1152
      %v1218 = vmul.f32 %v1186, 0.0140625
      %v1219 = vmul.f32 %v1187, 0.0140625
      %v1220 = vmul.f32 %v1188, 0.0140625
      %v1221 = vmul.f32 %v1189, 0.0140625
      %v1222 = vmul.f32 %v1190, 0.0140625
      %v1223 = vmul.f32 %v1191, 0.0140625
      %v1224 = vmul.f32 %v1192, 0.0140625
      %v1225 = vmul.f32 %v1193, 0.0140625
      %v1226 = vmul.f32 %v1194, 0.0140625
      %v1227 = vmul.f32 %v1195, 0.0140625
      %v1228 = vmul.f32 %v1196, 0.0140625
      %v1229 = vmul.f32 %v1197, 0.0140625
      %v1230 = vmul.f32 %v1198, 0.0140625
      %v1231 = vmul.f32 %v1199, 0.0140625
      %v1232 = vmul.f32 %v1200, 0.0140625
      %v1233 = vmul.f32 %v1201, 0.0140625
      %v1234 = vmul.f32 %v1202, 0.0140625
      %v1235 = vmul.f32 %v1203, 0.0140625
      %v1236 = vmul.f32 %v1204, 0.0140625
      %v1237 = vmul.f32 %v1205, 0.0140625
      %v1238 = vmul.f32 %v1206, 0.0140625
      %v1239 = vmul.f32 %v1207, 0.0140625
      %v1240 = vmul.f32 %v1208, 0.0140625
      %v1241 = vmul.f32 %v1209, 0.0140625
      %v1242 = vmul.f32 %v1210, 0.0140625
      %v1243 = vmul.f32 %v1211, 0.0140625
      %v1244 = vmul.f32 %v1212, 0.0140625
      %v1245 = vmul.f32 %v1213, 0.0140625
      %v1246 = vmul.f32 %v1214, 0.0140625
      %v1247 = vmul.f32 %v1215, 0.0140625
      %v1248 = vmul.f32 %v1216, 0.0140625
      %v1249 = vmul.f32 %v1217, 0.0140625
      %v1250 = vadd.f32 %v1154, %v1218
      %v1251 = vadd.f32 %v1155, %v1219
      %v1252 = vadd.f32 %v1156, %v1220
      %v1253 = vadd.f32 %v1157, %v1221
      %v1254 = vadd.f32 %v1158, %v1222
      %v1255 = vadd.f32 %v1159, %v1223
      %v1256 = vadd.f32 %v1160, %v1224
      %v1257 = vadd.f32 %v1161, %v1225
      %v1258 = vadd.f32 %v1162, %v1226
      %v1259 = vadd.f32 %v1163, %v1227
      %v1260 = vadd.f32 %v1164, %v1228
      %v1261 = vadd.f32 %v1165, %v1229
      %v1262 = vadd.f32 %v1166, %v1230
      %v1263 = vadd.f32 %v1167, %v1231
      %v1264 = vadd.f32 %v1168, %v1232
      %v1265 = vadd.f32 %v1169, %v1233
      %v1266 = vadd.f32 %v1170, %v1234
      %v1267 = vadd.f32 %v1171, %v1235
      %v1268 = vadd.f32 %v1172, %v1236
      %v1269 = vadd.f32 %v1173, %v1237
      %v1270 = vadd.f32 %v1174, %v1238
      %v1271 = vadd.f32 %v1175, %v1239
      %v1272 = vadd.f32 %v1176, %v1240
      %v1273 = vadd.f32 %v1177, %v1241
      %v1274 = vadd.f32 %v1178, %v1242
      %v1275 = vadd.f32 %v1179, %v1243
      %v1276 = vadd.f32 %v1180, %v1244
      %v1277 = vadd.f32 %v1181, %v1245
      %v1278 = vadd.f32 %v1182, %v1246
      %v1279 = vadd.f32 %v1183, %v1247
      %v1280 = vadd.f32 %v1184, %v1248
      %v1281 = vadd.f32 %v1185, %v1249
      %v1282 = vadd.f32 %v66, %v1250
      %v1283 = vadd.f32 %v67, %v1251
      %v1284 = vadd.f32 %v68, %v1252
      %v1285 = vadd.f32 %v69, %v1253
      %v1286 = vadd.f32 %v70, %v1254
      %v1287 = vadd.f32 %v71, %v1255
      %v1288 = vadd.f32 %v72, %v1256
      %v1289 = vadd.f32 %v73, %v1257
      %v1290 = vadd.f32 %v74, %v1258
      %v1291 = vadd.f32 %v75, %v1259
      %v1292 = vadd.f32 %v76, %v1260
      %v1293 = vadd.f32 %v77, %v1261
      %v1294 = vadd.f32 %v78, %v1262
      %v1295 = vadd.f32 %v79, %v1263
      %v1296 = vadd.f32 %v80, %v1264
      %v1297 = vadd.f32 %v81, %v1265
      %v1298 = vadd.f32 %v82, %v1266
      %v1299 = vadd.f32 %v83, %v1267
      %v1300 = vadd.f32 %v84, %v1268
      %v1301 = vadd.f32 %v85, %v1269
      %v1302 = vadd.f32 %v86, %v1270
      %v1303 = vadd.f32 %v87, %v1271
      %v1304 = vadd.f32 %v88, %v1272
      %v1305 = vadd.f32 %v89, %v1273
      %v1306 = vadd.f32 %v90, %v1274
      %v1307 = vadd.f32 %v91, %v1275
      %v1308 = vadd.f32 %v92, %v1276
      %v1309 = vadd.f32 %v93, %v1277
      %v1310 = vadd.f32 %v94, %v1278
      %v1311 = vadd.f32 %v95, %v1279
      %v1312 = vadd.f32 %v96, %v1280
      %v1313 = vadd.f32 %v97, %v1281
      %v1314 = vstv %s1153
      %v1315 = vmul.f32 %v1314, %v26
      %v1316 = vadd.f32 %v25, %v1315
      %v1317 = vpack.c.bf16 %v1283, %v1282
      %v1318 = vpack.c.bf16 %v1285, %v1284
      %v1319 = vpack.c.bf16 %v1287, %v1286
      %v1320 = vpack.c.bf16 %v1289, %v1288
      %v1321 = vpack.c.bf16 %v1291, %v1290
      %v1322 = vpack.c.bf16 %v1293, %v1292
      %v1323 = vpack.c.bf16 %v1295, %v1294
      %v1324 = vpack.c.bf16 %v1297, %v1296
      %v1325 = vpack.c.bf16 %v1299, %v1298
      %v1326 = vpack.c.bf16 %v1301, %v1300
      %v1327 = vpack.c.bf16 %v1303, %v1302
      %v1328 = vpack.c.bf16 %v1305, %v1304
      %v1329 = vpack.c.bf16 %v1307, %v1306
      %v1330 = vpack.c.bf16 %v1309, %v1308
      %v1331 = vpack.c.bf16 %v1311, %v1310
      %v1332 = vpack.c.bf16 %v1313, %v1312
      %v1334 = vlaneseq
      %v1335 = vshrl.u32 %v1334, 7
      %v1336 = vsub.s32 0, %v1335
      %v1337 = vrot.slane %v1316, %v1336
      %1339 = vmatprep.subr.bf16.mxu0 0
      %1340 = vmatpush1.bf16.msra.mxu0 %v196
      %1341 = vmatprep.subr.bf16.mxu0 0
      %1342 = vmatpush1.bf16.msra.mxu0 %v195
      %1343 = vmatprep.subr.bf16.mxu0 0
      %1344 = vmatpush1.bf16.msra.mxu0 %v194
      %1345 = vmatprep.subr.bf16.mxu0 0
      %1346 = vmatpush1.bf16.msra.mxu0 %v193
      %1347 = vmatprep.subr.bf16.mxu0 0
      %1348 = vmatpush1.bf16.msra.mxu0 %v192
      %1349 = vmatprep.subr.bf16.mxu0 0
      %1350 = vmatpush1.bf16.msra.mxu0 %v191
      %1351 = vmatprep.subr.bf16.mxu0 0
      %1352 = vmatpush1.bf16.msra.mxu0 %v190
      %1353 = vmatprep.subr.bf16.mxu0 0
      %1354 = vmatpush1.bf16.msra.mxu0 %v189
      %1355 = vmatprep.subr.bf16.mxu0 0
      %1356 = vmatpush2.bf16.msra.mxu0 0
      %1357 = vmatprep.subr.bf16.mxu0 0
      %1358 = vmatpush2.bf16.msra.mxu0 0
      %1359 = vmatprep.subr.bf16.mxu0 0
      %1360 = vmatpush2.bf16.msra.mxu0 0
      %1361 = vmatprep.subr.bf16.mxu0 0
      %1362 = vmatpush2.bf16.msra.mxu0 0
      %1363 = vmatprep.subr.bf16.mxu0 0
      %1364 = vmatpush2.bf16.msra.mxu0 0
      %1365 = vmatprep.subr.bf16.mxu0 0
      %1366 = vmatpush2.bf16.msra.mxu0 0
      %1367 = vmatprep.subr.bf16.mxu0 0
      %1368 = vmatpush2.bf16.msra.mxu0 0
      %1369 = vmatprep.subr.bf16.mxu0 0
      %1370 = vmatpush2.bf16.msra.mxu0 0
      %1371 = vmatprep.mubr.bf16.mxu0 0
      %1372 = vmatmul.mubr.bf16.gmra.mxu0 %v1317
      %v1373 = vpop.f32.mrf.mxu0
      %v1374 = vadd.f32 %v1337, %v1373
      %v1375 = vpop.f32.mrf.mxu0
      %v1376 = vpop.f32.mrf.mxu0
      %v1377 = vadd.f32 %v1337, %v1376
      %v1378 = vpop.f32.mrf.mxu0
      %1379 = vmatprep.mubr.bf16.mxu0 0
      %1380 = vmatmul.mubr.bf16.gmra.mxu0 %v1318
      %v1381 = vpop.f32.mrf.mxu0
      %v1382 = vadd.f32 %v1337, %v1381
      %v1383 = vpop.f32.mrf.mxu0
      %v1384 = vpop.f32.mrf.mxu0
      %v1385 = vadd.f32 %v1337, %v1384
      %v1386 = vpop.f32.mrf.mxu0
      %1387 = vmatprep.mubr.bf16.mxu0 0
      %1388 = vmatmul.mubr.bf16.gmra.mxu0 %v1319
      %v1389 = vpop.f32.mrf.mxu0
      %v1390 = vadd.f32 %v1337, %v1389
      %v1391 = vpop.f32.mrf.mxu0
      %v1392 = vpop.f32.mrf.mxu0
      %v1393 = vadd.f32 %v1337, %v1392
      %v1394 = vpop.f32.mrf.mxu0
      %1395 = vmatprep.mubr.bf16.mxu0 0
      %1396 = vmatmul.mubr.bf16.gmra.mxu0 %v1320
      %v1397 = vpop.f32.mrf.mxu0
      %v1398 = vadd.f32 %v1337, %v1397
      %v1399 = vpop.f32.mrf.mxu0
      %v1400 = vpop.f32.mrf.mxu0
      %v1401 = vadd.f32 %v1337, %v1400
      %v1402 = vpop.f32.mrf.mxu0
      %1403 = vmatprep.mubr.bf16.mxu0 0
      %1404 = vmatmul.mubr.bf16.gmra.mxu0 %v1321
      %v1405 = vpop.f32.mrf.mxu0
      %v1406 = vadd.f32 %v1337, %v1405
      %v1407 = vpop.f32.mrf.mxu0
      %v1408 = vpop.f32.mrf.mxu0
      %v1409 = vadd.f32 %v1337, %v1408
      %v1410 = vpop.f32.mrf.mxu0
      %1411 = vmatprep.mubr.bf16.mxu0 0
      %1412 = vmatmul.mubr.bf16.gmra.mxu0 %v1322
      %v1413 = vpop.f32.mrf.mxu0
      %v1414 = vadd.f32 %v1337, %v1413
      %v1415 = vpop.f32.mrf.mxu0
      %v1416 = vpop.f32.mrf.mxu0
      %v1417 = vadd.f32 %v1337, %v1416
      %v1418 = vpop.f32.mrf.mxu0
      %1419 = vmatprep.mubr.bf16.mxu0 0
      %1420 = vmatmul.mubr.bf16.gmra.mxu0 %v1323
      %v1421 = vpop.f32.mrf.mxu0
      %v1422 = vadd.f32 %v1337, %v1421
      %v1423 = vpop.f32.mrf.mxu0
      %v1424 = vpop.f32.mrf.mxu0
      %v1425 = vadd.f32 %v1337, %v1424
      %v1426 = vpop.f32.mrf.mxu0
      %1427 = vmatprep.mubr.bf16.mxu0 0
      %1428 = vmatmul.mubr.bf16.gmra.mxu0 %v1324
      %v1429 = vpop.f32.mrf.mxu0
      %v1430 = vadd.f32 %v1337, %v1429
      %v1431 = vpop.f32.mrf.mxu0
      %v1432 = vpop.f32.mrf.mxu0
      %v1433 = vadd.f32 %v1337, %v1432
      %v1434 = vpop.f32.mrf.mxu0
      %1435 = vmatprep.mubr.bf16.mxu0 0
      %1436 = vmatmul.mubr.bf16.gmra.mxu0 %v1325
      %v1437 = vpop.f32.mrf.mxu0
      %v1438 = vadd.f32 %v1337, %v1437
      %v1439 = vpop.f32.mrf.mxu0
      %v1440 = vpop.f32.mrf.mxu0
      %v1441 = vadd.f32 %v1337, %v1440
      %v1442 = vpop.f32.mrf.mxu0
      %1443 = vmatprep.mubr.bf16.mxu0 0
      %1444 = vmatmul.mubr.bf16.gmra.mxu0 %v1326
      %v1445 = vpop.f32.mrf.mxu0
      %v1446 = vadd.f32 %v1337, %v1445
      %v1447 = vpop.f32.mrf.mxu0
      %v1448 = vpop.f32.mrf.mxu0
      %v1449 = vadd.f32 %v1337, %v1448
      %v1450 = vpop.f32.mrf.mxu0
      %1451 = vmatprep.mubr.bf16.mxu0 0
      %1452 = vmatmul.mubr.bf16.gmra.mxu0 %v1327
      %v1453 = vpop.f32.mrf.mxu0
      %v1454 = vadd.f32 %v1337, %v1453
      %v1455 = vpop.f32.mrf.mxu0
      %v1456 = vpop.f32.mrf.mxu0
      %v1457 = vadd.f32 %v1337, %v1456
      %v1458 = vpop.f32.mrf.mxu0
      %1459 = vmatprep.mubr.bf16.mxu0 0
      %1460 = vmatmul.mubr.bf16.gmra.mxu0 %v1328
      %v1461 = vpop.f32.mrf.mxu0
      %v1462 = vadd.f32 %v1337, %v1461
      %v1463 = vpop.f32.mrf.mxu0
      %v1464 = vpop.f32.mrf.mxu0
      %v1465 = vadd.f32 %v1337, %v1464
      %v1466 = vpop.f32.mrf.mxu0
      %1467 = vmatprep.mubr.bf16.mxu0 0
      %1468 = vmatmul.mubr.bf16.gmra.mxu0 %v1329
      %v1469 = vpop.f32.mrf.mxu0
      %v1470 = vadd.f32 %v1337, %v1469
      %v1471 = vpop.f32.mrf.mxu0
      %v1472 = vpop.f32.mrf.mxu0
      %v1473 = vadd.f32 %v1337, %v1472
      %v1474 = vpop.f32.mrf.mxu0
      %1475 = vmatprep.mubr.bf16.mxu0 0
      %1476 = vmatmul.mubr.bf16.gmra.mxu0 %v1330
      %v1477 = vpop.f32.mrf.mxu0
      %v1478 = vadd.f32 %v1337, %v1477
      %v1479 = vpop.f32.mrf.mxu0
      %v1480 = vpop.f32.mrf.mxu0
      %v1481 = vadd.f32 %v1337, %v1480
      %v1482 = vpop.f32.mrf.mxu0
      %1483 = vmatprep.mubr.bf16.mxu0 0
      %1484 = vmatmul.mubr.bf16.gmra.mxu0 %v1331
      %v1485 = vpop.f32.mrf.mxu0
      %v1486 = vadd.f32 %v1337, %v1485
      %v1487 = vpop.f32.mrf.mxu0
      %v1488 = vpop.f32.mrf.mxu0
      %v1489 = vadd.f32 %v1337, %v1488
      %v1490 = vpop.f32.mrf.mxu0
      %1491 = vmatprep.mubr.bf16.mxu0 0
      %1492 = vmatmul.mubr.bf16.gmra.mxu0 %v1332
      %v1493 = vpop.f32.mrf.mxu0
      %v1494 = vadd.f32 %v1337, %v1493
      %v1495 = vpop.f32.mrf.mxu0
      %v1496 = vpop.f32.mrf.mxu0
      %v1497 = vadd.f32 %v1337, %v1496
      %v1498 = vpop.f32.mrf.mxu0
      %1499 = vdwg.mxu0
      %v1500 = vtanh.pop %v1374
      %v1501 = vtanh.pop %v1377
      %v1502 = vtanh.pop %v1382
      %v1503 = vtanh.pop %v1385
      %v1504 = vtanh.pop %v1390
      %v1505 = vtanh.pop %v1393
      %v1506 = vtanh.pop %v1398
      %v1507 = vtanh.pop %v1401
      %v1508 = vtanh.pop %v1406
      %v1509 = vtanh.pop %v1409
      %v1510 = vtanh.pop %v1414
      %v1511 = vtanh.pop %v1417
      %v1512 = vtanh.pop %v1422
      %v1513 = vtanh.pop %v1425
      %v1514 = vtanh.pop %v1430
      %v1515 = vtanh.pop %v1433
      %v1516 = vtanh.pop %v1438
      %v1517 = vtanh.pop %v1441
      %v1518 = vtanh.pop %v1446
      %v1519 = vtanh.pop %v1449
      %v1520 = vtanh.pop %v1454
      %v1521 = vtanh.pop %v1457
      %v1522 = vtanh.pop %v1462
      %v1523 = vtanh.pop %v1465
      %v1524 = vtanh.pop %v1470
      %v1525 = vtanh.pop %v1473
      %v1526 = vtanh.pop %v1478
      %v1527 = vtanh.pop %v1481
      %v1528 = vtanh.pop %v1486
      %v1529 = vtanh.pop %v1489
      %v1530 = vtanh.pop %v1494
      %v1531 = vtanh.pop %v1497
      %v1532 = vpack.c.bf16 %v1501, %v1500
      %v1533 = vpack.c.bf16 %v1503, %v1502
      %v1534 = vpack.c.bf16 %v1505, %v1504
      %v1535 = vpack.c.bf16 %v1507, %v1506
      %v1536 = vpack.c.bf16 %v1509, %v1508
      %v1537 = vpack.c.bf16 %v1511, %v1510
      %v1538 = vpack.c.bf16 %v1513, %v1512
      %v1539 = vpack.c.bf16 %v1515, %v1514
      %v1540 = vpack.c.bf16 %v1517, %v1516
      %v1541 = vpack.c.bf16 %v1519, %v1518
      %v1542 = vpack.c.bf16 %v1521, %v1520
      %v1543 = vpack.c.bf16 %v1523, %v1522
      %v1544 = vpack.c.bf16 %v1525, %v1524
      %v1545 = vpack.c.bf16 %v1527, %v1526
      %v1546 = vpack.c.bf16 %v1529, %v1528
      %v1547 = vpack.c.bf16 %v1531, %v1530
      %1548 = vmatprep.subr.bf16.mxu0 0
      %1549 = vmatpush1.bf16.msra.mxu0 %v459
      %1550 = vmatprep.subr.bf16.mxu0 0
      %1551 = vmatpush1.bf16.msra.mxu0 %v458
      %1552 = vmatprep.subr.bf16.mxu0 0
      %1553 = vmatpush1.bf16.msra.mxu0 %v457
      %1554 = vmatprep.subr.bf16.mxu0 0
      %1555 = vmatpush1.bf16.msra.mxu0 %v456
      %1556 = vmatprep.subr.bf16.mxu0 0
      %1557 = vmatpush1.bf16.msra.mxu0 %v455
      %1558 = vmatprep.subr.bf16.mxu0 0
      %1559 = vmatpush1.bf16.msra.mxu0 %v454
      %1560 = vmatprep.subr.bf16.mxu0 0
      %1561 = vmatpush1.bf16.msra.mxu0 %v453
      %1562 = vmatprep.subr.bf16.mxu0 0
      %1563 = vmatpush1.bf16.msra.mxu0 %v452
      %1564 = vmatprep.subr.bf16.mxu0 0
      %1565 = vmatpush2.bf16.msra.mxu0 0
      %1566 = vmatprep.subr.bf16.mxu0 0
      %1567 = vmatpush2.bf16.msra.mxu0 0
      %1568 = vmatprep.subr.bf16.mxu0 0
      %1569 = vmatpush2.bf16.msra.mxu0 0
      %1570 = vmatprep.subr.bf16.mxu0 0
      %1571 = vmatpush2.bf16.msra.mxu0 0
      %1572 = vmatprep.subr.bf16.mxu0 0
      %1573 = vmatpush2.bf16.msra.mxu0 0
      %1574 = vmatprep.subr.bf16.mxu0 0
      %1575 = vmatpush2.bf16.msra.mxu0 0
      %1576 = vmatprep.subr.bf16.mxu0 0
      %1577 = vmatpush2.bf16.msra.mxu0 0
      %1578 = vmatprep.subr.bf16.mxu0 0
      %1579 = vmatpush2.bf16.msra.mxu0 0
      %1580 = vmatprep.mubr.bf16.mxu0 0
      %1581 = vmatmul.mubr.bf16.gmra.mxu0 %v1532
      %v1582 = vpop.f32.mrf.mxu0
      %v1583 = vadd.f32 %v418, %v1582
      %v1584 = vpop.f32.mrf.mxu0
      %v1585 = vpop.f32.mrf.mxu0
      %v1586 = vadd.f32 %v418, %v1585
      %v1587 = vpop.f32.mrf.mxu0
      %1588 = vmatprep.mubr.bf16.mxu0 0
      %1589 = vmatmul.mubr.bf16.gmra.mxu0 %v1533
      %v1590 = vpop.f32.mrf.mxu0
      %v1591 = vadd.f32 %v418, %v1590
      %v1592 = vpop.f32.mrf.mxu0
      %v1593 = vpop.f32.mrf.mxu0
      %v1594 = vadd.f32 %v418, %v1593
      %v1595 = vpop.f32.mrf.mxu0
      %1596 = vmatprep.mubr.bf16.mxu0 0
      %1597 = vmatmul.mubr.bf16.gmra.mxu0 %v1534
      %v1598 = vpop.f32.mrf.mxu0
      %v1599 = vadd.f32 %v418, %v1598
      %v1600 = vpop.f32.mrf.mxu0
      %v1601 = vpop.f32.mrf.mxu0
      %v1602 = vadd.f32 %v418, %v1601
      %v1603 = vpop.f32.mrf.mxu0
      %1604 = vmatprep.mubr.bf16.mxu0 0
      %1605 = vmatmul.mubr.bf16.gmra.mxu0 %v1535
      %v1606 = vpop.f32.mrf.mxu0
      %v1607 = vadd.f32 %v418, %v1606
      %v1608 = vpop.f32.mrf.mxu0
      %v1609 = vpop.f32.mrf.mxu0
      %v1610 = vadd.f32 %v418, %v1609
      %v1611 = vpop.f32.mrf.mxu0
      %1612 = vmatprep.mubr.bf16.mxu0 0
      %1613 = vmatmul.mubr.bf16.gmra.mxu0 %v1536
      %v1614 = vpop.f32.mrf.mxu0
      %v1615 = vadd.f32 %v418, %v1614
      %v1616 = vpop.f32.mrf.mxu0
      %v1617 = vpop.f32.mrf.mxu0
      %v1618 = vadd.f32 %v418, %v1617
      %v1619 = vpop.f32.mrf.mxu0
      %1620 = vmatprep.mubr.bf16.mxu0 0
      %1621 = vmatmul.mubr.bf16.gmra.mxu0 %v1537
      %v1622 = vpop.f32.mrf.mxu0
      %v1623 = vadd.f32 %v418, %v1622
      %v1624 = vpop.f32.mrf.mxu0
      %v1625 = vpop.f32.mrf.mxu0
      %v1626 = vadd.f32 %v418, %v1625
      %v1627 = vpop.f32.mrf.mxu0
      %1628 = vmatprep.mubr.bf16.mxu0 0
      %1629 = vmatmul.mubr.bf16.gmra.mxu0 %v1538
      %v1630 = vpop.f32.mrf.mxu0
      %v1631 = vadd.f32 %v418, %v1630
      %v1632 = vpop.f32.mrf.mxu0
      %v1633 = vpop.f32.mrf.mxu0
      %v1634 = vadd.f32 %v418, %v1633
      %v1635 = vpop.f32.mrf.mxu0
      %1636 = vmatprep.mubr.bf16.mxu0 0
      %1637 = vmatmul.mubr.bf16.gmra.mxu0 %v1539
      %v1638 = vpop.f32.mrf.mxu0
      %v1639 = vadd.f32 %v418, %v1638
      %v1640 = vpop.f32.mrf.mxu0
      %v1641 = vpop.f32.mrf.mxu0
      %v1642 = vadd.f32 %v418, %v1641
      %v1643 = vpop.f32.mrf.mxu0
      %1644 = vmatprep.mubr.bf16.mxu0 0
      %1645 = vmatmul.mubr.bf16.gmra.mxu0 %v1540
      %v1646 = vpop.f32.mrf.mxu0
      %v1647 = vadd.f32 %v418, %v1646
      %v1648 = vpop.f32.mrf.mxu0
      %v1649 = vpop.f32.mrf.mxu0
      %v1650 = vadd.f32 %v418, %v1649
      %v1651 = vpop.f32.mrf.mxu0
      %1652 = vmatprep.mubr.bf16.mxu0 0
      %1653 = vmatmul.mubr.bf16.gmra.mxu0 %v1541
      %v1654 = vpop.f32.mrf.mxu0
      %v1655 = vadd.f32 %v418, %v1654
      %v1656 = vpop.f32.mrf.mxu0
      %v1657 = vpop.f32.mrf.mxu0
      %v1658 = vadd.f32 %v418, %v1657
      %v1659 = vpop.f32.mrf.mxu0
      %1660 = vmatprep.mubr.bf16.mxu0 0
      %1661 = vmatmul.mubr.bf16.gmra.mxu0 %v1542
      %v1662 = vpop.f32.mrf.mxu0
      %v1663 = vadd.f32 %v418, %v1662
      %v1664 = vpop.f32.mrf.mxu0
      %v1665 = vpop.f32.mrf.mxu0
      %v1666 = vadd.f32 %v418, %v1665
      %v1667 = vpop.f32.mrf.mxu0
      %1668 = vmatprep.mubr.bf16.mxu0 0
      %1669 = vmatmul.mubr.bf16.gmra.mxu0 %v1543
      %v1670 = vpop.f32.mrf.mxu0
      %v1671 = vadd.f32 %v418, %v1670
      %v1672 = vpop.f32.mrf.mxu0
      %v1673 = vpop.f32.mrf.mxu0
      %v1674 = vadd.f32 %v418, %v1673
      %v1675 = vpop.f32.mrf.mxu0
      %1676 = vmatprep.mubr.bf16.mxu0 0
      %1677 = vmatmul.mubr.bf16.gmra.mxu0 %v1544
      %v1678 = vpop.f32.mrf.mxu0
      %v1679 = vadd.f32 %v418, %v1678
      %v1680 = vpop.f32.mrf.mxu0
      %v1681 = vpop.f32.mrf.mxu0
      %v1682 = vadd.f32 %v418, %v1681
      %v1683 = vpop.f32.mrf.mxu0
      %1684 = vmatprep.mubr.bf16.mxu0 0
      %1685 = vmatmul.mubr.bf16.gmra.mxu0 %v1545
      %v1686 = vpop.f32.mrf.mxu0
      %v1687 = vadd.f32 %v418, %v1686
      %v1688 = vpop.f32.mrf.mxu0
      %v1689 = vpop.f32.mrf.mxu0
      %v1690 = vadd.f32 %v418, %v1689
      %v1691 = vpop.f32.mrf.mxu0
      %1692 = vmatprep.mubr.bf16.mxu0 0
      %1693 = vmatmul.mubr.bf16.gmra.mxu0 %v1546
      %v1694 = vpop.f32.mrf.mxu0
      %v1695 = vadd.f32 %v418, %v1694
      %v1696 = vpop.f32.mrf.mxu0
      %v1697 = vpop.f32.mrf.mxu0
      %v1698 = vadd.f32 %v418, %v1697
      %v1699 = vpop.f32.mrf.mxu0
      %1700 = vmatprep.mubr.bf16.mxu0 0
      %1701 = vmatmul.mubr.bf16.gmra.mxu0 %v1547
      %v1702 = vpop.f32.mrf.mxu0
      %v1703 = vadd.f32 %v418, %v1702
      %v1704 = vpop.f32.mrf.mxu0
      %v1705 = vpop.f32.mrf.mxu0
      %v1706 = vadd.f32 %v418, %v1705
      %v1707 = vpop.f32.mrf.mxu0
      %1708 = vdwg.mxu0
      %v1709 = vpack.c.bf16 %v1586, %v1583
      %v1710 = vpack.c.bf16 %v1594, %v1591
      %v1711 = vpack.c.bf16 %v1602, %v1599
      %v1712 = vpack.c.bf16 %v1610, %v1607
      %v1713 = vpack.c.bf16 %v1618, %v1615
      %v1714 = vpack.c.bf16 %v1626, %v1623
      %v1715 = vpack.c.bf16 %v1634, %v1631
      %v1716 = vpack.c.bf16 %v1642, %v1639
      %v1717 = vpack.c.bf16 %v1650, %v1647
      %v1718 = vpack.c.bf16 %v1658, %v1655
      %v1719 = vpack.c.bf16 %v1666, %v1663
      %v1720 = vpack.c.bf16 %v1674, %v1671
      %v1721 = vpack.c.bf16 %v1682, %v1679
      %v1722 = vpack.c.bf16 %v1690, %v1687
      %v1723 = vpack.c.bf16 %v1698, %v1695
      %v1724 = vpack.c.bf16 %v1706, %v1703
      %s1725 = sadd.f32 %s99, 0.05
      %v1726 = vmul.f32 %v646, 0.06111111
      %v1727 = vmul.f32 %v647, 0.06111111
      %v1728 = vmul.f32 %v648, 0.06111111
      %v1729 = vmul.f32 %v649, 0.06111111
      %v1730 = vmul.f32 %v650, 0.06111111
      %v1731 = vmul.f32 %v651, 0.06111111
      %v1732 = vmul.f32 %v652, 0.06111111
      %v1733 = vmul.f32 %v653, 0.06111111
      %v1734 = vmul.f32 %v654, 0.06111111
      %v1735 = vmul.f32 %v655, 0.06111111
      %v1736 = vmul.f32 %v656, 0.06111111
      %v1737 = vmul.f32 %v657, 0.06111111
      %v1738 = vmul.f32 %v658, 0.06111111
      %v1739 = vmul.f32 %v659, 0.06111111
      %v1740 = vmul.f32 %v660, 0.06111111
      %v1741 = vmul.f32 %v661, 0.06111111
      %v1742 = vmul.f32 %v662, 0.06111111
      %v1743 = vmul.f32 %v663, 0.06111111
      %v1744 = vmul.f32 %v664, 0.06111111
      %v1745 = vmul.f32 %v665, 0.06111111
      %v1746 = vmul.f32 %v666, 0.06111111
      %v1747 = vmul.f32 %v667, 0.06111111
      %v1748 = vmul.f32 %v668, 0.06111111
      %v1749 = vmul.f32 %v669, 0.06111111
      %v1750 = vmul.f32 %v670, 0.06111111
      %v1751 = vmul.f32 %v671, 0.06111111
      %v1752 = vmul.f32 %v672, 0.06111111
      %v1753 = vmul.f32 %v673, 0.06111111
      %v1754 = vmul.f32 %v674, 0.06111111
      %v1755 = vmul.f32 %v675, 0.06111111
      %v1756 = vmul.f32 %v676, 0.06111111
      %v1757 = vmul.f32 %v677, 0.06111111
      %v1758 = vmul.f32 %v1186, -0.23333333
      %v1759 = vmul.f32 %v1187, -0.23333333
      %v1760 = vmul.f32 %v1188, -0.23333333
      %v1761 = vmul.f32 %v1189, -0.23333333
      %v1762 = vmul.f32 %v1190, -0.23333333
      %v1763 = vmul.f32 %v1191, -0.23333333
      %v1764 = vmul.f32 %v1192, -0.23333333
      %v1765 = vmul.f32 %v1193, -0.23333333
      %v1766 = vmul.f32 %v1194, -0.23333333
      %v1767 = vmul.f32 %v1195, -0.23333333
      %v1768 = vmul.f32 %v1196, -0.23333333
      %v1769 = vmul.f32 %v1197, -0.23333333
      %v1770 = vmul.f32 %v1198, -0.23333333
      %v1771 = vmul.f32 %v1199, -0.23333333
      %v1772 = vmul.f32 %v1200, -0.23333333
      %v1773 = vmul.f32 %v1201, -0.23333333
      %v1774 = vmul.f32 %v1202, -0.23333333
      %v1775 = vmul.f32 %v1203, -0.23333333
      %v1776 = vmul.f32 %v1204, -0.23333333
      %v1777 = vmul.f32 %v1205, -0.23333333
      %v1778 = vmul.f32 %v1206, -0.23333333
      %v1779 = vmul.f32 %v1207, -0.23333333
      %v1780 = vmul.f32 %v1208, -0.23333333
      %v1781 = vmul.f32 %v1209, -0.23333333
      %v1782 = vmul.f32 %v1210, -0.23333333
      %v1783 = vmul.f32 %v1211, -0.23333333
      %v1784 = vmul.f32 %v1212, -0.23333333
      %v1785 = vmul.f32 %v1213, -0.23333333
      %v1786 = vmul.f32 %v1214, -0.23333333
      %v1787 = vmul.f32 %v1215, -0.23333333
      %v1788 = vmul.f32 %v1216, -0.23333333
      %v1789 = vmul.f32 %v1217, -0.23333333
      %v1790 = vadd.f32 %v1726, %v1758
      %v1791 = vadd.f32 %v1727, %v1759
      %v1792 = vadd.f32 %v1728, %v1760
      %v1793 = vadd.f32 %v1729, %v1761
      %v1794 = vadd.f32 %v1730, %v1762
      %v1795 = vadd.f32 %v1731, %v1763
      %v1796 = vadd.f32 %v1732, %v1764
      %v1797 = vadd.f32 %v1733, %v1765
      %v1798 = vadd.f32 %v1734, %v1766
      %v1799 = vadd.f32 %v1735, %v1767
      %v1800 = vadd.f32 %v1736, %v1768
      %v1801 = vadd.f32 %v1737, %v1769
      %v1802 = vadd.f32 %v1738, %v1770
      %v1803 = vadd.f32 %v1739, %v1771
      %v1804 = vadd.f32 %v1740, %v1772
      %v1805 = vadd.f32 %v1741, %v1773
      %v1806 = vadd.f32 %v1742, %v1774
      %v1807 = vadd.f32 %v1743, %v1775
      %v1808 = vadd.f32 %v1744, %v1776
      %v1809 = vadd.f32 %v1745, %v1777
      %v1810 = vadd.f32 %v1746, %v1778
      %v1811 = vadd.f32 %v1747, %v1779
      %v1812 = vadd.f32 %v1748, %v1780
      %v1813 = vadd.f32 %v1749, %v1781
      %v1814 = vadd.f32 %v1750, %v1782
      %v1815 = vadd.f32 %v1751, %v1783
      %v1816 = vadd.f32 %v1752, %v1784
      %v1817 = vadd.f32 %v1753, %v1785
      %v1818 = vadd.f32 %v1754, %v1786
      %v1819 = vadd.f32 %v1755, %v1787
      %v1820 = vadd.f32 %v1756, %v1788
      %v1821 = vadd.f32 %v1757, %v1789
      %v1822 = vunpack.c.l.bf16 %v1709
      %v1823 = vunpack.c.h.bf16 %v1709
      %v1824 = vunpack.c.l.bf16 %v1710
      %v1825 = vunpack.c.h.bf16 %v1710
      %v1826 = vunpack.c.l.bf16 %v1711
      %v1827 = vunpack.c.h.bf16 %v1711
      %v1828 = vunpack.c.l.bf16 %v1712
      %v1829 = vunpack.c.h.bf16 %v1712
      %v1830 = vunpack.c.l.bf16 %v1713
      %v1831 = vunpack.c.h.bf16 %v1713
      %v1832 = vunpack.c.l.bf16 %v1714
      %v1833 = vunpack.c.h.bf16 %v1714
      %v1834 = vunpack.c.l.bf16 %v1715
      %v1835 = vunpack.c.h.bf16 %v1715
      %v1836 = vunpack.c.l.bf16 %v1716
      %v1837 = vunpack.c.h.bf16 %v1716
      %v1838 = vunpack.c.l.bf16 %v1717
      %v1839 = vunpack.c.h.bf16 %v1717
      %v1840 = vunpack.c.l.bf16 %v1718
      %v1841 = vunpack.c.h.bf16 %v1718
      %v1842 = vunpack.c.l.bf16 %v1719
      %v1843 = vunpack.c.h.bf16 %v1719
      %v1844 = vunpack.c.l.bf16 %v1720
      %v1845 = vunpack.c.h.bf16 %v1720
      %v1846 = vunpack.c.l.bf16 %v1721
      %v1847 = vunpack.c.h.bf16 %v1721
      %v1848 = vunpack.c.l.bf16 %v1722
      %v1849 = vunpack.c.h.bf16 %v1722
      %v1850 = vunpack.c.l.bf16 %v1723
      %v1851 = vunpack.c.h.bf16 %v1723
      %v1852 = vunpack.c.l.bf16 %v1724
      %v1853 = vunpack.c.h.bf16 %v1724
      %v1854 = vmul.f32 %v1822, 0.22222222
      %v1855 = vmul.f32 %v1823, 0.22222222
      %v1856 = vmul.f32 %v1824, 0.22222222
      %v1857 = vmul.f32 %v1825, 0.22222222
      %v1858 = vmul.f32 %v1826, 0.22222222
      %v1859 = vmul.f32 %v1827, 0.22222222
      %v1860 = vmul.f32 %v1828, 0.22222222
      %v1861 = vmul.f32 %v1829, 0.22222222
      %v1862 = vmul.f32 %v1830, 0.22222222
      %v1863 = vmul.f32 %v1831, 0.22222222
      %v1864 = vmul.f32 %v1832, 0.22222222
      %v1865 = vmul.f32 %v1833, 0.22222222
      %v1866 = vmul.f32 %v1834, 0.22222222
      %v1867 = vmul.f32 %v1835, 0.22222222
      %v1868 = vmul.f32 %v1836, 0.22222222
      %v1869 = vmul.f32 %v1837, 0.22222222
      %v1870 = vmul.f32 %v1838, 0.22222222
      %v1871 = vmul.f32 %v1839, 0.22222222
      %v1872 = vmul.f32 %v1840, 0.22222222
      %v1873 = vmul.f32 %v1841, 0.22222222
      %v1874 = vmul.f32 %v1842, 0.22222222
      %v1875 = vmul.f32 %v1843, 0.22222222
      %v1876 = vmul.f32 %v1844, 0.22222222
      %v1877 = vmul.f32 %v1845, 0.22222222
      %v1878 = vmul.f32 %v1846, 0.22222222
      %v1879 = vmul.f32 %v1847, 0.22222222
      %v1880 = vmul.f32 %v1848, 0.22222222
      %v1881 = vmul.f32 %v1849, 0.22222222
      %v1882 = vmul.f32 %v1850, 0.22222222
      %v1883 = vmul.f32 %v1851, 0.22222222
      %v1884 = vmul.f32 %v1852, 0.22222222
      %v1885 = vmul.f32 %v1853, 0.22222222
      %v1886 = vadd.f32 %v1790, %v1854
      %v1887 = vadd.f32 %v1791, %v1855
      %v1888 = vadd.f32 %v1792, %v1856
      %v1889 = vadd.f32 %v1793, %v1857
      %v1890 = vadd.f32 %v1794, %v1858
      %v1891 = vadd.f32 %v1795, %v1859
      %v1892 = vadd.f32 %v1796, %v1860
      %v1893 = vadd.f32 %v1797, %v1861
      %v1894 = vadd.f32 %v1798, %v1862
      %v1895 = vadd.f32 %v1799, %v1863
      %v1896 = vadd.f32 %v1800, %v1864
      %v1897 = vadd.f32 %v1801, %v1865
      %v1898 = vadd.f32 %v1802, %v1866
      %v1899 = vadd.f32 %v1803, %v1867
      %v1900 = vadd.f32 %v1804, %v1868
      %v1901 = vadd.f32 %v1805, %v1869
      %v1902 = vadd.f32 %v1806, %v1870
      %v1903 = vadd.f32 %v1807, %v1871
      %v1904 = vadd.f32 %v1808, %v1872
      %v1905 = vadd.f32 %v1809, %v1873
      %v1906 = vadd.f32 %v1810, %v1874
      %v1907 = vadd.f32 %v1811, %v1875
      %v1908 = vadd.f32 %v1812, %v1876
      %v1909 = vadd.f32 %v1813, %v1877
      %v1910 = vadd.f32 %v1814, %v1878
      %v1911 = vadd.f32 %v1815, %v1879
      %v1912 = vadd.f32 %v1816, %v1880
      %v1913 = vadd.f32 %v1817, %v1881
      %v1914 = vadd.f32 %v1818, %v1882
      %v1915 = vadd.f32 %v1819, %v1883
      %v1916 = vadd.f32 %v1820, %v1884
      %v1917 = vadd.f32 %v1821, %v1885
      %v1918 = vadd.f32 %v66, %v1886
      %v1919 = vadd.f32 %v67, %v1887
      %v1920 = vadd.f32 %v68, %v1888
      %v1921 = vadd.f32 %v69, %v1889
      %v1922 = vadd.f32 %v70, %v1890
      %v1923 = vadd.f32 %v71, %v1891
      %v1924 = vadd.f32 %v72, %v1892
      %v1925 = vadd.f32 %v73, %v1893
      %v1926 = vadd.f32 %v74, %v1894
      %v1927 = vadd.f32 %v75, %v1895
      %v1928 = vadd.f32 %v76, %v1896
      %v1929 = vadd.f32 %v77, %v1897
      %v1930 = vadd.f32 %v78, %v1898
      %v1931 = vadd.f32 %v79, %v1899
      %v1932 = vadd.f32 %v80, %v1900
      %v1933 = vadd.f32 %v81, %v1901
      %v1934 = vadd.f32 %v82, %v1902
      %v1935 = vadd.f32 %v83, %v1903
      %v1936 = vadd.f32 %v84, %v1904
      %v1937 = vadd.f32 %v85, %v1905
      %v1938 = vadd.f32 %v86, %v1906
      %v1939 = vadd.f32 %v87, %v1907
      %v1940 = vadd.f32 %v88, %v1908
      %v1941 = vadd.f32 %v89, %v1909
      %v1942 = vadd.f32 %v90, %v1910
      %v1943 = vadd.f32 %v91, %v1911
      %v1944 = vadd.f32 %v92, %v1912
      %v1945 = vadd.f32 %v93, %v1913
      %v1946 = vadd.f32 %v94, %v1914
      %v1947 = vadd.f32 %v95, %v1915
      %v1948 = vadd.f32 %v96, %v1916
      %v1949 = vadd.f32 %v97, %v1917
      %v1950 = vstv %s1725
      %v1951 = vmul.f32 %v1950, %v26
      %v1952 = vadd.f32 %v25, %v1951
      %v1953 = vpack.c.bf16 %v1919, %v1918
      %v1954 = vpack.c.bf16 %v1921, %v1920
      %v1955 = vpack.c.bf16 %v1923, %v1922
      %v1956 = vpack.c.bf16 %v1925, %v1924
      %v1957 = vpack.c.bf16 %v1927, %v1926
      %v1958 = vpack.c.bf16 %v1929, %v1928
      %v1959 = vpack.c.bf16 %v1931, %v1930
      %v1960 = vpack.c.bf16 %v1933, %v1932
      %v1961 = vpack.c.bf16 %v1935, %v1934
      %v1962 = vpack.c.bf16 %v1937, %v1936
      %v1963 = vpack.c.bf16 %v1939, %v1938
      %v1964 = vpack.c.bf16 %v1941, %v1940
      %v1965 = vpack.c.bf16 %v1943, %v1942
      %v1966 = vpack.c.bf16 %v1945, %v1944
      %v1967 = vpack.c.bf16 %v1947, %v1946
      %v1968 = vpack.c.bf16 %v1949, %v1948
      %v1970 = vlaneseq
      %v1971 = vshrl.u32 %v1970, 7
      %v1972 = vsub.s32 0, %v1971
      %v1973 = vrot.slane %v1952, %v1972
      %1975 = vmatprep.subr.bf16.mxu0 0
      %1976 = vmatpush1.bf16.msra.mxu0 %v196
      %1977 = vmatprep.subr.bf16.mxu0 0
      %1978 = vmatpush1.bf16.msra.mxu0 %v195
      %1979 = vmatprep.subr.bf16.mxu0 0
      %1980 = vmatpush1.bf16.msra.mxu0 %v194
      %1981 = vmatprep.subr.bf16.mxu0 0
      %1982 = vmatpush1.bf16.msra.mxu0 %v193
      %1983 = vmatprep.subr.bf16.mxu0 0
      %1984 = vmatpush1.bf16.msra.mxu0 %v192
      %1985 = vmatprep.subr.bf16.mxu0 0
      %1986 = vmatpush1.bf16.msra.mxu0 %v191
      %1987 = vmatprep.subr.bf16.mxu0 0
      %1988 = vmatpush1.bf16.msra.mxu0 %v190
      %1989 = vmatprep.subr.bf16.mxu0 0
      %1990 = vmatpush1.bf16.msra.mxu0 %v189
      %1991 = vmatprep.subr.bf16.mxu0 0
      %1992 = vmatpush2.bf16.msra.mxu0 0
      %1993 = vmatprep.subr.bf16.mxu0 0
      %1994 = vmatpush2.bf16.msra.mxu0 0
      %1995 = vmatprep.subr.bf16.mxu0 0
      %1996 = vmatpush2.bf16.msra.mxu0 0
      %1997 = vmatprep.subr.bf16.mxu0 0
      %1998 = vmatpush2.bf16.msra.mxu0 0
      %1999 = vmatprep.subr.bf16.mxu0 0
      %2000 = vmatpush2.bf16.msra.mxu0 0
      %2001 = vmatprep.subr.bf16.mxu0 0
      %2002 = vmatpush2.bf16.msra.mxu0 0
      %2003 = vmatprep.subr.bf16.mxu0 0
      %2004 = vmatpush2.bf16.msra.mxu0 0
      %2005 = vmatprep.subr.bf16.mxu0 0
      %2006 = vmatpush2.bf16.msra.mxu0 0
      %2007 = vmatprep.mubr.bf16.mxu0 0
      %2008 = vmatmul.mubr.bf16.gmra.mxu0 %v1953
      %v2009 = vpop.f32.mrf.mxu0
      %v2010 = vadd.f32 %v1973, %v2009
      %v2011 = vpop.f32.mrf.mxu0
      %v2012 = vpop.f32.mrf.mxu0
      %v2013 = vadd.f32 %v1973, %v2012
      %v2014 = vpop.f32.mrf.mxu0
      %2015 = vmatprep.mubr.bf16.mxu0 0
      %2016 = vmatmul.mubr.bf16.gmra.mxu0 %v1954
      %v2017 = vpop.f32.mrf.mxu0
      %v2018 = vadd.f32 %v1973, %v2017
      %v2019 = vpop.f32.mrf.mxu0
      %v2020 = vpop.f32.mrf.mxu0
      %v2021 = vadd.f32 %v1973, %v2020
      %v2022 = vpop.f32.mrf.mxu0
      %2023 = vmatprep.mubr.bf16.mxu0 0
      %2024 = vmatmul.mubr.bf16.gmra.mxu0 %v1955
      %v2025 = vpop.f32.mrf.mxu0
      %v2026 = vadd.f32 %v1973, %v2025
      %v2027 = vpop.f32.mrf.mxu0
      %v2028 = vpop.f32.mrf.mxu0
      %v2029 = vadd.f32 %v1973, %v2028
      %v2030 = vpop.f32.mrf.mxu0
      %2031 = vmatprep.mubr.bf16.mxu0 0
      %2032 = vmatmul.mubr.bf16.gmra.mxu0 %v1956
      %v2033 = vpop.f32.mrf.mxu0
      %v2034 = vadd.f32 %v1973, %v2033
      %v2035 = vpop.f32.mrf.mxu0
      %v2036 = vpop.f32.mrf.mxu0
      %v2037 = vadd.f32 %v1973, %v2036
      %v2038 = vpop.f32.mrf.mxu0
      %2039 = vmatprep.mubr.bf16.mxu0 0
      %2040 = vmatmul.mubr.bf16.gmra.mxu0 %v1957
      %v2041 = vpop.f32.mrf.mxu0
      %v2042 = vadd.f32 %v1973, %v2041
      %v2043 = vpop.f32.mrf.mxu0
      %v2044 = vpop.f32.mrf.mxu0
      %v2045 = vadd.f32 %v1973, %v2044
      %v2046 = vpop.f32.mrf.mxu0
      %2047 = vmatprep.mubr.bf16.mxu0 0
      %2048 = vmatmul.mubr.bf16.gmra.mxu0 %v1958
      %v2049 = vpop.f32.mrf.mxu0
      %v2050 = vadd.f32 %v1973, %v2049
      %v2051 = vpop.f32.mrf.mxu0
      %v2052 = vpop.f32.mrf.mxu0
      %v2053 = vadd.f32 %v1973, %v2052
      %v2054 = vpop.f32.mrf.mxu0
      %2055 = vmatprep.mubr.bf16.mxu0 0
      %2056 = vmatmul.mubr.bf16.gmra.mxu0 %v1959
      %v2057 = vpop.f32.mrf.mxu0
      %v2058 = vadd.f32 %v1973, %v2057
      %v2059 = vpop.f32.mrf.mxu0
      %v2060 = vpop.f32.mrf.mxu0
      %v2061 = vadd.f32 %v1973, %v2060
      %v2062 = vpop.f32.mrf.mxu0
      %2063 = vmatprep.mubr.bf16.mxu0 0
      %2064 = vmatmul.mubr.bf16.gmra.mxu0 %v1960
      %v2065 = vpop.f32.mrf.mxu0
      %v2066 = vadd.f32 %v1973, %v2065
      %v2067 = vpop.f32.mrf.mxu0
      %v2068 = vpop.f32.mrf.mxu0
      %v2069 = vadd.f32 %v1973, %v2068
      %v2070 = vpop.f32.mrf.mxu0
      %2071 = vmatprep.mubr.bf16.mxu0 0
      %2072 = vmatmul.mubr.bf16.gmra.mxu0 %v1961
      %v2073 = vpop.f32.mrf.mxu0
      %v2074 = vadd.f32 %v1973, %v2073
      %v2075 = vpop.f32.mrf.mxu0
      %v2076 = vpop.f32.mrf.mxu0
      %v2077 = vadd.f32 %v1973, %v2076
      %v2078 = vpop.f32.mrf.mxu0
      %2079 = vmatprep.mubr.bf16.mxu0 0
      %2080 = vmatmul.mubr.bf16.gmra.mxu0 %v1962
      %v2081 = vpop.f32.mrf.mxu0
      %v2082 = vadd.f32 %v1973, %v2081
      %v2083 = vpop.f32.mrf.mxu0
      %v2084 = vpop.f32.mrf.mxu0
      %v2085 = vadd.f32 %v1973, %v2084
      %v2086 = vpop.f32.mrf.mxu0
      %2087 = vmatprep.mubr.bf16.mxu0 0
      %2088 = vmatmul.mubr.bf16.gmra.mxu0 %v1963
      %v2089 = vpop.f32.mrf.mxu0
      %v2090 = vadd.f32 %v1973, %v2089
      %v2091 = vpop.f32.mrf.mxu0
      %v2092 = vpop.f32.mrf.mxu0
      %v2093 = vadd.f32 %v1973, %v2092
      %v2094 = vpop.f32.mrf.mxu0
      %2095 = vmatprep.mubr.bf16.mxu0 0
      %2096 = vmatmul.mubr.bf16.gmra.mxu0 %v1964
      %v2097 = vpop.f32.mrf.mxu0
      %v2098 = vadd.f32 %v1973, %v2097
      %v2099 = vpop.f32.mrf.mxu0
      %v2100 = vpop.f32.mrf.mxu0
      %v2101 = vadd.f32 %v1973, %v2100
      %v2102 = vpop.f32.mrf.mxu0
      %2103 = vmatprep.mubr.bf16.mxu0 0
      %2104 = vmatmul.mubr.bf16.gmra.mxu0 %v1965
      %v2105 = vpop.f32.mrf.mxu0
      %v2106 = vadd.f32 %v1973, %v2105
      %v2107 = vpop.f32.mrf.mxu0
      %v2108 = vpop.f32.mrf.mxu0
      %v2109 = vadd.f32 %v1973, %v2108
      %v2110 = vpop.f32.mrf.mxu0
      %2111 = vmatprep.mubr.bf16.mxu0 0
      %2112 = vmatmul.mubr.bf16.gmra.mxu0 %v1966
      %v2113 = vpop.f32.mrf.mxu0
      %v2114 = vadd.f32 %v1973, %v2113
      %v2115 = vpop.f32.mrf.mxu0
      %v2116 = vpop.f32.mrf.mxu0
      %v2117 = vadd.f32 %v1973, %v2116
      %v2118 = vpop.f32.mrf.mxu0
      %2119 = vmatprep.mubr.bf16.mxu0 0
      %2120 = vmatmul.mubr.bf16.gmra.mxu0 %v1967
      %v2121 = vpop.f32.mrf.mxu0
      %v2122 = vadd.f32 %v1973, %v2121
      %v2123 = vpop.f32.mrf.mxu0
      %v2124 = vpop.f32.mrf.mxu0
      %v2125 = vadd.f32 %v1973, %v2124
      %v2126 = vpop.f32.mrf.mxu0
      %2127 = vmatprep.mubr.bf16.mxu0 0
      %2128 = vmatmul.mubr.bf16.gmra.mxu0 %v1968
      %v2129 = vpop.f32.mrf.mxu0
      %v2130 = vadd.f32 %v1973, %v2129
      %v2131 = vpop.f32.mrf.mxu0
      %v2132 = vpop.f32.mrf.mxu0
      %v2133 = vadd.f32 %v1973, %v2132
      %v2134 = vpop.f32.mrf.mxu0
      %2135 = vdwg.mxu0
      %v2136 = vtanh.pop %v2010
      %v2137 = vtanh.pop %v2013
      %v2138 = vtanh.pop %v2018
      %v2139 = vtanh.pop %v2021
      %v2140 = vtanh.pop %v2026
      %v2141 = vtanh.pop %v2029
      %v2142 = vtanh.pop %v2034
      %v2143 = vtanh.pop %v2037
      %v2144 = vtanh.pop %v2042
      %v2145 = vtanh.pop %v2045
      %v2146 = vtanh.pop %v2050
      %v2147 = vtanh.pop %v2053
      %v2148 = vtanh.pop %v2058
      %v2149 = vtanh.pop %v2061
      %v2150 = vtanh.pop %v2066
      %v2151 = vtanh.pop %v2069
      %v2152 = vtanh.pop %v2074
      %v2153 = vtanh.pop %v2077
      %v2154 = vtanh.pop %v2082
      %v2155 = vtanh.pop %v2085
      %v2156 = vtanh.pop %v2090
      %v2157 = vtanh.pop %v2093
      %v2158 = vtanh.pop %v2098
      %v2159 = vtanh.pop %v2101
      %v2160 = vtanh.pop %v2106
      %v2161 = vtanh.pop %v2109
      %v2162 = vtanh.pop %v2114
      %v2163 = vtanh.pop %v2117
      %v2164 = vtanh.pop %v2122
      %v2165 = vtanh.pop %v2125
      %v2166 = vtanh.pop %v2130
      %v2167 = vtanh.pop %v2133
      %v2168 = vpack.c.bf16 %v2137, %v2136
      %v2169 = vpack.c.bf16 %v2139, %v2138
      %v2170 = vpack.c.bf16 %v2141, %v2140
      %v2171 = vpack.c.bf16 %v2143, %v2142
      %v2172 = vpack.c.bf16 %v2145, %v2144
      %v2173 = vpack.c.bf16 %v2147, %v2146
      %v2174 = vpack.c.bf16 %v2149, %v2148
      %v2175 = vpack.c.bf16 %v2151, %v2150
      %v2176 = vpack.c.bf16 %v2153, %v2152
      %v2177 = vpack.c.bf16 %v2155, %v2154
      %v2178 = vpack.c.bf16 %v2157, %v2156
      %v2179 = vpack.c.bf16 %v2159, %v2158
      %v2180 = vpack.c.bf16 %v2161, %v2160
      %v2181 = vpack.c.bf16 %v2163, %v2162
      %v2182 = vpack.c.bf16 %v2165, %v2164
      %v2183 = vpack.c.bf16 %v2167, %v2166
      %2184 = vmatprep.subr.bf16.mxu0 0
      %2185 = vmatpush1.bf16.msra.mxu0 %v459
      %2186 = vmatprep.subr.bf16.mxu0 0
      %2187 = vmatpush1.bf16.msra.mxu0 %v458
      %2188 = vmatprep.subr.bf16.mxu0 0
      %2189 = vmatpush1.bf16.msra.mxu0 %v457
      %2190 = vmatprep.subr.bf16.mxu0 0
      %2191 = vmatpush1.bf16.msra.mxu0 %v456
      %2192 = vmatprep.subr.bf16.mxu0 0
      %2193 = vmatpush1.bf16.msra.mxu0 %v455
      %2194 = vmatprep.subr.bf16.mxu0 0
      %2195 = vmatpush1.bf16.msra.mxu0 %v454
      %2196 = vmatprep.subr.bf16.mxu0 0
      %2197 = vmatpush1.bf16.msra.mxu0 %v453
      %2198 = vmatprep.subr.bf16.mxu0 0
      %2199 = vmatpush1.bf16.msra.mxu0 %v452
      %2200 = vmatprep.subr.bf16.mxu0 0
      %2201 = vmatpush2.bf16.msra.mxu0 0
      %2202 = vmatprep.subr.bf16.mxu0 0
      %2203 = vmatpush2.bf16.msra.mxu0 0
      %2204 = vmatprep.subr.bf16.mxu0 0
      %2205 = vmatpush2.bf16.msra.mxu0 0
      %2206 = vmatprep.subr.bf16.mxu0 0
      %2207 = vmatpush2.bf16.msra.mxu0 0
      %2208 = vmatprep.subr.bf16.mxu0 0
      %2209 = vmatpush2.bf16.msra.mxu0 0
      %2210 = vmatprep.subr.bf16.mxu0 0
      %2211 = vmatpush2.bf16.msra.mxu0 0
      %2212 = vmatprep.subr.bf16.mxu0 0
      %2213 = vmatpush2.bf16.msra.mxu0 0
      %2214 = vmatprep.subr.bf16.mxu0 0
      %2215 = vmatpush2.bf16.msra.mxu0 0
      %2216 = vmatprep.mubr.bf16.mxu0 0
      %2217 = vmatmul.mubr.bf16.gmra.mxu0 %v2168
      %v2218 = vpop.f32.mrf.mxu0
      %v2219 = vadd.f32 %v418, %v2218
      %v2220 = vpop.f32.mrf.mxu0
      %v2221 = vpop.f32.mrf.mxu0
      %v2222 = vadd.f32 %v418, %v2221
      %v2223 = vpop.f32.mrf.mxu0
      %2224 = vmatprep.mubr.bf16.mxu0 0
      %2225 = vmatmul.mubr.bf16.gmra.mxu0 %v2169
      %v2226 = vpop.f32.mrf.mxu0
      %v2227 = vadd.f32 %v418, %v2226
      %v2228 = vpop.f32.mrf.mxu0
      %v2229 = vpop.f32.mrf.mxu0
      %v2230 = vadd.f32 %v418, %v2229
      %v2231 = vpop.f32.mrf.mxu0
      %2232 = vmatprep.mubr.bf16.mxu0 0
      %2233 = vmatmul.mubr.bf16.gmra.mxu0 %v2170
      %v2234 = vpop.f32.mrf.mxu0
      %v2235 = vadd.f32 %v418, %v2234
      %v2236 = vpop.f32.mrf.mxu0
      %v2237 = vpop.f32.mrf.mxu0
      %v2238 = vadd.f32 %v418, %v2237
      %v2239 = vpop.f32.mrf.mxu0
      %2240 = vmatprep.mubr.bf16.mxu0 0
      %2241 = vmatmul.mubr.bf16.gmra.mxu0 %v2171
      %v2242 = vpop.f32.mrf.mxu0
      %v2243 = vadd.f32 %v418, %v2242
      %v2244 = vpop.f32.mrf.mxu0
      %v2245 = vpop.f32.mrf.mxu0
      %v2246 = vadd.f32 %v418, %v2245
      %v2247 = vpop.f32.mrf.mxu0
      %2248 = vmatprep.mubr.bf16.mxu0 0
      %2249 = vmatmul.mubr.bf16.gmra.mxu0 %v2172
      %v2250 = vpop.f32.mrf.mxu0
      %v2251 = vadd.f32 %v418, %v2250
      %v2252 = vpop.f32.mrf.mxu0
      %v2253 = vpop.f32.mrf.mxu0
      %v2254 = vadd.f32 %v418, %v2253
      %v2255 = vpop.f32.mrf.mxu0
      %2256 = vmatprep.mubr.bf16.mxu0 0
      %2257 = vmatmul.mubr.bf16.gmra.mxu0 %v2173
      %v2258 = vpop.f32.mrf.mxu0
      %v2259 = vadd.f32 %v418, %v2258
      %v2260 = vpop.f32.mrf.mxu0
      %v2261 = vpop.f32.mrf.mxu0
      %v2262 = vadd.f32 %v418, %v2261
      %v2263 = vpop.f32.mrf.mxu0
      %2264 = vmatprep.mubr.bf16.mxu0 0
      %2265 = vmatmul.mubr.bf16.gmra.mxu0 %v2174
      %v2266 = vpop.f32.mrf.mxu0
      %v2267 = vadd.f32 %v418, %v2266
      %v2268 = vpop.f32.mrf.mxu0
      %v2269 = vpop.f32.mrf.mxu0
      %v2270 = vadd.f32 %v418, %v2269
      %v2271 = vpop.f32.mrf.mxu0
      %2272 = vmatprep.mubr.bf16.mxu0 0
      %2273 = vmatmul.mubr.bf16.gmra.mxu0 %v2175
      %v2274 = vpop.f32.mrf.mxu0
      %v2275 = vadd.f32 %v418, %v2274
      %v2276 = vpop.f32.mrf.mxu0
      %v2277 = vpop.f32.mrf.mxu0
      %v2278 = vadd.f32 %v418, %v2277
      %v2279 = vpop.f32.mrf.mxu0
      %2280 = vmatprep.mubr.bf16.mxu0 0
      %2281 = vmatmul.mubr.bf16.gmra.mxu0 %v2176
      %v2282 = vpop.f32.mrf.mxu0
      %v2283 = vadd.f32 %v418, %v2282
      %v2284 = vpop.f32.mrf.mxu0
      %v2285 = vpop.f32.mrf.mxu0
      %v2286 = vadd.f32 %v418, %v2285
      %v2287 = vpop.f32.mrf.mxu0
      %2288 = vmatprep.mubr.bf16.mxu0 0
      %2289 = vmatmul.mubr.bf16.gmra.mxu0 %v2177
      %v2290 = vpop.f32.mrf.mxu0
      %v2291 = vadd.f32 %v418, %v2290
      %v2292 = vpop.f32.mrf.mxu0
      %v2293 = vpop.f32.mrf.mxu0
      %v2294 = vadd.f32 %v418, %v2293
      %v2295 = vpop.f32.mrf.mxu0
      %2296 = vmatprep.mubr.bf16.mxu0 0
      %2297 = vmatmul.mubr.bf16.gmra.mxu0 %v2178
      %v2298 = vpop.f32.mrf.mxu0
      %v2299 = vadd.f32 %v418, %v2298
      %v2300 = vpop.f32.mrf.mxu0
      %v2301 = vpop.f32.mrf.mxu0
      %v2302 = vadd.f32 %v418, %v2301
      %v2303 = vpop.f32.mrf.mxu0
      %2304 = vmatprep.mubr.bf16.mxu0 0
      %2305 = vmatmul.mubr.bf16.gmra.mxu0 %v2179
      %v2306 = vpop.f32.mrf.mxu0
      %v2307 = vadd.f32 %v418, %v2306
      %v2308 = vpop.f32.mrf.mxu0
      %v2309 = vpop.f32.mrf.mxu0
      %v2310 = vadd.f32 %v418, %v2309
      %v2311 = vpop.f32.mrf.mxu0
      %2312 = vmatprep.mubr.bf16.mxu0 0
      %2313 = vmatmul.mubr.bf16.gmra.mxu0 %v2180
      %v2314 = vpop.f32.mrf.mxu0
      %v2315 = vadd.f32 %v418, %v2314
      %v2316 = vpop.f32.mrf.mxu0
      %v2317 = vpop.f32.mrf.mxu0
      %v2318 = vadd.f32 %v418, %v2317
      %v2319 = vpop.f32.mrf.mxu0
      %2320 = vmatprep.mubr.bf16.mxu0 0
      %2321 = vmatmul.mubr.bf16.gmra.mxu0 %v2181
      %v2322 = vpop.f32.mrf.mxu0
      %v2323 = vadd.f32 %v418, %v2322
      %v2324 = vpop.f32.mrf.mxu0
      %v2325 = vpop.f32.mrf.mxu0
      %v2326 = vadd.f32 %v418, %v2325
      %v2327 = vpop.f32.mrf.mxu0
      %2328 = vmatprep.mubr.bf16.mxu0 0
      %2329 = vmatmul.mubr.bf16.gmra.mxu0 %v2182
      %v2330 = vpop.f32.mrf.mxu0
      %v2331 = vadd.f32 %v418, %v2330
      %v2332 = vpop.f32.mrf.mxu0
      %v2333 = vpop.f32.mrf.mxu0
      %v2334 = vadd.f32 %v418, %v2333
      %v2335 = vpop.f32.mrf.mxu0
      %2336 = vmatprep.mubr.bf16.mxu0 0
      %2337 = vmatmul.mubr.bf16.gmra.mxu0 %v2183
      %v2338 = vpop.f32.mrf.mxu0
      %v2339 = vadd.f32 %v418, %v2338
      %v2340 = vpop.f32.mrf.mxu0
      %v2341 = vpop.f32.mrf.mxu0
      %v2342 = vadd.f32 %v418, %v2341
      %v2343 = vpop.f32.mrf.mxu0
      %2344 = vdwg.mxu0
      %v2345 = vpack.c.bf16 %v2222, %v2219
      %v2346 = vpack.c.bf16 %v2230, %v2227
      %v2347 = vpack.c.bf16 %v2238, %v2235
      %v2348 = vpack.c.bf16 %v2246, %v2243
      %v2349 = vpack.c.bf16 %v2254, %v2251
      %v2350 = vpack.c.bf16 %v2262, %v2259
      %v2351 = vpack.c.bf16 %v2270, %v2267
      %v2352 = vpack.c.bf16 %v2278, %v2275
      %v2353 = vpack.c.bf16 %v2286, %v2283
      %v2354 = vpack.c.bf16 %v2294, %v2291
      %v2355 = vpack.c.bf16 %v2302, %v2299
      %v2356 = vpack.c.bf16 %v2310, %v2307
      %v2357 = vpack.c.bf16 %v2318, %v2315
      %v2358 = vpack.c.bf16 %v2326, %v2323
      %v2359 = vpack.c.bf16 %v2334, %v2331
      %v2360 = vpack.c.bf16 %v2342, %v2339
      %s2361 = sadd.f32 %s99, 0.055555556
      %v2362 = vmul.f32 %v646, 0.18453741
      %v2363 = vmul.f32 %v647, 0.18453741
      %v2364 = vmul.f32 %v648, 0.18453741
      %v2365 = vmul.f32 %v649, 0.18453741
      %v2366 = vmul.f32 %v650, 0.18453741
      %v2367 = vmul.f32 %v651, 0.18453741
      %v2368 = vmul.f32 %v652, 0.18453741
      %v2369 = vmul.f32 %v653, 0.18453741
      %v2370 = vmul.f32 %v654, 0.18453741
      %v2371 = vmul.f32 %v655, 0.18453741
      %v2372 = vmul.f32 %v656, 0.18453741
      %v2373 = vmul.f32 %v657, 0.18453741
      %v2374 = vmul.f32 %v658, 0.18453741
      %v2375 = vmul.f32 %v659, 0.18453741
      %v2376 = vmul.f32 %v660, 0.18453741
      %v2377 = vmul.f32 %v661, 0.18453741
      %v2378 = vmul.f32 %v662, 0.18453741
      %v2379 = vmul.f32 %v663, 0.18453741
      %v2380 = vmul.f32 %v664, 0.18453741
      %v2381 = vmul.f32 %v665, 0.18453741
      %v2382 = vmul.f32 %v666, 0.18453741
      %v2383 = vmul.f32 %v667, 0.18453741
      %v2384 = vmul.f32 %v668, 0.18453741
      %v2385 = vmul.f32 %v669, 0.18453741
      %v2386 = vmul.f32 %v670, 0.18453741
      %v2387 = vmul.f32 %v671, 0.18453741
      %v2388 = vmul.f32 %v672, 0.18453741
      %v2389 = vmul.f32 %v673, 0.18453741
      %v2390 = vmul.f32 %v674, 0.18453741
      %v2391 = vmul.f32 %v675, 0.18453741
      %v2392 = vmul.f32 %v676, 0.18453741
      %v2393 = vmul.f32 %v677, 0.18453741
      %v2394 = vmul.f32 %v1186, -0.7247371
      %v2395 = vmul.f32 %v1187, -0.7247371
      %v2396 = vmul.f32 %v1188, -0.7247371
      %v2397 = vmul.f32 %v1189, -0.7247371
      %v2398 = vmul.f32 %v1190, -0.7247371
      %v2399 = vmul.f32 %v1191, -0.7247371
      %v2400 = vmul.f32 %v1192, -0.7247371
      %v2401 = vmul.f32 %v1193, -0.7247371
      %v2402 = vmul.f32 %v1194, -0.7247371
      %v2403 = vmul.f32 %v1195, -0.7247371
      %v2404 = vmul.f32 %v1196, -0.7247371
      %v2405 = vmul.f32 %v1197, -0.7247371
      %v2406 = vmul.f32 %v1198, -0.7247371
      %v2407 = vmul.f32 %v1199, -0.7247371
      %v2408 = vmul.f32 %v1200, -0.7247371
      %v2409 = vmul.f32 %v1201, -0.7247371
      %v2410 = vmul.f32 %v1202, -0.7247371
      %v2411 = vmul.f32 %v1203, -0.7247371
      %v2412 = vmul.f32 %v1204, -0.7247371
      %v2413 = vmul.f32 %v1205, -0.7247371
      %v2414 = vmul.f32 %v1206, -0.7247371
      %v2415 = vmul.f32 %v1207, -0.7247371
      %v2416 = vmul.f32 %v1208, -0.7247371
      %v2417 = vmul.f32 %v1209, -0.7247371
      %v2418 = vmul.f32 %v1210, -0.7247371
      %v2419 = vmul.f32 %v1211, -0.7247371
      %v2420 = vmul.f32 %v1212, -0.7247371
      %v2421 = vmul.f32 %v1213, -0.7247371
      %v2422 = vmul.f32 %v1214, -0.7247371
      %v2423 = vmul.f32 %v1215, -0.7247371
      %v2424 = vmul.f32 %v1216, -0.7247371
      %v2425 = vmul.f32 %v1217, -0.7247371
      %v2426 = vadd.f32 %v2362, %v2394
      %v2427 = vadd.f32 %v2363, %v2395
      %v2428 = vadd.f32 %v2364, %v2396
      %v2429 = vadd.f32 %v2365, %v2397
      %v2430 = vadd.f32 %v2366, %v2398
      %v2431 = vadd.f32 %v2367, %v2399
      %v2432 = vadd.f32 %v2368, %v2400
      %v2433 = vadd.f32 %v2369, %v2401
      %v2434 = vadd.f32 %v2370, %v2402
      %v2435 = vadd.f32 %v2371, %v2403
      %v2436 = vadd.f32 %v2372, %v2404
      %v2437 = vadd.f32 %v2373, %v2405
      %v2438 = vadd.f32 %v2374, %v2406
      %v2439 = vadd.f32 %v2375, %v2407
      %v2440 = vadd.f32 %v2376, %v2408
      %v2441 = vadd.f32 %v2377, %v2409
      %v2442 = vadd.f32 %v2378, %v2410
      %v2443 = vadd.f32 %v2379, %v2411
      %v2444 = vadd.f32 %v2380, %v2412
      %v2445 = vadd.f32 %v2381, %v2413
      %v2446 = vadd.f32 %v2382, %v2414
      %v2447 = vadd.f32 %v2383, %v2415
      %v2448 = vadd.f32 %v2384, %v2416
      %v2449 = vadd.f32 %v2385, %v2417
      %v2450 = vadd.f32 %v2386, %v2418
      %v2451 = vadd.f32 %v2387, %v2419
      %v2452 = vadd.f32 %v2388, %v2420
      %v2453 = vadd.f32 %v2389, %v2421
      %v2454 = vadd.f32 %v2390, %v2422
      %v2455 = vadd.f32 %v2391, %v2423
      %v2456 = vadd.f32 %v2392, %v2424
      %v2457 = vadd.f32 %v2393, %v2425
      %v2458 = vmul.f32 %v1822, 0.6139308
      %v2459 = vmul.f32 %v1823, 0.6139308
      %v2460 = vmul.f32 %v1824, 0.6139308
      %v2461 = vmul.f32 %v1825, 0.6139308
      %v2462 = vmul.f32 %v1826, 0.6139308
      %v2463 = vmul.f32 %v1827, 0.6139308
      %v2464 = vmul.f32 %v1828, 0.6139308
      %v2465 = vmul.f32 %v1829, 0.6139308
      %v2466 = vmul.f32 %v1830, 0.6139308
      %v2467 = vmul.f32 %v1831, 0.6139308
      %v2468 = vmul.f32 %v1832, 0.6139308
      %v2469 = vmul.f32 %v1833, 0.6139308
      %v2470 = vmul.f32 %v1834, 0.6139308
      %v2471 = vmul.f32 %v1835, 0.6139308
      %v2472 = vmul.f32 %v1836, 0.6139308
      %v2473 = vmul.f32 %v1837, 0.6139308
      %v2474 = vmul.f32 %v1838, 0.6139308
      %v2475 = vmul.f32 %v1839, 0.6139308
      %v2476 = vmul.f32 %v1840, 0.6139308
      %v2477 = vmul.f32 %v1841, 0.6139308
      %v2478 = vmul.f32 %v1842, 0.6139308
      %v2479 = vmul.f32 %v1843, 0.6139308
      %v2480 = vmul.f32 %v1844, 0.6139308
      %v2481 = vmul.f32 %v1845, 0.6139308
      %v2482 = vmul.f32 %v1846, 0.6139308
      %v2483 = vmul.f32 %v1847, 0.6139308
      %v2484 = vmul.f32 %v1848, 0.6139308
      %v2485 = vmul.f32 %v1849, 0.6139308
      %v2486 = vmul.f32 %v1850, 0.6139308
      %v2487 = vmul.f32 %v1851, 0.6139308
      %v2488 = vmul.f32 %v1852, 0.6139308
      %v2489 = vmul.f32 %v1853, 0.6139308
      %v2490 = vadd.f32 %v2426, %v2458
      %v2491 = vadd.f32 %v2427, %v2459
      %v2492 = vadd.f32 %v2428, %v2460
      %v2493 = vadd.f32 %v2429, %v2461
      %v2494 = vadd.f32 %v2430, %v2462
      %v2495 = vadd.f32 %v2431, %v2463
      %v2496 = vadd.f32 %v2432, %v2464
      %v2497 = vadd.f32 %v2433, %v2465
      %v2498 = vadd.f32 %v2434, %v2466
      %v2499 = vadd.f32 %v2435, %v2467
      %v2500 = vadd.f32 %v2436, %v2468
      %v2501 = vadd.f32 %v2437, %v2469
      %v2502 = vadd.f32 %v2438, %v2470
      %v2503 = vadd.f32 %v2439, %v2471
      %v2504 = vadd.f32 %v2440, %v2472
      %v2505 = vadd.f32 %v2441, %v2473
      %v2506 = vadd.f32 %v2442, %v2474
      %v2507 = vadd.f32 %v2443, %v2475
      %v2508 = vadd.f32 %v2444, %v2476
      %v2509 = vadd.f32 %v2445, %v2477
      %v2510 = vadd.f32 %v2446, %v2478
      %v2511 = vadd.f32 %v2447, %v2479
      %v2512 = vadd.f32 %v2448, %v2480
      %v2513 = vadd.f32 %v2449, %v2481
      %v2514 = vadd.f32 %v2450, %v2482
      %v2515 = vadd.f32 %v2451, %v2483
      %v2516 = vadd.f32 %v2452, %v2484
      %v2517 = vadd.f32 %v2453, %v2485
      %v2518 = vadd.f32 %v2454, %v2486
      %v2519 = vadd.f32 %v2455, %v2487
      %v2520 = vadd.f32 %v2456, %v2488
      %v2521 = vadd.f32 %v2457, %v2489
      %v2522 = vunpack.c.l.bf16 %v2345
      %v2523 = vunpack.c.h.bf16 %v2345
      %v2524 = vunpack.c.l.bf16 %v2346
      %v2525 = vunpack.c.h.bf16 %v2346
      %v2526 = vunpack.c.l.bf16 %v2347
      %v2527 = vunpack.c.h.bf16 %v2347
      %v2528 = vunpack.c.l.bf16 %v2348
      %v2529 = vunpack.c.h.bf16 %v2348
      %v2530 = vunpack.c.l.bf16 %v2349
      %v2531 = vunpack.c.h.bf16 %v2349
      %v2532 = vunpack.c.l.bf16 %v2350
      %v2533 = vunpack.c.h.bf16 %v2350
      %v2534 = vunpack.c.l.bf16 %v2351
      %v2535 = vunpack.c.h.bf16 %v2351
      %v2536 = vunpack.c.l.bf16 %v2352
      %v2537 = vunpack.c.h.bf16 %v2352
      %v2538 = vunpack.c.l.bf16 %v2353
      %v2539 = vunpack.c.h.bf16 %v2353
      %v2540 = vunpack.c.l.bf16 %v2354
      %v2541 = vunpack.c.h.bf16 %v2354
      %v2542 = vunpack.c.l.bf16 %v2355
      %v2543 = vunpack.c.h.bf16 %v2355
      %v2544 = vunpack.c.l.bf16 %v2356
      %v2545 = vunpack.c.h.bf16 %v2356
      %v2546 = vunpack.c.l.bf16 %v2357
      %v2547 = vunpack.c.h.bf16 %v2357
      %v2548 = vunpack.c.l.bf16 %v2358
      %v2549 = vunpack.c.h.bf16 %v2358
      %v2550 = vunpack.c.l.bf16 %v2359
      %v2551 = vunpack.c.h.bf16 %v2359
      %v2552 = vunpack.c.l.bf16 %v2360
      %v2553 = vunpack.c.h.bf16 %v2360
      %v2554 = vmul.f32 %v2522, -0.018175583
      %v2555 = vmul.f32 %v2523, -0.018175583
      %v2556 = vmul.f32 %v2524, -0.018175583
      %v2557 = vmul.f32 %v2525, -0.018175583
      %v2558 = vmul.f32 %v2526, -0.018175583
      %v2559 = vmul.f32 %v2527, -0.018175583
      %v2560 = vmul.f32 %v2528, -0.018175583
      %v2561 = vmul.f32 %v2529, -0.018175583
      %v2562 = vmul.f32 %v2530, -0.018175583
      %v2563 = vmul.f32 %v2531, -0.018175583
      %v2564 = vmul.f32 %v2532, -0.018175583
      %v2565 = vmul.f32 %v2533, -0.018175583
      %v2566 = vmul.f32 %v2534, -0.018175583
      %v2567 = vmul.f32 %v2535, -0.018175583
      %v2568 = vmul.f32 %v2536, -0.018175583
      %v2569 = vmul.f32 %v2537, -0.018175583
      %v2570 = vmul.f32 %v2538, -0.018175583
      %v2571 = vmul.f32 %v2539, -0.018175583
      %v2572 = vmul.f32 %v2540, -0.018175583
      %v2573 = vmul.f32 %v2541, -0.018175583
      %v2574 = vmul.f32 %v2542, -0.018175583
      %v2575 = vmul.f32 %v2543, -0.018175583
      %v2576 = vmul.f32 %v2544, -0.018175583
      %v2577 = vmul.f32 %v2545, -0.018175583
      %v2578 = vmul.f32 %v2546, -0.018175583
      %v2579 = vmul.f32 %v2547, -0.018175583
      %v2580 = vmul.f32 %v2548, -0.018175583
      %v2581 = vmul.f32 %v2549, -0.018175583
      %v2582 = vmul.f32 %v2550, -0.018175583
      %v2583 = vmul.f32 %v2551, -0.018175583
      %v2584 = vmul.f32 %v2552, -0.018175583
      %v2585 = vmul.f32 %v2553, -0.018175583
      %v2586 = vadd.f32 %v2490, %v2554
      %v2587 = vadd.f32 %v2491, %v2555
      %v2588 = vadd.f32 %v2492, %v2556
      %v2589 = vadd.f32 %v2493, %v2557
      %v2590 = vadd.f32 %v2494, %v2558
      %v2591 = vadd.f32 %v2495, %v2559
      %v2592 = vadd.f32 %v2496, %v2560
      %v2593 = vadd.f32 %v2497, %v2561
      %v2594 = vadd.f32 %v2498, %v2562
      %v2595 = vadd.f32 %v2499, %v2563
      %v2596 = vadd.f32 %v2500, %v2564
      %v2597 = vadd.f32 %v2501, %v2565
      %v2598 = vadd.f32 %v2502, %v2566
      %v2599 = vadd.f32 %v2503, %v2567
      %v2600 = vadd.f32 %v2504, %v2568
      %v2601 = vadd.f32 %v2505, %v2569
      %v2602 = vadd.f32 %v2506, %v2570
      %v2603 = vadd.f32 %v2507, %v2571
      %v2604 = vadd.f32 %v2508, %v2572
      %v2605 = vadd.f32 %v2509, %v2573
      %v2606 = vadd.f32 %v2510, %v2574
      %v2607 = vadd.f32 %v2511, %v2575
      %v2608 = vadd.f32 %v2512, %v2576
      %v2609 = vadd.f32 %v2513, %v2577
      %v2610 = vadd.f32 %v2514, %v2578
      %v2611 = vadd.f32 %v2515, %v2579
      %v2612 = vadd.f32 %v2516, %v2580
      %v2613 = vadd.f32 %v2517, %v2581
      %v2614 = vadd.f32 %v2518, %v2582
      %v2615 = vadd.f32 %v2519, %v2583
      %v2616 = vadd.f32 %v2520, %v2584
      %v2617 = vadd.f32 %v2521, %v2585
      %v2618 = vadd.f32 %v66, %v2586
      %v2619 = vadd.f32 %v67, %v2587
      %v2620 = vadd.f32 %v68, %v2588
      %v2621 = vadd.f32 %v69, %v2589
      %v2622 = vadd.f32 %v70, %v2590
      %v2623 = vadd.f32 %v71, %v2591
      %v2624 = vadd.f32 %v72, %v2592
      %v2625 = vadd.f32 %v73, %v2593
      %v2626 = vadd.f32 %v74, %v2594
      %v2627 = vadd.f32 %v75, %v2595
      %v2628 = vadd.f32 %v76, %v2596
      %v2629 = vadd.f32 %v77, %v2597
      %v2630 = vadd.f32 %v78, %v2598
      %v2631 = vadd.f32 %v79, %v2599
      %v2632 = vadd.f32 %v80, %v2600
      %v2633 = vadd.f32 %v81, %v2601
      %v2634 = vadd.f32 %v82, %v2602
      %v2635 = vadd.f32 %v83, %v2603
      %v2636 = vadd.f32 %v84, %v2604
      %v2637 = vadd.f32 %v85, %v2605
      %v2638 = vadd.f32 %v86, %v2606
      %v2639 = vadd.f32 %v87, %v2607
      %v2640 = vadd.f32 %v88, %v2608
      %v2641 = vadd.f32 %v89, %v2609
      %v2642 = vadd.f32 %v90, %v2610
      %v2643 = vadd.f32 %v91, %v2611
      %v2644 = vadd.f32 %v92, %v2612
      %v2645 = vadd.f32 %v93, %v2613
      %v2646 = vadd.f32 %v94, %v2614
      %v2647 = vadd.f32 %v95, %v2615
      %v2648 = vadd.f32 %v96, %v2616
      %v2649 = vadd.f32 %v97, %v2617
      %v2650 = vstv %s2361
      %v2651 = vmul.f32 %v2650, %v26
      %v2652 = vadd.f32 %v25, %v2651
      %v2653 = vpack.c.bf16 %v2619, %v2618
      %v2654 = vpack.c.bf16 %v2621, %v2620
      %v2655 = vpack.c.bf16 %v2623, %v2622
      %v2656 = vpack.c.bf16 %v2625, %v2624
      %v2657 = vpack.c.bf16 %v2627, %v2626
      %v2658 = vpack.c.bf16 %v2629, %v2628
      %v2659 = vpack.c.bf16 %v2631, %v2630
      %v2660 = vpack.c.bf16 %v2633, %v2632
      %v2661 = vpack.c.bf16 %v2635, %v2634
      %v2662 = vpack.c.bf16 %v2637, %v2636
      %v2663 = vpack.c.bf16 %v2639, %v2638
      %v2664 = vpack.c.bf16 %v2641, %v2640
      %v2665 = vpack.c.bf16 %v2643, %v2642
      %v2666 = vpack.c.bf16 %v2645, %v2644
      %v2667 = vpack.c.bf16 %v2647, %v2646
      %v2668 = vpack.c.bf16 %v2649, %v2648
      %v2670 = vlaneseq
      %v2671 = vshrl.u32 %v2670, 7
      %v2672 = vsub.s32 0, %v2671
      %v2673 = vrot.slane %v2652, %v2672
      %2675 = vmatprep.subr.bf16.mxu0 0
      %2676 = vmatpush1.bf16.msra.mxu0 %v196
      %2677 = vmatprep.subr.bf16.mxu0 0
      %2678 = vmatpush1.bf16.msra.mxu0 %v195
      %2679 = vmatprep.subr.bf16.mxu0 0
      %2680 = vmatpush1.bf16.msra.mxu0 %v194
      %2681 = vmatprep.subr.bf16.mxu0 0
      %2682 = vmatpush1.bf16.msra.mxu0 %v193
      %2683 = vmatprep.subr.bf16.mxu0 0
      %2684 = vmatpush1.bf16.msra.mxu0 %v192
      %2685 = vmatprep.subr.bf16.mxu0 0
      %2686 = vmatpush1.bf16.msra.mxu0 %v191
      %2687 = vmatprep.subr.bf16.mxu0 0
      %2688 = vmatpush1.bf16.msra.mxu0 %v190
      %2689 = vmatprep.subr.bf16.mxu0 0
      %2690 = vmatpush1.bf16.msra.mxu0 %v189
      %2691 = vmatprep.subr.bf16.mxu0 0
      %2692 = vmatpush2.bf16.msra.mxu0 0
      %2693 = vmatprep.subr.bf16.mxu0 0
      %2694 = vmatpush2.bf16.msra.mxu0 0
      %2695 = vmatprep.subr.bf16.mxu0 0
      %2696 = vmatpush2.bf16.msra.mxu0 0
      %2697 = vmatprep.subr.bf16.mxu0 0
      %2698 = vmatpush2.bf16.msra.mxu0 0
      %2699 = vmatprep.subr.bf16.mxu0 0
      %2700 = vmatpush2.bf16.msra.mxu0 0
      %2701 = vmatprep.subr.bf16.mxu0 0
      %2702 = vmatpush2.bf16.msra.mxu0 0
      %2703 = vmatprep.subr.bf16.mxu0 0
      %2704 = vmatpush2.bf16.msra.mxu0 0
      %2705 = vmatprep.subr.bf16.mxu0 0
      %2706 = vmatpush2.bf16.msra.mxu0 0
      %2707 = vmatprep.mubr.bf16.mxu0 0
      %2708 = vmatmul.mubr.bf16.gmra.mxu0 %v2653
      %v2709 = vpop.f32.mrf.mxu0
      %v2710 = vadd.f32 %v2673, %v2709
      %v2711 = vpop.f32.mrf.mxu0
      %v2712 = vpop.f32.mrf.mxu0
      %v2713 = vadd.f32 %v2673, %v2712
      %v2714 = vpop.f32.mrf.mxu0
      %2715 = vmatprep.mubr.bf16.mxu0 0
      %2716 = vmatmul.mubr.bf16.gmra.mxu0 %v2654
      %v2717 = vpop.f32.mrf.mxu0
      %v2718 = vadd.f32 %v2673, %v2717
      %v2719 = vpop.f32.mrf.mxu0
      %v2720 = vpop.f32.mrf.mxu0
      %v2721 = vadd.f32 %v2673, %v2720
      %v2722 = vpop.f32.mrf.mxu0
      %2723 = vmatprep.mubr.bf16.mxu0 0
      %2724 = vmatmul.mubr.bf16.gmra.mxu0 %v2655
      %v2725 = vpop.f32.mrf.mxu0
      %v2726 = vadd.f32 %v2673, %v2725
      %v2727 = vpop.f32.mrf.mxu0
      %v2728 = vpop.f32.mrf.mxu0
      %v2729 = vadd.f32 %v2673, %v2728
      %v2730 = vpop.f32.mrf.mxu0
      %2731 = vmatprep.mubr.bf16.mxu0 0
      %2732 = vmatmul.mubr.bf16.gmra.mxu0 %v2656
      %v2733 = vpop.f32.mrf.mxu0
      %v2734 = vadd.f32 %v2673, %v2733
      %v2735 = vpop.f32.mrf.mxu0
      %v2736 = vpop.f32.mrf.mxu0
      %v2737 = vadd.f32 %v2673, %v2736
      %v2738 = vpop.f32.mrf.mxu0
      %2739 = vmatprep.mubr.bf16.mxu0 0
      %2740 = vmatmul.mubr.bf16.gmra.mxu0 %v2657
      %v2741 = vpop.f32.mrf.mxu0
      %v2742 = vadd.f32 %v2673, %v2741
      %v2743 = vpop.f32.mrf.mxu0
      %v2744 = vpop.f32.mrf.mxu0
      %v2745 = vadd.f32 %v2673, %v2744
      %v2746 = vpop.f32.mrf.mxu0
      %2747 = vmatprep.mubr.bf16.mxu0 0
      %2748 = vmatmul.mubr.bf16.gmra.mxu0 %v2658
      %v2749 = vpop.f32.mrf.mxu0
      %v2750 = vadd.f32 %v2673, %v2749
      %v2751 = vpop.f32.mrf.mxu0
      %v2752 = vpop.f32.mrf.mxu0
      %v2753 = vadd.f32 %v2673, %v2752
      %v2754 = vpop.f32.mrf.mxu0
      %2755 = vmatprep.mubr.bf16.mxu0 0
      %2756 = vmatmul.mubr.bf16.gmra.mxu0 %v2659
      %v2757 = vpop.f32.mrf.mxu0
      %v2758 = vadd.f32 %v2673, %v2757
      %v2759 = vpop.f32.mrf.mxu0
      %v2760 = vpop.f32.mrf.mxu0
      %v2761 = vadd.f32 %v2673, %v2760
      %v2762 = vpop.f32.mrf.mxu0
      %2763 = vmatprep.mubr.bf16.mxu0 0
      %2764 = vmatmul.mubr.bf16.gmra.mxu0 %v2660
      %v2765 = vpop.f32.mrf.mxu0
      %v2766 = vadd.f32 %v2673, %v2765
      %v2767 = vpop.f32.mrf.mxu0
      %v2768 = vpop.f32.mrf.mxu0
      %v2769 = vadd.f32 %v2673, %v2768
      %v2770 = vpop.f32.mrf.mxu0
      %2771 = vmatprep.mubr.bf16.mxu0 0
      %2772 = vmatmul.mubr.bf16.gmra.mxu0 %v2661
      %v2773 = vpop.f32.mrf.mxu0
      %v2774 = vadd.f32 %v2673, %v2773
      %v2775 = vpop.f32.mrf.mxu0
      %v2776 = vpop.f32.mrf.mxu0
      %v2777 = vadd.f32 %v2673, %v2776
      %v2778 = vpop.f32.mrf.mxu0
      %2779 = vmatprep.mubr.bf16.mxu0 0
      %2780 = vmatmul.mubr.bf16.gmra.mxu0 %v2662
      %v2781 = vpop.f32.mrf.mxu0
      %v2782 = vadd.f32 %v2673, %v2781
      %v2783 = vpop.f32.mrf.mxu0
      %v2784 = vpop.f32.mrf.mxu0
      %v2785 = vadd.f32 %v2673, %v2784
      %v2786 = vpop.f32.mrf.mxu0
      %2787 = vmatprep.mubr.bf16.mxu0 0
      %2788 = vmatmul.mubr.bf16.gmra.mxu0 %v2663
      %v2789 = vpop.f32.mrf.mxu0
      %v2790 = vadd.f32 %v2673, %v2789
      %v2791 = vpop.f32.mrf.mxu0
      %v2792 = vpop.f32.mrf.mxu0
      %v2793 = vadd.f32 %v2673, %v2792
      %v2794 = vpop.f32.mrf.mxu0
      %2795 = vmatprep.mubr.bf16.mxu0 0
      %2796 = vmatmul.mubr.bf16.gmra.mxu0 %v2664
      %v2797 = vpop.f32.mrf.mxu0
      %v2798 = vadd.f32 %v2673, %v2797
      %v2799 = vpop.f32.mrf.mxu0
      %v2800 = vpop.f32.mrf.mxu0
      %v2801 = vadd.f32 %v2673, %v2800
      %v2802 = vpop.f32.mrf.mxu0
      %2803 = vmatprep.mubr.bf16.mxu0 0
      %2804 = vmatmul.mubr.bf16.gmra.mxu0 %v2665
      %v2805 = vpop.f32.mrf.mxu0
      %v2806 = vadd.f32 %v2673, %v2805
      %v2807 = vpop.f32.mrf.mxu0
      %v2808 = vpop.f32.mrf.mxu0
      %v2809 = vadd.f32 %v2673, %v2808
      %v2810 = vpop.f32.mrf.mxu0
      %2811 = vmatprep.mubr.bf16.mxu0 0
      %2812 = vmatmul.mubr.bf16.gmra.mxu0 %v2666
      %v2813 = vpop.f32.mrf.mxu0
      %v2814 = vadd.f32 %v2673, %v2813
      %v2815 = vpop.f32.mrf.mxu0
      %v2816 = vpop.f32.mrf.mxu0
      %v2817 = vadd.f32 %v2673, %v2816
      %v2818 = vpop.f32.mrf.mxu0
      %2819 = vmatprep.mubr.bf16.mxu0 0
      %2820 = vmatmul.mubr.bf16.gmra.mxu0 %v2667
      %v2821 = vpop.f32.mrf.mxu0
      %v2822 = vadd.f32 %v2673, %v2821
      %v2823 = vpop.f32.mrf.mxu0
      %v2824 = vpop.f32.mrf.mxu0
      %v2825 = vadd.f32 %v2673, %v2824
      %v2826 = vpop.f32.mrf.mxu0
      %2827 = vmatprep.mubr.bf16.mxu0 0
      %2828 = vmatmul.mubr.bf16.gmra.mxu0 %v2668
      %v2829 = vpop.f32.mrf.mxu0
      %v2830 = vadd.f32 %v2673, %v2829
      %v2831 = vpop.f32.mrf.mxu0
      %v2832 = vpop.f32.mrf.mxu0
      %v2833 = vadd.f32 %v2673, %v2832
      %v2834 = vpop.f32.mrf.mxu0
      %2835 = vdwg.mxu0
      %v2836 = vtanh.pop %v2710
      %v2837 = vtanh.pop %v2713
      %v2838 = vtanh.pop %v2718
      %v2839 = vtanh.pop %v2721
      %v2840 = vtanh.pop %v2726
      %v2841 = vtanh.pop %v2729
      %v2842 = vtanh.pop %v2734
      %v2843 = vtanh.pop %v2737
      %v2844 = vtanh.pop %v2742
      %v2845 = vtanh.pop %v2745
      %v2846 = vtanh.pop %v2750
      %v2847 = vtanh.pop %v2753
      %v2848 = vtanh.pop %v2758
      %v2849 = vtanh.pop %v2761
      %v2850 = vtanh.pop %v2766
      %v2851 = vtanh.pop %v2769
      %v2852 = vtanh.pop %v2774
      %v2853 = vtanh.pop %v2777
      %v2854 = vtanh.pop %v2782
      %v2855 = vtanh.pop %v2785
      %v2856 = vtanh.pop %v2790
      %v2857 = vtanh.pop %v2793
      %v2858 = vtanh.pop %v2798
      %v2859 = vtanh.pop %v2801
      %v2860 = vtanh.pop %v2806
      %v2861 = vtanh.pop %v2809
      %v2862 = vtanh.pop %v2814
      %v2863 = vtanh.pop %v2817
      %v2864 = vtanh.pop %v2822
      %v2865 = vtanh.pop %v2825
      %v2866 = vtanh.pop %v2830
      %v2867 = vtanh.pop %v2833
      %v2868 = vpack.c.bf16 %v2837, %v2836
      %v2869 = vpack.c.bf16 %v2839, %v2838
      %v2870 = vpack.c.bf16 %v2841, %v2840
      %v2871 = vpack.c.bf16 %v2843, %v2842
      %v2872 = vpack.c.bf16 %v2845, %v2844
      %v2873 = vpack.c.bf16 %v2847, %v2846
      %v2874 = vpack.c.bf16 %v2849, %v2848
      %v2875 = vpack.c.bf16 %v2851, %v2850
      %v2876 = vpack.c.bf16 %v2853, %v2852
      %v2877 = vpack.c.bf16 %v2855, %v2854
      %v2878 = vpack.c.bf16 %v2857, %v2856
      %v2879 = vpack.c.bf16 %v2859, %v2858
      %v2880 = vpack.c.bf16 %v2861, %v2860
      %v2881 = vpack.c.bf16 %v2863, %v2862
      %v2882 = vpack.c.bf16 %v2865, %v2864
      %v2883 = vpack.c.bf16 %v2867, %v2866
      %2884 = vmatprep.subr.bf16.mxu0 0
      %2885 = vmatpush1.bf16.msra.mxu0 %v459
      %2886 = vmatprep.subr.bf16.mxu0 0
      %2887 = vmatpush1.bf16.msra.mxu0 %v458
      %2888 = vmatprep.subr.bf16.mxu0 0
      %2889 = vmatpush1.bf16.msra.mxu0 %v457
      %2890 = vmatprep.subr.bf16.mxu0 0
      %2891 = vmatpush1.bf16.msra.mxu0 %v456
      %2892 = vmatprep.subr.bf16.mxu0 0
      %2893 = vmatpush1.bf16.msra.mxu0 %v455
      %2894 = vmatprep.subr.bf16.mxu0 0
      %2895 = vmatpush1.bf16.msra.mxu0 %v454
      %2896 = vmatprep.subr.bf16.mxu0 0
      %2897 = vmatpush1.bf16.msra.mxu0 %v453
      %2898 = vmatprep.subr.bf16.mxu0 0
      %2899 = vmatpush1.bf16.msra.mxu0 %v452
      %2900 = vmatprep.subr.bf16.mxu0 0
      %2901 = vmatpush2.bf16.msra.mxu0 0
      %2902 = vmatprep.subr.bf16.mxu0 0
      %2903 = vmatpush2.bf16.msra.mxu0 0
      %2904 = vmatprep.subr.bf16.mxu0 0
      %2905 = vmatpush2.bf16.msra.mxu0 0
      %2906 = vmatprep.subr.bf16.mxu0 0
      %2907 = vmatpush2.bf16.msra.mxu0 0
      %2908 = vmatprep.subr.bf16.mxu0 0
      %2909 = vmatpush2.bf16.msra.mxu0 0
      %2910 = vmatprep.subr.bf16.mxu0 0
      %2911 = vmatpush2.bf16.msra.mxu0 0
      %2912 = vmatprep.subr.bf16.mxu0 0
      %2913 = vmatpush2.bf16.msra.mxu0 0
      %2914 = vmatprep.subr.bf16.mxu0 0
      %2915 = vmatpush2.bf16.msra.mxu0 0
      %2916 = vmatprep.mubr.bf16.mxu0 0
      %2917 = vmatmul.mubr.bf16.gmra.mxu0 %v2868
      %v2918 = vpop.f32.mrf.mxu0
      %v2919 = vadd.f32 %v418, %v2918
      %v2920 = vpop.f32.mrf.mxu0
      %v2921 = vpop.f32.mrf.mxu0
      %v2922 = vadd.f32 %v418, %v2921
      %v2923 = vpop.f32.mrf.mxu0
      %2924 = vmatprep.mubr.bf16.mxu0 0
      %2925 = vmatmul.mubr.bf16.gmra.mxu0 %v2869
      %v2926 = vpop.f32.mrf.mxu0
      %v2927 = vadd.f32 %v418, %v2926
      %v2928 = vpop.f32.mrf.mxu0
      %v2929 = vpop.f32.mrf.mxu0
      %v2930 = vadd.f32 %v418, %v2929
      %v2931 = vpop.f32.mrf.mxu0
      %2932 = vmatprep.mubr.bf16.mxu0 0
      %2933 = vmatmul.mubr.bf16.gmra.mxu0 %v2870
      %v2934 = vpop.f32.mrf.mxu0
      %v2935 = vadd.f32 %v418, %v2934
      %v2936 = vpop.f32.mrf.mxu0
      %v2937 = vpop.f32.mrf.mxu0
      %v2938 = vadd.f32 %v418, %v2937
      %v2939 = vpop.f32.mrf.mxu0
      %2940 = vmatprep.mubr.bf16.mxu0 0
      %2941 = vmatmul.mubr.bf16.gmra.mxu0 %v2871
      %v2942 = vpop.f32.mrf.mxu0
      %v2943 = vadd.f32 %v418, %v2942
      %v2944 = vpop.f32.mrf.mxu0
      %v2945 = vpop.f32.mrf.mxu0
      %v2946 = vadd.f32 %v418, %v2945
      %v2947 = vpop.f32.mrf.mxu0
      %2948 = vmatprep.mubr.bf16.mxu0 0
      %2949 = vmatmul.mubr.bf16.gmra.mxu0 %v2872
      %v2950 = vpop.f32.mrf.mxu0
      %v2951 = vadd.f32 %v418, %v2950
      %v2952 = vpop.f32.mrf.mxu0
      %v2953 = vpop.f32.mrf.mxu0
      %v2954 = vadd.f32 %v418, %v2953
      %v2955 = vpop.f32.mrf.mxu0
      %2956 = vmatprep.mubr.bf16.mxu0 0
      %2957 = vmatmul.mubr.bf16.gmra.mxu0 %v2873
      %v2958 = vpop.f32.mrf.mxu0
      %v2959 = vadd.f32 %v418, %v2958
      %v2960 = vpop.f32.mrf.mxu0
      %v2961 = vpop.f32.mrf.mxu0
      %v2962 = vadd.f32 %v418, %v2961
      %v2963 = vpop.f32.mrf.mxu0
      %2964 = vmatprep.mubr.bf16.mxu0 0
      %2965 = vmatmul.mubr.bf16.gmra.mxu0 %v2874
      %v2966 = vpop.f32.mrf.mxu0
      %v2967 = vadd.f32 %v418, %v2966
      %v2968 = vpop.f32.mrf.mxu0
      %v2969 = vpop.f32.mrf.mxu0
      %v2970 = vadd.f32 %v418, %v2969
      %v2971 = vpop.f32.mrf.mxu0
      %2972 = vmatprep.mubr.bf16.mxu0 0
      %2973 = vmatmul.mubr.bf16.gmra.mxu0 %v2875
      %v2974 = vpop.f32.mrf.mxu0
      %v2975 = vadd.f32 %v418, %v2974
      %v2976 = vpop.f32.mrf.mxu0
      %v2977 = vpop.f32.mrf.mxu0
      %v2978 = vadd.f32 %v418, %v2977
      %v2979 = vpop.f32.mrf.mxu0
      %2980 = vmatprep.mubr.bf16.mxu0 0
      %2981 = vmatmul.mubr.bf16.gmra.mxu0 %v2876
      %v2982 = vpop.f32.mrf.mxu0
      %v2983 = vadd.f32 %v418, %v2982
      %v2984 = vpop.f32.mrf.mxu0
      %v2985 = vpop.f32.mrf.mxu0
      %v2986 = vadd.f32 %v418, %v2985
      %v2987 = vpop.f32.mrf.mxu0
      %2988 = vmatprep.mubr.bf16.mxu0 0
      %2989 = vmatmul.mubr.bf16.gmra.mxu0 %v2877
      %v2990 = vpop.f32.mrf.mxu0
      %v2991 = vadd.f32 %v418, %v2990
      %v2992 = vpop.f32.mrf.mxu0
      %v2993 = vpop.f32.mrf.mxu0
      %v2994 = vadd.f32 %v418, %v2993
      %v2995 = vpop.f32.mrf.mxu0
      %2996 = vmatprep.mubr.bf16.mxu0 0
      %2997 = vmatmul.mubr.bf16.gmra.mxu0 %v2878
      %v2998 = vpop.f32.mrf.mxu0
      %v2999 = vadd.f32 %v418, %v2998
      %v3000 = vpop.f32.mrf.mxu0
      %v3001 = vpop.f32.mrf.mxu0
      %v3002 = vadd.f32 %v418, %v3001
      %v3003 = vpop.f32.mrf.mxu0
      %3004 = vmatprep.mubr.bf16.mxu0 0
      %3005 = vmatmul.mubr.bf16.gmra.mxu0 %v2879
      %v3006 = vpop.f32.mrf.mxu0
      %v3007 = vadd.f32 %v418, %v3006
      %v3008 = vpop.f32.mrf.mxu0
      %v3009 = vpop.f32.mrf.mxu0
      %v3010 = vadd.f32 %v418, %v3009
      %v3011 = vpop.f32.mrf.mxu0
      %3012 = vmatprep.mubr.bf16.mxu0 0
      %3013 = vmatmul.mubr.bf16.gmra.mxu0 %v2880
      %v3014 = vpop.f32.mrf.mxu0
      %v3015 = vadd.f32 %v418, %v3014
      %v3016 = vpop.f32.mrf.mxu0
      %v3017 = vpop.f32.mrf.mxu0
      %v3018 = vadd.f32 %v418, %v3017
      %v3019 = vpop.f32.mrf.mxu0
      %3020 = vmatprep.mubr.bf16.mxu0 0
      %3021 = vmatmul.mubr.bf16.gmra.mxu0 %v2881
      %v3022 = vpop.f32.mrf.mxu0
      %v3023 = vadd.f32 %v418, %v3022
      %v3024 = vpop.f32.mrf.mxu0
      %v3025 = vpop.f32.mrf.mxu0
      %v3026 = vadd.f32 %v418, %v3025
      %v3027 = vpop.f32.mrf.mxu0
      %3028 = vmatprep.mubr.bf16.mxu0 0
      %3029 = vmatmul.mubr.bf16.gmra.mxu0 %v2882
      %v3030 = vpop.f32.mrf.mxu0
      %v3031 = vadd.f32 %v418, %v3030
      %v3032 = vpop.f32.mrf.mxu0
      %v3033 = vpop.f32.mrf.mxu0
      %v3034 = vadd.f32 %v418, %v3033
      %v3035 = vpop.f32.mrf.mxu0
      %3036 = vmatprep.mubr.bf16.mxu0 0
      %3037 = vmatmul.mubr.bf16.gmra.mxu0 %v2883
      %v3038 = vpop.f32.mrf.mxu0
      %v3039 = vadd.f32 %v418, %v3038
      %v3040 = vpop.f32.mrf.mxu0
      %v3041 = vpop.f32.mrf.mxu0
      %v3042 = vadd.f32 %v418, %v3041
      %v3043 = vpop.f32.mrf.mxu0
      %3044 = vdwg.mxu0
      %v3045 = vpack.c.bf16 %v2922, %v2919
      %v3046 = vpack.c.bf16 %v2930, %v2927
      %v3047 = vpack.c.bf16 %v2938, %v2935
      %v3048 = vpack.c.bf16 %v2946, %v2943
      %v3049 = vpack.c.bf16 %v2954, %v2951
      %v3050 = vpack.c.bf16 %v2962, %v2959
      %v3051 = vpack.c.bf16 %v2970, %v2967
      %v3052 = vpack.c.bf16 %v2978, %v2975
      %v3053 = vpack.c.bf16 %v2986, %v2983
      %v3054 = vpack.c.bf16 %v2994, %v2991
      %v3055 = vpack.c.bf16 %v3002, %v2999
      %v3056 = vpack.c.bf16 %v3010, %v3007
      %v3057 = vpack.c.bf16 %v3018, %v3015
      %v3058 = vpack.c.bf16 %v3026, %v3023
      %v3059 = vpack.c.bf16 %v3034, %v3031
      %v3060 = vpack.c.bf16 %v3042, %v3039
      %s3061 = sadd.f32 %s99, 0.0625
      %v3062 = vmul.f32 %v646, 0.17789221
      %v3063 = vmul.f32 %v647, 0.17789221
      %v3064 = vmul.f32 %v648, 0.17789221
      %v3065 = vmul.f32 %v649, 0.17789221
      %v3066 = vmul.f32 %v650, 0.17789221
      %v3067 = vmul.f32 %v651, 0.17789221
      %v3068 = vmul.f32 %v652, 0.17789221
      %v3069 = vmul.f32 %v653, 0.17789221
      %v3070 = vmul.f32 %v654, 0.17789221
      %v3071 = vmul.f32 %v655, 0.17789221
      %v3072 = vmul.f32 %v656, 0.17789221
      %v3073 = vmul.f32 %v657, 0.17789221
      %v3074 = vmul.f32 %v658, 0.17789221
      %v3075 = vmul.f32 %v659, 0.17789221
      %v3076 = vmul.f32 %v660, 0.17789221
      %v3077 = vmul.f32 %v661, 0.17789221
      %v3078 = vmul.f32 %v662, 0.17789221
      %v3079 = vmul.f32 %v663, 0.17789221
      %v3080 = vmul.f32 %v664, 0.17789221
      %v3081 = vmul.f32 %v665, 0.17789221
      %v3082 = vmul.f32 %v666, 0.17789221
      %v3083 = vmul.f32 %v667, 0.17789221
      %v3084 = vmul.f32 %v668, 0.17789221
      %v3085 = vmul.f32 %v669, 0.17789221
      %v3086 = vmul.f32 %v670, 0.17789221
      %v3087 = vmul.f32 %v671, 0.17789221
      %v3088 = vmul.f32 %v672, 0.17789221
      %v3089 = vmul.f32 %v673, 0.17789221
      %v3090 = vmul.f32 %v674, 0.17789221
      %v3091 = vmul.f32 %v675, 0.17789221
      %v3092 = vmul.f32 %v676, 0.17789221
      %v3093 = vmul.f32 %v677, 0.17789221
      %v3094 = vmul.f32 %v1186, -0.6723485
      %v3095 = vmul.f32 %v1187, -0.6723485
      %v3096 = vmul.f32 %v1188, -0.6723485
      %v3097 = vmul.f32 %v1189, -0.6723485
      %v3098 = vmul.f32 %v1190, -0.6723485
      %v3099 = vmul.f32 %v1191, -0.6723485
      %v3100 = vmul.f32 %v1192, -0.6723485
      %v3101 = vmul.f32 %v1193, -0.6723485
      %v3102 = vmul.f32 %v1194, -0.6723485
      %v3103 = vmul.f32 %v1195, -0.6723485
      %v3104 = vmul.f32 %v1196, -0.6723485
      %v3105 = vmul.f32 %v1197, -0.6723485
      %v3106 = vmul.f32 %v1198, -0.6723485
      %v3107 = vmul.f32 %v1199, -0.6723485
      %v3108 = vmul.f32 %v1200, -0.6723485
      %v3109 = vmul.f32 %v1201, -0.6723485
      %v3110 = vmul.f32 %v1202, -0.6723485
      %v3111 = vmul.f32 %v1203, -0.6723485
      %v3112 = vmul.f32 %v1204, -0.6723485
      %v3113 = vmul.f32 %v1205, -0.6723485
      %v3114 = vmul.f32 %v1206, -0.6723485
      %v3115 = vmul.f32 %v1207, -0.6723485
      %v3116 = vmul.f32 %v1208, -0.6723485
      %v3117 = vmul.f32 %v1209, -0.6723485
      %v3118 = vmul.f32 %v1210, -0.6723485
      %v3119 = vmul.f32 %v1211, -0.6723485
      %v3120 = vmul.f32 %v1212, -0.6723485
      %v3121 = vmul.f32 %v1213, -0.6723485
      %v3122 = vmul.f32 %v1214, -0.6723485
      %v3123 = vmul.f32 %v1215, -0.6723485
      %v3124 = vmul.f32 %v1216, -0.6723485
      %v3125 = vmul.f32 %v1217, -0.6723485
      %v3126 = vadd.f32 %v3062, %v3094
      %v3127 = vadd.f32 %v3063, %v3095
      %v3128 = vadd.f32 %v3064, %v3096
      %v3129 = vadd.f32 %v3065, %v3097
      %v3130 = vadd.f32 %v3066, %v3098
      %v3131 = vadd.f32 %v3067, %v3099
      %v3132 = vadd.f32 %v3068, %v3100
      %v3133 = vadd.f32 %v3069, %v3101
      %v3134 = vadd.f32 %v3070, %v3102
      %v3135 = vadd.f32 %v3071, %v3103
      %v3136 = vadd.f32 %v3072, %v3104
      %v3137 = vadd.f32 %v3073, %v3105
      %v3138 = vadd.f32 %v3074, %v3106
      %v3139 = vadd.f32 %v3075, %v3107
      %v3140 = vadd.f32 %v3076, %v3108
      %v3141 = vadd.f32 %v3077, %v3109
      %v3142 = vadd.f32 %v3078, %v3110
      %v3143 = vadd.f32 %v3079, %v3111
      %v3144 = vadd.f32 %v3080, %v3112
      %v3145 = vadd.f32 %v3081, %v3113
      %v3146 = vadd.f32 %v3082, %v3114
      %v3147 = vadd.f32 %v3083, %v3115
      %v3148 = vadd.f32 %v3084, %v3116
      %v3149 = vadd.f32 %v3085, %v3117
      %v3150 = vadd.f32 %v3086, %v3118
      %v3151 = vadd.f32 %v3087, %v3119
      %v3152 = vadd.f32 %v3088, %v3120
      %v3153 = vadd.f32 %v3089, %v3121
      %v3154 = vadd.f32 %v3090, %v3122
      %v3155 = vadd.f32 %v3091, %v3123
      %v3156 = vadd.f32 %v3092, %v3124
      %v3157 = vadd.f32 %v3093, %v3125
      %v3158 = vmul.f32 %v1822, 0.5566514
      %v3159 = vmul.f32 %v1823, 0.5566514
      %v3160 = vmul.f32 %v1824, 0.5566514
      %v3161 = vmul.f32 %v1825, 0.5566514
      %v3162 = vmul.f32 %v1826, 0.5566514
      %v3163 = vmul.f32 %v1827, 0.5566514
      %v3164 = vmul.f32 %v1828, 0.5566514
      %v3165 = vmul.f32 %v1829, 0.5566514
      %v3166 = vmul.f32 %v1830, 0.5566514
      %v3167 = vmul.f32 %v1831, 0.5566514
      %v3168 = vmul.f32 %v1832, 0.5566514
      %v3169 = vmul.f32 %v1833, 0.5566514
      %v3170 = vmul.f32 %v1834, 0.5566514
      %v3171 = vmul.f32 %v1835, 0.5566514
      %v3172 = vmul.f32 %v1836, 0.5566514
      %v3173 = vmul.f32 %v1837, 0.5566514
      %v3174 = vmul.f32 %v1838, 0.5566514
      %v3175 = vmul.f32 %v1839, 0.5566514
      %v3176 = vmul.f32 %v1840, 0.5566514
      %v3177 = vmul.f32 %v1841, 0.5566514
      %v3178 = vmul.f32 %v1842, 0.5566514
      %v3179 = vmul.f32 %v1843, 0.5566514
      %v3180 = vmul.f32 %v1844, 0.5566514
      %v3181 = vmul.f32 %v1845, 0.5566514
      %v3182 = vmul.f32 %v1846, 0.5566514
      %v3183 = vmul.f32 %v1847, 0.5566514
      %v3184 = vmul.f32 %v1848, 0.5566514
      %v3185 = vmul.f32 %v1849, 0.5566514
      %v3186 = vmul.f32 %v1850, 0.5566514
      %v3187 = vmul.f32 %v1851, 0.5566514
      %v3188 = vmul.f32 %v1852, 0.5566514
      %v3189 = vmul.f32 %v1853, 0.5566514
      %v3190 = vadd.f32 %v3126, %v3158
      %v3191 = vadd.f32 %v3127, %v3159
      %v3192 = vadd.f32 %v3128, %v3160
      %v3193 = vadd.f32 %v3129, %v3161
      %v3194 = vadd.f32 %v3130, %v3162
      %v3195 = vadd.f32 %v3131, %v3163
      %v3196 = vadd.f32 %v3132, %v3164
      %v3197 = vadd.f32 %v3133, %v3165
      %v3198 = vadd.f32 %v3134, %v3166
      %v3199 = vadd.f32 %v3135, %v3167
      %v3200 = vadd.f32 %v3136, %v3168
      %v3201 = vadd.f32 %v3137, %v3169
      %v3202 = vadd.f32 %v3138, %v3170
      %v3203 = vadd.f32 %v3139, %v3171
      %v3204 = vadd.f32 %v3140, %v3172
      %v3205 = vadd.f32 %v3141, %v3173
      %v3206 = vadd.f32 %v3142, %v3174
      %v3207 = vadd.f32 %v3143, %v3175
      %v3208 = vadd.f32 %v3144, %v3176
      %v3209 = vadd.f32 %v3145, %v3177
      %v3210 = vadd.f32 %v3146, %v3178
      %v3211 = vadd.f32 %v3147, %v3179
      %v3212 = vadd.f32 %v3148, %v3180
      %v3213 = vadd.f32 %v3149, %v3181
      %v3214 = vadd.f32 %v3150, %v3182
      %v3215 = vadd.f32 %v3151, %v3183
      %v3216 = vadd.f32 %v3152, %v3184
      %v3217 = vadd.f32 %v3153, %v3185
      %v3218 = vadd.f32 %v3154, %v3186
      %v3219 = vadd.f32 %v3155, %v3187
      %v3220 = vadd.f32 %v3156, %v3188
      %v3221 = vadd.f32 %v3157, %v3189
      %v3222 = vmul.f32 %v2522, 0.017400568
      %v3223 = vmul.f32 %v2523, 0.017400568
      %v3224 = vmul.f32 %v2524, 0.017400568
      %v3225 = vmul.f32 %v2525, 0.017400568
      %v3226 = vmul.f32 %v2526, 0.017400568
      %v3227 = vmul.f32 %v2527, 0.017400568
      %v3228 = vmul.f32 %v2528, 0.017400568
      %v3229 = vmul.f32 %v2529, 0.017400568
      %v3230 = vmul.f32 %v2530, 0.017400568
      %v3231 = vmul.f32 %v2531, 0.017400568
      %v3232 = vmul.f32 %v2532, 0.017400568
      %v3233 = vmul.f32 %v2533, 0.017400568
      %v3234 = vmul.f32 %v2534, 0.017400568
      %v3235 = vmul.f32 %v2535, 0.017400568
      %v3236 = vmul.f32 %v2536, 0.017400568
      %v3237 = vmul.f32 %v2537, 0.017400568
      %v3238 = vmul.f32 %v2538, 0.017400568
      %v3239 = vmul.f32 %v2539, 0.017400568
      %v3240 = vmul.f32 %v2540, 0.017400568
      %v3241 = vmul.f32 %v2541, 0.017400568
      %v3242 = vmul.f32 %v2542, 0.017400568
      %v3243 = vmul.f32 %v2543, 0.017400568
      %v3244 = vmul.f32 %v2544, 0.017400568
      %v3245 = vmul.f32 %v2545, 0.017400568
      %v3246 = vmul.f32 %v2546, 0.017400568
      %v3247 = vmul.f32 %v2547, 0.017400568
      %v3248 = vmul.f32 %v2548, 0.017400568
      %v3249 = vmul.f32 %v2549, 0.017400568
      %v3250 = vmul.f32 %v2550, 0.017400568
      %v3251 = vmul.f32 %v2551, 0.017400568
      %v3252 = vmul.f32 %v2552, 0.017400568
      %v3253 = vmul.f32 %v2553, 0.017400568
      %v3254 = vadd.f32 %v3190, %v3222
      %v3255 = vadd.f32 %v3191, %v3223
      %v3256 = vadd.f32 %v3192, %v3224
      %v3257 = vadd.f32 %v3193, %v3225
      %v3258 = vadd.f32 %v3194, %v3226
      %v3259 = vadd.f32 %v3195, %v3227
      %v3260 = vadd.f32 %v3196, %v3228
      %v3261 = vadd.f32 %v3197, %v3229
      %v3262 = vadd.f32 %v3198, %v3230
      %v3263 = vadd.f32 %v3199, %v3231
      %v3264 = vadd.f32 %v3200, %v3232
      %v3265 = vadd.f32 %v3201, %v3233
      %v3266 = vadd.f32 %v3202, %v3234
      %v3267 = vadd.f32 %v3203, %v3235
      %v3268 = vadd.f32 %v3204, %v3236
      %v3269 = vadd.f32 %v3205, %v3237
      %v3270 = vadd.f32 %v3206, %v3238
      %v3271 = vadd.f32 %v3207, %v3239
      %v3272 = vadd.f32 %v3208, %v3240
      %v3273 = vadd.f32 %v3209, %v3241
      %v3274 = vadd.f32 %v3210, %v3242
      %v3275 = vadd.f32 %v3211, %v3243
      %v3276 = vadd.f32 %v3212, %v3244
      %v3277 = vadd.f32 %v3213, %v3245
      %v3278 = vadd.f32 %v3214, %v3246
      %v3279 = vadd.f32 %v3215, %v3247
      %v3280 = vadd.f32 %v3216, %v3248
      %v3281 = vadd.f32 %v3217, %v3249
      %v3282 = vadd.f32 %v3218, %v3250
      %v3283 = vadd.f32 %v3219, %v3251
      %v3284 = vadd.f32 %v3220, %v3252
      %v3285 = vadd.f32 %v3221, %v3253
      %v3286 = vunpack.c.l.bf16 %v3045
      %v3287 = vunpack.c.h.bf16 %v3045
      %v3288 = vunpack.c.l.bf16 %v3046
      %v3289 = vunpack.c.h.bf16 %v3046
      %v3290 = vunpack.c.l.bf16 %v3047
      %v3291 = vunpack.c.h.bf16 %v3047
      %v3292 = vunpack.c.l.bf16 %v3048
      %v3293 = vunpack.c.h.bf16 %v3048
      %v3294 = vunpack.c.l.bf16 %v3049
      %v3295 = vunpack.c.h.bf16 %v3049
      %v3296 = vunpack.c.l.bf16 %v3050
      %v3297 = vunpack.c.h.bf16 %v3050
      %v3298 = vunpack.c.l.bf16 %v3051
      %v3299 = vunpack.c.h.bf16 %v3051
      %v3300 = vunpack.c.l.bf16 %v3052
      %v3301 = vunpack.c.h.bf16 %v3052
      %v3302 = vunpack.c.l.bf16 %v3053
      %v3303 = vunpack.c.h.bf16 %v3053
      %v3304 = vunpack.c.l.bf16 %v3054
      %v3305 = vunpack.c.h.bf16 %v3054
      %v3306 = vunpack.c.l.bf16 %v3055
      %v3307 = vunpack.c.h.bf16 %v3055
      %v3308 = vunpack.c.l.bf16 %v3056
      %v3309 = vunpack.c.h.bf16 %v3056
      %v3310 = vunpack.c.l.bf16 %v3057
      %v3311 = vunpack.c.h.bf16 %v3057
      %v3312 = vunpack.c.l.bf16 %v3058
      %v3313 = vunpack.c.h.bf16 %v3058
      %v3314 = vunpack.c.l.bf16 %v3059
      %v3315 = vunpack.c.h.bf16 %v3059
      %v3316 = vunpack.c.l.bf16 %v3060
      %v3317 = vunpack.c.h.bf16 %v3060
      %v3318 = vmul.f32 %v3286, -0.017095707
      %v3319 = vmul.f32 %v3287, -0.017095707
      %v3320 = vmul.f32 %v3288, -0.017095707
      %v3321 = vmul.f32 %v3289, -0.017095707
      %v3322 = vmul.f32 %v3290, -0.017095707
      %v3323 = vmul.f32 %v3291, -0.017095707
      %v3324 = vmul.f32 %v3292, -0.017095707
      %v3325 = vmul.f32 %v3293, -0.017095707
      %v3326 = vmul.f32 %v3294, -0.017095707
      %v3327 = vmul.f32 %v3295, -0.017095707
      %v3328 = vmul.f32 %v3296, -0.017095707
      %v3329 = vmul.f32 %v3297, -0.017095707
      %v3330 = vmul.f32 %v3298, -0.017095707
      %v3331 = vmul.f32 %v3299, -0.017095707
      %v3332 = vmul.f32 %v3300, -0.017095707
      %v3333 = vmul.f32 %v3301, -0.017095707
      %v3334 = vmul.f32 %v3302, -0.017095707
      %v3335 = vmul.f32 %v3303, -0.017095707
      %v3336 = vmul.f32 %v3304, -0.017095707
      %v3337 = vmul.f32 %v3305, -0.017095707
      %v3338 = vmul.f32 %v3306, -0.017095707
      %v3339 = vmul.f32 %v3307, -0.017095707
      %v3340 = vmul.f32 %v3308, -0.017095707
      %v3341 = vmul.f32 %v3309, -0.017095707
      %v3342 = vmul.f32 %v3310, -0.017095707
      %v3343 = vmul.f32 %v3311, -0.017095707
      %v3344 = vmul.f32 %v3312, -0.017095707
      %v3345 = vmul.f32 %v3313, -0.017095707
      %v3346 = vmul.f32 %v3314, -0.017095707
      %v3347 = vmul.f32 %v3315, -0.017095707
      %v3348 = vmul.f32 %v3316, -0.017095707
      %v3349 = vmul.f32 %v3317, -0.017095707
      %v3350 = vadd.f32 %v3254, %v3318
      %v3351 = vadd.f32 %v3255, %v3319
      %v3352 = vadd.f32 %v3256, %v3320
      %v3353 = vadd.f32 %v3257, %v3321
      %v3354 = vadd.f32 %v3258, %v3322
      %v3355 = vadd.f32 %v3259, %v3323
      %v3356 = vadd.f32 %v3260, %v3324
      %v3357 = vadd.f32 %v3261, %v3325
      %v3358 = vadd.f32 %v3262, %v3326
      %v3359 = vadd.f32 %v3263, %v3327
      %v3360 = vadd.f32 %v3264, %v3328
      %v3361 = vadd.f32 %v3265, %v3329
      %v3362 = vadd.f32 %v3266, %v3330
      %v3363 = vadd.f32 %v3267, %v3331
      %v3364 = vadd.f32 %v3268, %v3332
      %v3365 = vadd.f32 %v3269, %v3333
      %v3366 = vadd.f32 %v3270, %v3334
      %v3367 = vadd.f32 %v3271, %v3335
      %v3368 = vadd.f32 %v3272, %v3336
      %v3369 = vadd.f32 %v3273, %v3337
      %v3370 = vadd.f32 %v3274, %v3338
      %v3371 = vadd.f32 %v3275, %v3339
      %v3372 = vadd.f32 %v3276, %v3340
      %v3373 = vadd.f32 %v3277, %v3341
      %v3374 = vadd.f32 %v3278, %v3342
      %v3375 = vadd.f32 %v3279, %v3343
      %v3376 = vadd.f32 %v3280, %v3344
      %v3377 = vadd.f32 %v3281, %v3345
      %v3378 = vadd.f32 %v3282, %v3346
      %v3379 = vadd.f32 %v3283, %v3347
      %v3380 = vadd.f32 %v3284, %v3348
      %v3381 = vadd.f32 %v3285, %v3349
      %v3382 = vadd.f32 %v66, %v3350
      %v3383 = vadd.f32 %v67, %v3351
      %v3384 = vadd.f32 %v68, %v3352
      %v3385 = vadd.f32 %v69, %v3353
      %v3386 = vadd.f32 %v70, %v3354
      %v3387 = vadd.f32 %v71, %v3355
      %v3388 = vadd.f32 %v72, %v3356
      %v3389 = vadd.f32 %v73, %v3357
      %v3390 = vadd.f32 %v74, %v3358
      %v3391 = vadd.f32 %v75, %v3359
      %v3392 = vadd.f32 %v76, %v3360
      %v3393 = vadd.f32 %v77, %v3361
      %v3394 = vadd.f32 %v78, %v3362
      %v3395 = vadd.f32 %v79, %v3363
      %v3396 = vadd.f32 %v80, %v3364
      %v3397 = vadd.f32 %v81, %v3365
      %v3398 = vadd.f32 %v82, %v3366
      %v3399 = vadd.f32 %v83, %v3367
      %v3400 = vadd.f32 %v84, %v3368
      %v3401 = vadd.f32 %v85, %v3369
      %v3402 = vadd.f32 %v86, %v3370
      %v3403 = vadd.f32 %v87, %v3371
      %v3404 = vadd.f32 %v88, %v3372
      %v3405 = vadd.f32 %v89, %v3373
      %v3406 = vadd.f32 %v90, %v3374
      %v3407 = vadd.f32 %v91, %v3375
      %v3408 = vadd.f32 %v92, %v3376
      %v3409 = vadd.f32 %v93, %v3377
      %v3410 = vadd.f32 %v94, %v3378
      %v3411 = vadd.f32 %v95, %v3379
      %v3412 = vadd.f32 %v96, %v3380
      %v3413 = vadd.f32 %v97, %v3381
      %v3414 = vstv %s3061
      %v3415 = vmul.f32 %v3414, %v26
      %v3416 = vadd.f32 %v25, %v3415
      %v3417 = vpack.c.bf16 %v3383, %v3382
      %v3418 = vpack.c.bf16 %v3385, %v3384
      %v3419 = vpack.c.bf16 %v3387, %v3386
      %v3420 = vpack.c.bf16 %v3389, %v3388
      %v3421 = vpack.c.bf16 %v3391, %v3390
      %v3422 = vpack.c.bf16 %v3393, %v3392
      %v3423 = vpack.c.bf16 %v3395, %v3394
      %v3424 = vpack.c.bf16 %v3397, %v3396
      %v3425 = vpack.c.bf16 %v3399, %v3398
      %v3426 = vpack.c.bf16 %v3401, %v3400
      %v3427 = vpack.c.bf16 %v3403, %v3402
      %v3428 = vpack.c.bf16 %v3405, %v3404
      %v3429 = vpack.c.bf16 %v3407, %v3406
      %v3430 = vpack.c.bf16 %v3409, %v3408
      %v3431 = vpack.c.bf16 %v3411, %v3410
      %v3432 = vpack.c.bf16 %v3413, %v3412
      %v3434 = vlaneseq
      %v3435 = vshrl.u32 %v3434, 7
      %v3436 = vsub.s32 0, %v3435
      %v3437 = vrot.slane %v3416, %v3436
      %3439 = vmatprep.subr.bf16.mxu0 0
      %3440 = vmatpush1.bf16.msra.mxu0 %v196
      %3441 = vmatprep.subr.bf16.mxu0 0
      %3442 = vmatpush1.bf16.msra.mxu0 %v195
      %3443 = vmatprep.subr.bf16.mxu0 0
      %3444 = vmatpush1.bf16.msra.mxu0 %v194
      %3445 = vmatprep.subr.bf16.mxu0 0
      %3446 = vmatpush1.bf16.msra.mxu0 %v193
      %3447 = vmatprep.subr.bf16.mxu0 0
      %3448 = vmatpush1.bf16.msra.mxu0 %v192
      %3449 = vmatprep.subr.bf16.mxu0 0
      %3450 = vmatpush1.bf16.msra.mxu0 %v191
      %3451 = vmatprep.subr.bf16.mxu0 0
      %3452 = vmatpush1.bf16.msra.mxu0 %v190
      %3453 = vmatprep.subr.bf16.mxu0 0
      %3454 = vmatpush1.bf16.msra.mxu0 %v189
      %3455 = vmatprep.subr.bf16.mxu0 0
      %3456 = vmatpush2.bf16.msra.mxu0 0
      %3457 = vmatprep.subr.bf16.mxu0 0
      %3458 = vmatpush2.bf16.msra.mxu0 0
      %3459 = vmatprep.subr.bf16.mxu0 0
      %3460 = vmatpush2.bf16.msra.mxu0 0
      %3461 = vmatprep.subr.bf16.mxu0 0
      %3462 = vmatpush2.bf16.msra.mxu0 0
      %3463 = vmatprep.subr.bf16.mxu0 0
      %3464 = vmatpush2.bf16.msra.mxu0 0
      %3465 = vmatprep.subr.bf16.mxu0 0
      %3466 = vmatpush2.bf16.msra.mxu0 0
      %3467 = vmatprep.subr.bf16.mxu0 0
      %3468 = vmatpush2.bf16.msra.mxu0 0
      %3469 = vmatprep.subr.bf16.mxu0 0
      %3470 = vmatpush2.bf16.msra.mxu0 0
      %3471 = vmatprep.mubr.bf16.mxu0 0
      %3472 = vmatmul.mubr.bf16.gmra.mxu0 %v3417
      %v3473 = vpop.f32.mrf.mxu0
      %v3474 = vadd.f32 %v3437, %v3473
      %v3475 = vpop.f32.mrf.mxu0
      %v3476 = vpop.f32.mrf.mxu0
      %v3477 = vadd.f32 %v3437, %v3476
      %v3478 = vpop.f32.mrf.mxu0
      %3479 = vmatprep.mubr.bf16.mxu0 0
      %3480 = vmatmul.mubr.bf16.gmra.mxu0 %v3418
      %v3481 = vpop.f32.mrf.mxu0
      %v3482 = vadd.f32 %v3437, %v3481
      %v3483 = vpop.f32.mrf.mxu0
      %v3484 = vpop.f32.mrf.mxu0
      %v3485 = vadd.f32 %v3437, %v3484
      %v3486 = vpop.f32.mrf.mxu0
      %3487 = vmatprep.mubr.bf16.mxu0 0
      %3488 = vmatmul.mubr.bf16.gmra.mxu0 %v3419
      %v3489 = vpop.f32.mrf.mxu0
      %v3490 = vadd.f32 %v3437, %v3489
      %v3491 = vpop.f32.mrf.mxu0
      %v3492 = vpop.f32.mrf.mxu0
      %v3493 = vadd.f32 %v3437, %v3492
      %v3494 = vpop.f32.mrf.mxu0
      %3495 = vmatprep.mubr.bf16.mxu0 0
      %3496 = vmatmul.mubr.bf16.gmra.mxu0 %v3420
      %v3497 = vpop.f32.mrf.mxu0
      %v3498 = vadd.f32 %v3437, %v3497
      %v3499 = vpop.f32.mrf.mxu0
      %v3500 = vpop.f32.mrf.mxu0
      %v3501 = vadd.f32 %v3437, %v3500
      %v3502 = vpop.f32.mrf.mxu0
      %3503 = vmatprep.mubr.bf16.mxu0 0
      %3504 = vmatmul.mubr.bf16.gmra.mxu0 %v3421
      %v3505 = vpop.f32.mrf.mxu0
      %v3506 = vadd.f32 %v3437, %v3505
      %v3507 = vpop.f32.mrf.mxu0
      %v3508 = vpop.f32.mrf.mxu0
      %v3509 = vadd.f32 %v3437, %v3508
      %v3510 = vpop.f32.mrf.mxu0
      %3511 = vmatprep.mubr.bf16.mxu0 0
      %3512 = vmatmul.mubr.bf16.gmra.mxu0 %v3422
      %v3513 = vpop.f32.mrf.mxu0
      %v3514 = vadd.f32 %v3437, %v3513
      %v3515 = vpop.f32.mrf.mxu0
      %v3516 = vpop.f32.mrf.mxu0
      %v3517 = vadd.f32 %v3437, %v3516
      %v3518 = vpop.f32.mrf.mxu0
      %3519 = vmatprep.mubr.bf16.mxu0 0
      %3520 = vmatmul.mubr.bf16.gmra.mxu0 %v3423
      %v3521 = vpop.f32.mrf.mxu0
      %v3522 = vadd.f32 %v3437, %v3521
      %v3523 = vpop.f32.mrf.mxu0
      %v3524 = vpop.f32.mrf.mxu0
      %v3525 = vadd.f32 %v3437, %v3524
      %v3526 = vpop.f32.mrf.mxu0
      %3527 = vmatprep.mubr.bf16.mxu0 0
      %3528 = vmatmul.mubr.bf16.gmra.mxu0 %v3424
      %v3529 = vpop.f32.mrf.mxu0
      %v3530 = vadd.f32 %v3437, %v3529
      %v3531 = vpop.f32.mrf.mxu0
      %v3532 = vpop.f32.mrf.mxu0
      %v3533 = vadd.f32 %v3437, %v3532
      %v3534 = vpop.f32.mrf.mxu0
      %3535 = vmatprep.mubr.bf16.mxu0 0
      %3536 = vmatmul.mubr.bf16.gmra.mxu0 %v3425
      %v3537 = vpop.f32.mrf.mxu0
      %v3538 = vadd.f32 %v3437, %v3537
      %v3539 = vpop.f32.mrf.mxu0
      %v3540 = vpop.f32.mrf.mxu0
      %v3541 = vadd.f32 %v3437, %v3540
      %v3542 = vpop.f32.mrf.mxu0
      %3543 = vmatprep.mubr.bf16.mxu0 0
      %3544 = vmatmul.mubr.bf16.gmra.mxu0 %v3426
      %v3545 = vpop.f32.mrf.mxu0
      %v3546 = vadd.f32 %v3437, %v3545
      %v3547 = vpop.f32.mrf.mxu0
      %v3548 = vpop.f32.mrf.mxu0
      %v3549 = vadd.f32 %v3437, %v3548
      %v3550 = vpop.f32.mrf.mxu0
      %3551 = vmatprep.mubr.bf16.mxu0 0
      %3552 = vmatmul.mubr.bf16.gmra.mxu0 %v3427
      %v3553 = vpop.f32.mrf.mxu0
      %v3554 = vadd.f32 %v3437, %v3553
      %v3555 = vpop.f32.mrf.mxu0
      %v3556 = vpop.f32.mrf.mxu0
      %v3557 = vadd.f32 %v3437, %v3556
      %v3558 = vpop.f32.mrf.mxu0
      %3559 = vmatprep.mubr.bf16.mxu0 0
      %3560 = vmatmul.mubr.bf16.gmra.mxu0 %v3428
      %v3561 = vpop.f32.mrf.mxu0
      %v3562 = vadd.f32 %v3437, %v3561
      %v3563 = vpop.f32.mrf.mxu0
      %v3564 = vpop.f32.mrf.mxu0
      %v3565 = vadd.f32 %v3437, %v3564
      %v3566 = vpop.f32.mrf.mxu0
      %3567 = vmatprep.mubr.bf16.mxu0 0
      %3568 = vmatmul.mubr.bf16.gmra.mxu0 %v3429
      %v3569 = vpop.f32.mrf.mxu0
      %v3570 = vadd.f32 %v3437, %v3569
      %v3571 = vpop.f32.mrf.mxu0
      %v3572 = vpop.f32.mrf.mxu0
      %v3573 = vadd.f32 %v3437, %v3572
      %v3574 = vpop.f32.mrf.mxu0
      %3575 = vmatprep.mubr.bf16.mxu0 0
      %3576 = vmatmul.mubr.bf16.gmra.mxu0 %v3430
      %v3577 = vpop.f32.mrf.mxu0
      %v3578 = vadd.f32 %v3437, %v3577
      %v3579 = vpop.f32.mrf.mxu0
      %v3580 = vpop.f32.mrf.mxu0
      %v3581 = vadd.f32 %v3437, %v3580
      %v3582 = vpop.f32.mrf.mxu0
      %3583 = vmatprep.mubr.bf16.mxu0 0
      %3584 = vmatmul.mubr.bf16.gmra.mxu0 %v3431
      %v3585 = vpop.f32.mrf.mxu0
      %v3586 = vadd.f32 %v3437, %v3585
      %v3587 = vpop.f32.mrf.mxu0
      %v3588 = vpop.f32.mrf.mxu0
      %v3589 = vadd.f32 %v3437, %v3588
      %v3590 = vpop.f32.mrf.mxu0
      %3591 = vmatprep.mubr.bf16.mxu0 0
      %3592 = vmatmul.mubr.bf16.gmra.mxu0 %v3432
      %v3593 = vpop.f32.mrf.mxu0
      %v3594 = vadd.f32 %v3437, %v3593
      %v3595 = vpop.f32.mrf.mxu0
      %v3596 = vpop.f32.mrf.mxu0
      %v3597 = vadd.f32 %v3437, %v3596
      %v3598 = vpop.f32.mrf.mxu0
      %3599 = vdwg.mxu0
      %v3600 = vtanh.pop %v3474
      %v3601 = vtanh.pop %v3477
      %v3602 = vtanh.pop %v3482
      %v3603 = vtanh.pop %v3485
      %v3604 = vtanh.pop %v3490
      %v3605 = vtanh.pop %v3493
      %v3606 = vtanh.pop %v3498
      %v3607 = vtanh.pop %v3501
      %v3608 = vtanh.pop %v3506
      %v3609 = vtanh.pop %v3509
      %v3610 = vtanh.pop %v3514
      %v3611 = vtanh.pop %v3517
      %v3612 = vtanh.pop %v3522
      %v3613 = vtanh.pop %v3525
      %v3614 = vtanh.pop %v3530
      %v3615 = vtanh.pop %v3533
      %v3616 = vtanh.pop %v3538
      %v3617 = vtanh.pop %v3541
      %v3618 = vtanh.pop %v3546
      %v3619 = vtanh.pop %v3549
      %v3620 = vtanh.pop %v3554
      %v3621 = vtanh.pop %v3557
      %v3622 = vtanh.pop %v3562
      %v3623 = vtanh.pop %v3565
      %v3624 = vtanh.pop %v3570
      %v3625 = vtanh.pop %v3573
      %v3626 = vtanh.pop %v3578
      %v3627 = vtanh.pop %v3581
      %v3628 = vtanh.pop %v3586
      %v3629 = vtanh.pop %v3589
      %v3630 = vtanh.pop %v3594
      %v3631 = vtanh.pop %v3597
      %v3632 = vpack.c.bf16 %v3601, %v3600
      %v3633 = vpack.c.bf16 %v3603, %v3602
      %v3634 = vpack.c.bf16 %v3605, %v3604
      %v3635 = vpack.c.bf16 %v3607, %v3606
      %v3636 = vpack.c.bf16 %v3609, %v3608
      %v3637 = vpack.c.bf16 %v3611, %v3610
      %v3638 = vpack.c.bf16 %v3613, %v3612
      %v3639 = vpack.c.bf16 %v3615, %v3614
      %v3640 = vpack.c.bf16 %v3617, %v3616
      %v3641 = vpack.c.bf16 %v3619, %v3618
      %v3642 = vpack.c.bf16 %v3621, %v3620
      %v3643 = vpack.c.bf16 %v3623, %v3622
      %v3644 = vpack.c.bf16 %v3625, %v3624
      %v3645 = vpack.c.bf16 %v3627, %v3626
      %v3646 = vpack.c.bf16 %v3629, %v3628
      %v3647 = vpack.c.bf16 %v3631, %v3630
      %3648 = vmatprep.subr.bf16.mxu0 0
      %3649 = vmatpush1.bf16.msra.mxu0 %v459
      %3650 = vmatprep.subr.bf16.mxu0 0
      %3651 = vmatpush1.bf16.msra.mxu0 %v458
      %3652 = vmatprep.subr.bf16.mxu0 0
      %3653 = vmatpush1.bf16.msra.mxu0 %v457
      %3654 = vmatprep.subr.bf16.mxu0 0
      %3655 = vmatpush1.bf16.msra.mxu0 %v456
      %3656 = vmatprep.subr.bf16.mxu0 0
      %3657 = vmatpush1.bf16.msra.mxu0 %v455
      %3658 = vmatprep.subr.bf16.mxu0 0
      %3659 = vmatpush1.bf16.msra.mxu0 %v454
      %3660 = vmatprep.subr.bf16.mxu0 0
      %3661 = vmatpush1.bf16.msra.mxu0 %v453
      %3662 = vmatprep.subr.bf16.mxu0 0
      %3663 = vmatpush1.bf16.msra.mxu0 %v452
      %3664 = vmatprep.subr.bf16.mxu0 0
      %3665 = vmatpush2.bf16.msra.mxu0 0
      %3666 = vmatprep.subr.bf16.mxu0 0
      %3667 = vmatpush2.bf16.msra.mxu0 0
      %3668 = vmatprep.subr.bf16.mxu0 0
      %3669 = vmatpush2.bf16.msra.mxu0 0
      %3670 = vmatprep.subr.bf16.mxu0 0
      %3671 = vmatpush2.bf16.msra.mxu0 0
      %3672 = vmatprep.subr.bf16.mxu0 0
      %3673 = vmatpush2.bf16.msra.mxu0 0
      %3674 = vmatprep.subr.bf16.mxu0 0
      %3675 = vmatpush2.bf16.msra.mxu0 0
      %3676 = vmatprep.subr.bf16.mxu0 0
      %3677 = vmatpush2.bf16.msra.mxu0 0
      %3678 = vmatprep.subr.bf16.mxu0 0
      %3679 = vmatpush2.bf16.msra.mxu0 0
      %3680 = vmatprep.mubr.bf16.mxu0 0
      %3681 = vmatmul.mubr.bf16.gmra.mxu0 %v3632
      %v3682 = vpop.f32.mrf.mxu0
      %v3683 = vadd.f32 %v418, %v3682
      %v3684 = vpop.f32.mrf.mxu0
      %v3685 = vpop.f32.mrf.mxu0
      %v3686 = vadd.f32 %v418, %v3685
      %v3687 = vpop.f32.mrf.mxu0
      %3688 = vmatprep.mubr.bf16.mxu0 0
      %3689 = vmatmul.mubr.bf16.gmra.mxu0 %v3633
      %v3690 = vpop.f32.mrf.mxu0
      %v3691 = vadd.f32 %v418, %v3690
      %v3692 = vpop.f32.mrf.mxu0
      %v3693 = vpop.f32.mrf.mxu0
      %v3694 = vadd.f32 %v418, %v3693
      %v3695 = vpop.f32.mrf.mxu0
      %3696 = vmatprep.mubr.bf16.mxu0 0
      %3697 = vmatmul.mubr.bf16.gmra.mxu0 %v3634
      %v3698 = vpop.f32.mrf.mxu0
      %v3699 = vadd.f32 %v418, %v3698
      %v3700 = vpop.f32.mrf.mxu0
      %v3701 = vpop.f32.mrf.mxu0
      %v3702 = vadd.f32 %v418, %v3701
      %v3703 = vpop.f32.mrf.mxu0
      %3704 = vmatprep.mubr.bf16.mxu0 0
      %3705 = vmatmul.mubr.bf16.gmra.mxu0 %v3635
      %v3706 = vpop.f32.mrf.mxu0
      %v3707 = vadd.f32 %v418, %v3706
      %v3708 = vpop.f32.mrf.mxu0
      %v3709 = vpop.f32.mrf.mxu0
      %v3710 = vadd.f32 %v418, %v3709
      %v3711 = vpop.f32.mrf.mxu0
      %3712 = vmatprep.mubr.bf16.mxu0 0
      %3713 = vmatmul.mubr.bf16.gmra.mxu0 %v3636
      %v3714 = vpop.f32.mrf.mxu0
      %v3715 = vadd.f32 %v418, %v3714
      %v3716 = vpop.f32.mrf.mxu0
      %v3717 = vpop.f32.mrf.mxu0
      %v3718 = vadd.f32 %v418, %v3717
      %v3719 = vpop.f32.mrf.mxu0
      %3720 = vmatprep.mubr.bf16.mxu0 0
      %3721 = vmatmul.mubr.bf16.gmra.mxu0 %v3637
      %v3722 = vpop.f32.mrf.mxu0
      %v3723 = vadd.f32 %v418, %v3722
      %v3724 = vpop.f32.mrf.mxu0
      %v3725 = vpop.f32.mrf.mxu0
      %v3726 = vadd.f32 %v418, %v3725
      %v3727 = vpop.f32.mrf.mxu0
      %3728 = vmatprep.mubr.bf16.mxu0 0
      %3729 = vmatmul.mubr.bf16.gmra.mxu0 %v3638
      %v3730 = vpop.f32.mrf.mxu0
      %v3731 = vadd.f32 %v418, %v3730
      %v3732 = vpop.f32.mrf.mxu0
      %v3733 = vpop.f32.mrf.mxu0
      %v3734 = vadd.f32 %v418, %v3733
      %v3735 = vpop.f32.mrf.mxu0
      %3736 = vmatprep.mubr.bf16.mxu0 0
      %3737 = vmatmul.mubr.bf16.gmra.mxu0 %v3639
      %v3738 = vpop.f32.mrf.mxu0
      %v3739 = vadd.f32 %v418, %v3738
      %v3740 = vpop.f32.mrf.mxu0
      %v3741 = vpop.f32.mrf.mxu0
      %v3742 = vadd.f32 %v418, %v3741
      %v3743 = vpop.f32.mrf.mxu0
      %3744 = vmatprep.mubr.bf16.mxu0 0
      %3745 = vmatmul.mubr.bf16.gmra.mxu0 %v3640
      %v3746 = vpop.f32.mrf.mxu0
      %v3747 = vadd.f32 %v418, %v3746
      %v3748 = vpop.f32.mrf.mxu0
      %v3749 = vpop.f32.mrf.mxu0
      %v3750 = vadd.f32 %v418, %v3749
      %v3751 = vpop.f32.mrf.mxu0
      %3752 = vmatprep.mubr.bf16.mxu0 0
      %3753 = vmatmul.mubr.bf16.gmra.mxu0 %v3641
      %v3754 = vpop.f32.mrf.mxu0
      %v3755 = vadd.f32 %v418, %v3754
      %v3756 = vpop.f32.mrf.mxu0
      %v3757 = vpop.f32.mrf.mxu0
      %v3758 = vadd.f32 %v418, %v3757
      %v3759 = vpop.f32.mrf.mxu0
      %3760 = vmatprep.mubr.bf16.mxu0 0
      %3761 = vmatmul.mubr.bf16.gmra.mxu0 %v3642
      %v3762 = vpop.f32.mrf.mxu0
      %v3763 = vadd.f32 %v418, %v3762
      %v3764 = vpop.f32.mrf.mxu0
      %v3765 = vpop.f32.mrf.mxu0
      %v3766 = vadd.f32 %v418, %v3765
      %v3767 = vpop.f32.mrf.mxu0
      %3768 = vmatprep.mubr.bf16.mxu0 0
      %3769 = vmatmul.mubr.bf16.gmra.mxu0 %v3643
      %v3770 = vpop.f32.mrf.mxu0
      %v3771 = vadd.f32 %v418, %v3770
      %v3772 = vpop.f32.mrf.mxu0
      %v3773 = vpop.f32.mrf.mxu0
      %v3774 = vadd.f32 %v418, %v3773
      %v3775 = vpop.f32.mrf.mxu0
      %3776 = vmatprep.mubr.bf16.mxu0 0
      %3777 = vmatmul.mubr.bf16.gmra.mxu0 %v3644
      %v3778 = vpop.f32.mrf.mxu0
      %v3779 = vadd.f32 %v418, %v3778
      %v3780 = vpop.f32.mrf.mxu0
      %v3781 = vpop.f32.mrf.mxu0
      %v3782 = vadd.f32 %v418, %v3781
      %v3783 = vpop.f32.mrf.mxu0
      %3784 = vmatprep.mubr.bf16.mxu0 0
      %3785 = vmatmul.mubr.bf16.gmra.mxu0 %v3645
      %v3786 = vpop.f32.mrf.mxu0
      %v3787 = vadd.f32 %v418, %v3786
      %v3788 = vpop.f32.mrf.mxu0
      %v3789 = vpop.f32.mrf.mxu0
      %v3790 = vadd.f32 %v418, %v3789
      %v3791 = vpop.f32.mrf.mxu0
      %3792 = vmatprep.mubr.bf16.mxu0 0
      %3793 = vmatmul.mubr.bf16.gmra.mxu0 %v3646
      %v3794 = vpop.f32.mrf.mxu0
      %v3795 = vadd.f32 %v418, %v3794
      %v3796 = vpop.f32.mrf.mxu0
      %v3797 = vpop.f32.mrf.mxu0
      %v3798 = vadd.f32 %v418, %v3797
      %v3799 = vpop.f32.mrf.mxu0
      %3800 = vmatprep.mubr.bf16.mxu0 0
      %3801 = vmatmul.mubr.bf16.gmra.mxu0 %v3647
      %v3802 = vpop.f32.mrf.mxu0
      %v3803 = vadd.f32 %v418, %v3802
      %v3804 = vpop.f32.mrf.mxu0
      %v3805 = vpop.f32.mrf.mxu0
      %v3806 = vadd.f32 %v418, %v3805
      %v3807 = vpop.f32.mrf.mxu0
      %3808 = vdwg.mxu0
      %v3809 = vmul.f32 %v646, 0.0056966147
      %v3810 = vmul.f32 %v647, 0.0056966147
      %v3811 = vmul.f32 %v648, 0.0056966147
      %v3812 = vmul.f32 %v649, 0.0056966147
      %v3813 = vmul.f32 %v650, 0.0056966147
      %v3814 = vmul.f32 %v651, 0.0056966147
      %v3815 = vmul.f32 %v652, 0.0056966147
      %v3816 = vmul.f32 %v653, 0.0056966147
      %v3817 = vmul.f32 %v654, 0.0056966147
      %v3818 = vmul.f32 %v655, 0.0056966147
      %v3819 = vmul.f32 %v656, 0.0056966147
      %v3820 = vmul.f32 %v657, 0.0056966147
      %v3821 = vmul.f32 %v658, 0.0056966147
      %v3822 = vmul.f32 %v659, 0.0056966147
      %v3823 = vmul.f32 %v660, 0.0056966147
      %v3824 = vmul.f32 %v661, 0.0056966147
      %v3825 = vmul.f32 %v662, 0.0056966147
      %v3826 = vmul.f32 %v663, 0.0056966147
      %v3827 = vmul.f32 %v664, 0.0056966147
      %v3828 = vmul.f32 %v665, 0.0056966147
      %v3829 = vmul.f32 %v666, 0.0056966147
      %v3830 = vmul.f32 %v667, 0.0056966147
      %v3831 = vmul.f32 %v668, 0.0056966147
      %v3832 = vmul.f32 %v669, 0.0056966147
      %v3833 = vmul.f32 %v670, 0.0056966147
      %v3834 = vmul.f32 %v671, 0.0056966147
      %v3835 = vmul.f32 %v672, 0.0056966147
      %v3836 = vmul.f32 %v673, 0.0056966147
      %v3837 = vmul.f32 %v674, 0.0056966147
      %v3838 = vmul.f32 %v675, 0.0056966147
      %v3839 = vmul.f32 %v676, 0.0056966147
      %v3840 = vmul.f32 %v677, 0.0056966147
      %v3841 = vmul.f32 %v1822, 0.028077269
      %v3842 = vmul.f32 %v1823, 0.028077269
      %v3843 = vmul.f32 %v1824, 0.028077269
      %v3844 = vmul.f32 %v1825, 0.028077269
      %v3845 = vmul.f32 %v1826, 0.028077269
      %v3846 = vmul.f32 %v1827, 0.028077269
      %v3847 = vmul.f32 %v1828, 0.028077269
      %v3848 = vmul.f32 %v1829, 0.028077269
      %v3849 = vmul.f32 %v1830, 0.028077269
      %v3850 = vmul.f32 %v1831, 0.028077269
      %v3851 = vmul.f32 %v1832, 0.028077269
      %v3852 = vmul.f32 %v1833, 0.028077269
      %v3853 = vmul.f32 %v1834, 0.028077269
      %v3854 = vmul.f32 %v1835, 0.028077269
      %v3855 = vmul.f32 %v1836, 0.028077269
      %v3856 = vmul.f32 %v1837, 0.028077269
      %v3857 = vmul.f32 %v1838, 0.028077269
      %v3858 = vmul.f32 %v1839, 0.028077269
      %v3859 = vmul.f32 %v1840, 0.028077269
      %v3860 = vmul.f32 %v1841, 0.028077269
      %v3861 = vmul.f32 %v1842, 0.028077269
      %v3862 = vmul.f32 %v1843, 0.028077269
      %v3863 = vmul.f32 %v1844, 0.028077269
      %v3864 = vmul.f32 %v1845, 0.028077269
      %v3865 = vmul.f32 %v1846, 0.028077269
      %v3866 = vmul.f32 %v1847, 0.028077269
      %v3867 = vmul.f32 %v1848, 0.028077269
      %v3868 = vmul.f32 %v1849, 0.028077269
      %v3869 = vmul.f32 %v1850, 0.028077269
      %v3870 = vmul.f32 %v1851, 0.028077269
      %v3871 = vmul.f32 %v1852, 0.028077269
      %v3872 = vmul.f32 %v1853, 0.028077269
      %v3873 = vadd.f32 %v3809, %v3841
      %v3874 = vadd.f32 %v3810, %v3842
      %v3875 = vadd.f32 %v3811, %v3843
      %v3876 = vadd.f32 %v3812, %v3844
      %v3877 = vadd.f32 %v3813, %v3845
      %v3878 = vadd.f32 %v3814, %v3846
      %v3879 = vadd.f32 %v3815, %v3847
      %v3880 = vadd.f32 %v3816, %v3848
      %v3881 = vadd.f32 %v3817, %v3849
      %v3882 = vadd.f32 %v3818, %v3850
      %v3883 = vadd.f32 %v3819, %v3851
      %v3884 = vadd.f32 %v3820, %v3852
      %v3885 = vadd.f32 %v3821, %v3853
      %v3886 = vadd.f32 %v3822, %v3854
      %v3887 = vadd.f32 %v3823, %v3855
      %v3888 = vadd.f32 %v3824, %v3856
      %v3889 = vadd.f32 %v3825, %v3857
      %v3890 = vadd.f32 %v3826, %v3858
      %v3891 = vadd.f32 %v3827, %v3859
      %v3892 = vadd.f32 %v3828, %v3860
      %v3893 = vadd.f32 %v3829, %v3861
      %v3894 = vadd.f32 %v3830, %v3862
      %v3895 = vadd.f32 %v3831, %v3863
      %v3896 = vadd.f32 %v3832, %v3864
      %v3897 = vadd.f32 %v3833, %v3865
      %v3898 = vadd.f32 %v3834, %v3866
      %v3899 = vadd.f32 %v3835, %v3867
      %v3900 = vadd.f32 %v3836, %v3868
      %v3901 = vadd.f32 %v3837, %v3869
      %v3902 = vadd.f32 %v3838, %v3870
      %v3903 = vadd.f32 %v3839, %v3871
      %v3904 = vadd.f32 %v3840, %v3872
      %v3905 = vmul.f32 %v2522, 0.040690105
      %v3906 = vmul.f32 %v2523, 0.040690105
      %v3907 = vmul.f32 %v2524, 0.040690105
      %v3908 = vmul.f32 %v2525, 0.040690105
      %v3909 = vmul.f32 %v2526, 0.040690105
      %v3910 = vmul.f32 %v2527, 0.040690105
      %v3911 = vmul.f32 %v2528, 0.040690105
      %v3912 = vmul.f32 %v2529, 0.040690105
      %v3913 = vmul.f32 %v2530, 0.040690105
      %v3914 = vmul.f32 %v2531, 0.040690105
      %v3915 = vmul.f32 %v2532, 0.040690105
      %v3916 = vmul.f32 %v2533, 0.040690105
      %v3917 = vmul.f32 %v2534, 0.040690105
      %v3918 = vmul.f32 %v2535, 0.040690105
      %v3919 = vmul.f32 %v2536, 0.040690105
      %v3920 = vmul.f32 %v2537, 0.040690105
      %v3921 = vmul.f32 %v2538, 0.040690105
      %v3922 = vmul.f32 %v2539, 0.040690105
      %v3923 = vmul.f32 %v2540, 0.040690105
      %v3924 = vmul.f32 %v2541, 0.040690105
      %v3925 = vmul.f32 %v2542, 0.040690105
      %v3926 = vmul.f32 %v2543, 0.040690105
      %v3927 = vmul.f32 %v2544, 0.040690105
      %v3928 = vmul.f32 %v2545, 0.040690105
      %v3929 = vmul.f32 %v2546, 0.040690105
      %v3930 = vmul.f32 %v2547, 0.040690105
      %v3931 = vmul.f32 %v2548, 0.040690105
      %v3932 = vmul.f32 %v2549, 0.040690105
      %v3933 = vmul.f32 %v2550, 0.040690105
      %v3934 = vmul.f32 %v2551, 0.040690105
      %v3935 = vmul.f32 %v2552, 0.040690105
      %v3936 = vmul.f32 %v2553, 0.040690105
      %v3937 = vadd.f32 %v3873, %v3905
      %v3938 = vadd.f32 %v3874, %v3906
      %v3939 = vadd.f32 %v3875, %v3907
      %v3940 = vadd.f32 %v3876, %v3908
      %v3941 = vadd.f32 %v3877, %v3909
      %v3942 = vadd.f32 %v3878, %v3910
      %v3943 = vadd.f32 %v3879, %v3911
      %v3944 = vadd.f32 %v3880, %v3912
      %v3945 = vadd.f32 %v3881, %v3913
      %v3946 = vadd.f32 %v3882, %v3914
      %v3947 = vadd.f32 %v3883, %v3915
      %v3948 = vadd.f32 %v3884, %v3916
      %v3949 = vadd.f32 %v3885, %v3917
      %v3950 = vadd.f32 %v3886, %v3918
      %v3951 = vadd.f32 %v3887, %v3919
      %v3952 = vadd.f32 %v3888, %v3920
      %v3953 = vadd.f32 %v3889, %v3921
      %v3954 = vadd.f32 %v3890, %v3922
      %v3955 = vadd.f32 %v3891, %v3923
      %v3956 = vadd.f32 %v3892, %v3924
      %v3957 = vadd.f32 %v3893, %v3925
      %v3958 = vadd.f32 %v3894, %v3926
      %v3959 = vadd.f32 %v3895, %v3927
      %v3960 = vadd.f32 %v3896, %v3928
      %v3961 = vadd.f32 %v3897, %v3929
      %v3962 = vadd.f32 %v3898, %v3930
      %v3963 = vadd.f32 %v3899, %v3931
      %v3964 = vadd.f32 %v3900, %v3932
      %v3965 = vadd.f32 %v3901, %v3933
      %v3966 = vadd.f32 %v3902, %v3934
      %v3967 = vadd.f32 %v3903, %v3935
      %v3968 = vadd.f32 %v3904, %v3936
      %v3969 = vmul.f32 %v3286, -0.020148512
      %v3970 = vmul.f32 %v3287, -0.020148512
      %v3971 = vmul.f32 %v3288, -0.020148512
      %v3972 = vmul.f32 %v3289, -0.020148512
      %v3973 = vmul.f32 %v3290, -0.020148512
      %v3974 = vmul.f32 %v3291, -0.020148512
      %v3975 = vmul.f32 %v3292, -0.020148512
      %v3976 = vmul.f32 %v3293, -0.020148512
      %v3977 = vmul.f32 %v3294, -0.020148512
      %v3978 = vmul.f32 %v3295, -0.020148512
      %v3979 = vmul.f32 %v3296, -0.020148512
      %v3980 = vmul.f32 %v3297, -0.020148512
      %v3981 = vmul.f32 %v3298, -0.020148512
      %v3982 = vmul.f32 %v3299, -0.020148512
      %v3983 = vmul.f32 %v3300, -0.020148512
      %v3984 = vmul.f32 %v3301, -0.020148512
      %v3985 = vmul.f32 %v3302, -0.020148512
      %v3986 = vmul.f32 %v3303, -0.020148512
      %v3987 = vmul.f32 %v3304, -0.020148512
      %v3988 = vmul.f32 %v3305, -0.020148512
      %v3989 = vmul.f32 %v3306, -0.020148512
      %v3990 = vmul.f32 %v3307, -0.020148512
      %v3991 = vmul.f32 %v3308, -0.020148512
      %v3992 = vmul.f32 %v3309, -0.020148512
      %v3993 = vmul.f32 %v3310, -0.020148512
      %v3994 = vmul.f32 %v3311, -0.020148512
      %v3995 = vmul.f32 %v3312, -0.020148512
      %v3996 = vmul.f32 %v3313, -0.020148512
      %v3997 = vmul.f32 %v3314, -0.020148512
      %v3998 = vmul.f32 %v3315, -0.020148512
      %v3999 = vmul.f32 %v3316, -0.020148512
      %v4000 = vmul.f32 %v3317, -0.020148512
      %v4001 = vadd.f32 %v3937, %v3969
      %v4002 = vadd.f32 %v3938, %v3970
      %v4003 = vadd.f32 %v3939, %v3971
      %v4004 = vadd.f32 %v3940, %v3972
      %v4005 = vadd.f32 %v3941, %v3973
      %v4006 = vadd.f32 %v3942, %v3974
      %v4007 = vadd.f32 %v3943, %v3975
      %v4008 = vadd.f32 %v3944, %v3976
      %v4009 = vadd.f32 %v3945, %v3977
      %v4010 = vadd.f32 %v3946, %v3978
      %v4011 = vadd.f32 %v3947, %v3979
      %v4012 = vadd.f32 %v3948, %v3980
      %v4013 = vadd.f32 %v3949, %v3981
      %v4014 = vadd.f32 %v3950, %v3982
      %v4015 = vadd.f32 %v3951, %v3983
      %v4016 = vadd.f32 %v3952, %v3984
      %v4017 = vadd.f32 %v3953, %v3985
      %v4018 = vadd.f32 %v3954, %v3986
      %v4019 = vadd.f32 %v3955, %v3987
      %v4020 = vadd.f32 %v3956, %v3988
      %v4021 = vadd.f32 %v3957, %v3989
      %v4022 = vadd.f32 %v3958, %v3990
      %v4023 = vadd.f32 %v3959, %v3991
      %v4024 = vadd.f32 %v3960, %v3992
      %v4025 = vadd.f32 %v3961, %v3993
      %v4026 = vadd.f32 %v3962, %v3994
      %v4027 = vadd.f32 %v3963, %v3995
      %v4028 = vadd.f32 %v3964, %v3996
      %v4029 = vadd.f32 %v3965, %v3997
      %v4030 = vadd.f32 %v3966, %v3998
      %v4031 = vadd.f32 %v3967, %v3999
      %v4032 = vadd.f32 %v3968, %v4000
      %v4033 = vmul.f32 %v3683, 0.008184524
      %v4034 = vmul.f32 %v3686, 0.008184524
      %v4035 = vmul.f32 %v3691, 0.008184524
      %v4036 = vmul.f32 %v3694, 0.008184524
      %v4037 = vmul.f32 %v3699, 0.008184524
      %v4038 = vmul.f32 %v3702, 0.008184524
      %v4039 = vmul.f32 %v3707, 0.008184524
      %v4040 = vmul.f32 %v3710, 0.008184524
      %v4041 = vmul.f32 %v3715, 0.008184524
      %v4042 = vmul.f32 %v3718, 0.008184524
      %v4043 = vmul.f32 %v3723, 0.008184524
      %v4044 = vmul.f32 %v3726, 0.008184524
      %v4045 = vmul.f32 %v3731, 0.008184524
      %v4046 = vmul.f32 %v3734, 0.008184524
      %v4047 = vmul.f32 %v3739, 0.008184524
      %v4048 = vmul.f32 %v3742, 0.008184524
      %v4049 = vmul.f32 %v3747, 0.008184524
      %v4050 = vmul.f32 %v3750, 0.008184524
      %v4051 = vmul.f32 %v3755, 0.008184524
      %v4052 = vmul.f32 %v3758, 0.008184524
      %v4053 = vmul.f32 %v3763, 0.008184524
      %v4054 = vmul.f32 %v3766, 0.008184524
      %v4055 = vmul.f32 %v3771, 0.008184524
      %v4056 = vmul.f32 %v3774, 0.008184524
      %v4057 = vmul.f32 %v3779, 0.008184524
      %v4058 = vmul.f32 %v3782, 0.008184524
      %v4059 = vmul.f32 %v3787, 0.008184524
      %v4060 = vmul.f32 %v3790, 0.008184524
      %v4061 = vmul.f32 %v3795, 0.008184524
      %v4062 = vmul.f32 %v3798, 0.008184524
      %v4063 = vmul.f32 %v3803, 0.008184524
      %v4064 = vmul.f32 %v3806, 0.008184524
      %v4065 = vadd.f32 %v4001, %v4033
      %v4066 = vadd.f32 %v4002, %v4034
      %v4067 = vadd.f32 %v4003, %v4035
      %v4068 = vadd.f32 %v4004, %v4036
      %v4069 = vadd.f32 %v4005, %v4037
      %v4070 = vadd.f32 %v4006, %v4038
      %v4071 = vadd.f32 %v4007, %v4039
      %v4072 = vadd.f32 %v4008, %v4040
      %v4073 = vadd.f32 %v4009, %v4041
      %v4074 = vadd.f32 %v4010, %v4042
      %v4075 = vadd.f32 %v4011, %v4043
      %v4076 = vadd.f32 %v4012, %v4044
      %v4077 = vadd.f32 %v4013, %v4045
      %v4078 = vadd.f32 %v4014, %v4046
      %v4079 = vadd.f32 %v4015, %v4047
      %v4080 = vadd.f32 %v4016, %v4048
      %v4081 = vadd.f32 %v4017, %v4049
      %v4082 = vadd.f32 %v4018, %v4050
      %v4083 = vadd.f32 %v4019, %v4051
      %v4084 = vadd.f32 %v4020, %v4052
      %v4085 = vadd.f32 %v4021, %v4053
      %v4086 = vadd.f32 %v4022, %v4054
      %v4087 = vadd.f32 %v4023, %v4055
      %v4088 = vadd.f32 %v4024, %v4056
      %v4089 = vadd.f32 %v4025, %v4057
      %v4090 = vadd.f32 %v4026, %v4058
      %v4091 = vadd.f32 %v4027, %v4059
      %v4092 = vadd.f32 %v4028, %v4060
      %v4093 = vadd.f32 %v4029, %v4061
      %v4094 = vadd.f32 %v4030, %v4062
      %v4095 = vadd.f32 %v4031, %v4063
      %v4096 = vadd.f32 %v4032, %v4064
      %v4097 = vadd.f32 %v66, %v4065
      %v4098 = vadd.f32 %v67, %v4066
      %v4099 = vadd.f32 %v68, %v4067
      %v4100 = vadd.f32 %v69, %v4068
      %v4101 = vadd.f32 %v70, %v4069
      %v4102 = vadd.f32 %v71, %v4070
      %v4103 = vadd.f32 %v72, %v4071
      %v4104 = vadd.f32 %v73, %v4072
      %v4105 = vadd.f32 %v74, %v4073
      %v4106 = vadd.f32 %v75, %v4074
      %v4107 = vadd.f32 %v76, %v4075
      %v4108 = vadd.f32 %v77, %v4076
      %v4109 = vadd.f32 %v78, %v4077
      %v4110 = vadd.f32 %v79, %v4078
      %v4111 = vadd.f32 %v80, %v4079
      %v4112 = vadd.f32 %v81, %v4080
      %v4113 = vadd.f32 %v82, %v4081
      %v4114 = vadd.f32 %v83, %v4082
      %v4115 = vadd.f32 %v84, %v4083
      %v4116 = vadd.f32 %v85, %v4084
      %v4117 = vadd.f32 %v86, %v4085
      %v4118 = vadd.f32 %v87, %v4086
      %v4119 = vadd.f32 %v88, %v4087
      %v4120 = vadd.f32 %v89, %v4088
      %v4121 = vadd.f32 %v90, %v4089
      %v4122 = vadd.f32 %v91, %v4090
      %v4123 = vadd.f32 %v92, %v4091
      %v4124 = vadd.f32 %v93, %v4092
      %v4125 = vadd.f32 %v94, %v4093
      %v4126 = vadd.f32 %v95, %v4094
      %v4127 = vadd.f32 %v96, %v4095
      %v4128 = vadd.f32 %v97, %v4096
    $region30: #{_odenet_forward_impl.1} parent=1 // loop_footer
      %s65 = sadd.s32 1, %s61
    $region31: #{_odenet_forward_impl.1} parent=1 // loop_footer_branch
      %60 = sbr.rel target = $region27
    $region32: #{_odenet_forward_impl.1} parent=1 // loop_exit
      _
    %4129 = vst [vmem:[#allocation2] sm:$0xff] %v66
    %4130 = vst [vmem:[#allocation2 + $0x8] sm:$0xff] %v67
    %4131 = vst [vmem:[#allocation2 + $0x10] sm:$0xff] %v68
    %4132 = vst [vmem:[#allocation2 + $0x18] sm:$0xff] %v69
    %4133 = vst [vmem:[#allocation2 + $0x20] sm:$0xff] %v70
    %4134 = vst [vmem:[#allocation2 + $0x28] sm:$0xff] %v71
    %4135 = vst [vmem:[#allocation2 + $0x30] sm:$0xff] %v72
    %4136 = vst [vmem:[#allocation2 + $0x38] sm:$0xff] %v73
    %4137 = vst [vmem:[#allocation2 + $0x40] sm:$0xff] %v74
    %4138 = vst [vmem:[#allocation2 + $0x48] sm:$0xff] %v75
    %4139 = vst [vmem:[#allocation2 + $0x50] sm:$0xff] %v76
    %4140 = vst [vmem:[#allocation2 + $0x58] sm:$0xff] %v77
    %4141 = vst [vmem:[#allocation2 + $0x60] sm:$0xff] %v78
    %4142 = vst [vmem:[#allocation2 + $0x68] sm:$0xff] %v79
    %4143 = vst [vmem:[#allocation2 + $0x70] sm:$0xff] %v80
    %4144 = vst [vmem:[#allocation2 + $0x78] sm:$0xff] %v81
    %4145 = vst [vmem:[#allocation2 + $0x80] sm:$0xff] %v82
    %4146 = vst [vmem:[#allocation2 + $0x88] sm:$0xff] %v83
    %4147 = vst [vmem:[#allocation2 + $0x90] sm:$0xff] %v84
    %4148 = vst [vmem:[#allocation2 + $0x98] sm:$0xff] %v85
    %4149 = vst [vmem:[#allocation2 + $0xa0] sm:$0xff] %v86
    %4150 = vst [vmem:[#allocation2 + $0xa8] sm:$0xff] %v87
    %4151 = vst [vmem:[#allocation2 + $0xb0] sm:$0xff] %v88
    %4152 = vst [vmem:[#allocation2 + $0xb8] sm:$0xff] %v89
    %4153 = vst [vmem:[#allocation2 + $0xc0] sm:$0xff] %v90
    %4154 = vst [vmem:[#allocation2 + $0xc8] sm:$0xff] %v91
    %4155 = vst [vmem:[#allocation2 + $0xd0] sm:$0xff] %v92
    %4156 = vst [vmem:[#allocation2 + $0xd8] sm:$0xff] %v93
    %4157 = vst [vmem:[#allocation2 + $0xe0] sm:$0xff] %v94
    %4158 = vst [vmem:[#allocation2 + $0xe8] sm:$0xff] %v95
    %4159 = vst [vmem:[#allocation2 + $0xf0] sm:$0xff] %v96
    %4160 = vst [vmem:[#allocation2 + $0xf8] sm:$0xff] %v97
    // Predicated region
    $region33: #{_odenet_forward_impl.1} parent=1 // pred_check
      _
    $region34: #{_odenet_forward_impl.1} parent=1 // pred_check_branch
      %4162 = sbr.rel (0) target = $region36
    $region35: #{_odenet_forward_impl.1} parent=1 // pred_region
      %s4164 = ssub.s32 4096, 4096
      %4165 = vsyncadd [#allocation3], %s4164
      %s4166 = sshll.u32 [#allocation2], 4
      %s4167 = int_to_ptr.vmem [resolvable:$true] %s4166
      %4172 = dma.vmem_to_hbm [thread:$0]  %s4167, 4096, %s6, [#allocation3], 128, 128, 8
    $region36: #{_odenet_forward_impl.1} parent=1 // pred_fallthru
      _
    // Predicated region
    $region37: #{_odenet_forward_impl.1} parent=1 // pred_check
      _
    $region38: #{_odenet_forward_impl.1} parent=1 // pred_check_branch
      %4174 = sbr.rel (0) target = $region40
    $region39: #{_odenet_forward_impl.1} parent=1 // pred_region
      %4175 = dma.done [#allocation3], 4096
    $region40: #{_odenet_forward_impl.1} parent=1 // pred_fallthru
      _
    %4176 = vsyncpa [#allocation3], 1

</llo_original>
